<compile_context>
chip_gen: v7x
topology: tpu7x:2x2x1
jax: 0.10.0
libtpu: 0.0.40
codegen_flags: <defaults>
</compile_context>

<pallas_src>
import jax
import jax.numpy as jnp
from jax import lax
from jax.experimental import pallas as pl
from jax.experimental.pallas import tpu as pltpu


_MATMUL_DTYPE = jnp.bfloat16   # MXU-native; accumulation is f32 via preferred_element_type


# ----------------------------------------------------------------------------
# Tiling / VMEM sizing helpers (generation-aware)
# ----------------------------------------------------------------------------
def _round_up(x, m):
    return ((x + m - 1) // m) * m


def _device_kind():
    try:
        return jax.devices()[0].device_kind.lower()
    except Exception:
        return ""


def _num_tensorcores():
    # v7x has 2 TensorCores per chip; v5e/v6e have 1.
    return 2 if "v7" in _device_kind() else 1


def _vmem_capacity_bytes():
    try:
        info = pltpu.get_tpu_info()
        for name in ("vmem_capacity_bytes", "vmem_size_bytes", "vmem_bytes"):
            cap = getattr(info, name, None)
            if cap:
                return int(cap)
    except Exception:
        pass
    kind = _device_kind()
    if "v7" in kind:
        return 64 << 20
    if any(g in kind for g in ("v5", "v6", "v4")):
        return 128 << 20
    if any(g in kind for g in ("v2", "v3")):
        return 16 << 20
    return 64 << 20   # conservative default


def _choose_tile_and_limit(B, per_row_bytes, fixed_bytes):
    """Largest batch tile (multiple of 8) fitting the VMEM budget; (TB, limit)."""
    cap = _vmem_capacity_bytes()
    frac = 0.60 if cap >= (96 << 20) else 0.45
    budget = int(cap * frac)

    def est(tb):
        return fixed_bytes + tb * per_row_bytes

    max_tb = B
    if _num_tensorcores() >= 2 and B > 8:
        # Keep >=2 grid steps so dimension_semantics=("parallel",) uses both TCs.
        max_tb = min(max_tb, _round_up((B + 1) // 2, 8))

    cands = [max_tb] + [t for t in (1024, 512, 256, 128, 64, 32, 16, 8) if t <= max_tb]
    tb = 8
    for t in cands:
        if est(t) <= budget:
            tb = t
            break

    vmem_limit = int(min(max(est(tb) + (16 << 20), 32 << 20), cap * 0.9))
    return tb, vmem_limit


def _bilstm_tile(B, T, d_in, H):
    per_row = (T * d_in * 4 * 2            # x block (double-buffered, f32 upper bound)
               + T * 2 * H * 2 * 2         # bf16 out block (double-buffered)
               + 2 * T * 4 * H * 4         # f32 gate scratch (fwd + bwd)
               + 2 * T * H * 4             # f32 hidden scratch (fwd + bwd)
               + T * 4 * H * 4)            # transient matmul result
    per_row = int(per_row * 1.25)
    fixed = (2 * d_in * 4 * H + 2 * H * 4 * H) * 2 * 2 + 2 * 4 * H * 4 * 2
    return _choose_tile_and_limit(B, per_row, fixed)


def _final_tile(B, T, d_in, H, C):
    per_row = (T * d_in * 4 * 2 + C * 4 * 2
               + T * 4 * H * 4             # gate scratch
               + T * 4 * H * 4)            # transient matmul result
    per_row = int(per_row * 1.25)
    fixed = ((2 * d_in * 4 * H + H * 4 * H + 2 * H * C) * 2 * 2
             + (2 * 4 * H + C) * 4 * 2)
    return _choose_tile_and_limit(B, per_row, fixed)


def _unroll_for(T):
    for u in (8, 4, 2):
        if T % u == 0:
            return u
    return 1


# ----------------------------------------------------------------------------
# Pallas kernels
# ----------------------------------------------------------------------------
def _lstm_cell(h, c, gates_x, w_hh):
    """One LSTM cell step. gates_x already holds x @ W_ih + (b_ih + b_hh).

    PyTorch gate order: i, f, g, o.  Gate math / state updates in f32;
    the small recurrent matmul runs in bf16 on the MXU with f32 accumulation.
    """
    H = w_hh.shape[0]
    gates = gates_x + jnp.dot(h.astype(w_hh.dtype), w_hh,
                              preferred_element_type=jnp.float32)
    i = jax.nn.sigmoid(gates[:, 0 * H:1 * H])
    f = jax.nn.sigmoid(gates[:, 1 * H:2 * H])
    g = jnp.tanh(gates[:, 2 * H:3 * H])
    o = jax.nn.sigmoid(gates[:, 3 * H:4 * H])
    c_new = f * c + i * g
    h_new = o * jnp.tanh(c_new)
    return h_new, c_new


def _bilstm_layer_kernel(x_ref, wf_ih_ref, wf_hh_ref, bf_ref,
                         wb_ih_ref, wb_hh_ref, bb_ref,
                         out_ref, gf_scr, gb_scr, hf_scr, hb_scr):
    """Fused forward+backward LSTM layer over one batch tile.

    x_ref:   (T, TB, d_in)  time-major input (f32 embeddings or bf16 previous
                            layer output, already lane-concatenated [fwd|bwd])
    w*_ih:   (d_in, 4H)     bf16 input->gate weights
    w*_hh:   (H, 4H)        bf16 hidden->gate weights
    b*:      (1, 4H)        f32 combined bias (b_ih + b_hh)
    out_ref: (T, TB, 2H)    bf16, lanes [fwd | bwd]
    """
    T, TB, d_in = x_ref.shape
    H = wf_hh_ref.shape[0]

    x = x_ref[...]
    if x.dtype != _MATMUL_DTYPE:          # static (trace-time) branch
        x = x.astype(_MATMUL_DTYPE)
    x2 = x.reshape(T * TB, d_in)

    # One K=d_in MXU matmul per direction over ALL timesteps; results go
    # straight into the time-major gate scratch (per-step slice is contiguous).
    gf_scr[...] = (jnp.dot(x2, wf_ih_ref[...], preferred_element_type=jnp.float32)
                   + bf_ref[...]).reshape(T, TB, 4 * H)
    gb_scr[...] = (jnp.dot(x2, wb_ih_ref[...], preferred_element_type=jnp.float32)
                   + bb_ref[...]).reshape(T, TB, 4 * H)

    wf_hh = wf_hh_ref[...]
    wb_hh = wb_hh_ref[...]

    def body(s, carry):
        hf, cf, hb, cb = carry
        t_b = T - 1 - s
        hf, cf = _lstm_cell(hf, cf, gf_scr[s], wf_hh)
        hf_scr[s] = hf
        hb, cb = _lstm_cell(hb, cb, gb_scr[t_b], wb_hh)
        hb_scr[t_b] = hb
        return hf, cf, hb, cb

    z = jnp.zeros((TB, H), jnp.float32)
    lax.fori_loop(0, T, body, (z, z, z, z), unroll=_unroll_for(T))

    # Single lane-dense bulk writeback: [fwd | bwd] concatenated on the lane
    # axis, cast to bf16 (halves the inter-layer HBM traffic).
    out_ref[...] = jnp.concatenate([hf_scr[...], hb_scr[...]],
                                   axis=-1).astype(out_ref.dtype)


def _final_bilstm_cls_kernel(x_ref, wf_ih_ref, wf_hh_ref, bf_ref,
                             wb_ih_ref, bb_ref, cls_w_ref, cls_b_ref,
                             out_ref, gf_scr):
    """Last bidirectional layer fused with the classifier.

    Only output[:, -1, :] is consumed, so:
      * forward direction keeps just its final hidden state (no per-step writes)
      * backward direction is a single cell step on x[T-1] with zero state
      * logits = concat(h_fwd, h_bwd) @ W_cls + b_cls  -> out (TB, C)
    """
    T, TB, d_in = x_ref.shape
    H = wf_hh_ref.shape[0]

    x = x_ref[...]
    if x.dtype != _MATMUL_DTYPE:
        x = x.astype(_MATMUL_DTYPE)

    gf_scr[...] = (jnp.dot(x.reshape(T * TB, d_in), wf_ih_ref[...],
                           preferred_element_type=jnp.float32)
                   + bf_ref[...]).reshape(T, TB, 4 * H)

    # Backward projection only at timestep T-1.
    gb = (jnp.dot(x[T - 1], wb_ih_ref[...], preferred_element_type=jnp.float32)
          + bb_ref[...])

    wf_hh = wf_hh_ref[...]

    def body(t, carry):
        h, c = carry
        return _lstm_cell(h, c, gf_scr[t], wf_hh)

    z = jnp.zeros((TB, H), jnp.float32)
    hf, _ = lax.fori_loop(0, T, body, (z, z), unroll=_unroll_for(T))

    # Backward hidden state at the last timestep = its first recurrence step
    # with zero initial (h, c): the h @ W_hh and f * c terms vanish.
    i_b = jax.nn.sigmoid(gb[:, 0 * H:1 * H])
    g_b = jnp.tanh(gb[:, 2 * H:3 * H])
    o_b = jax.nn.sigmoid(gb[:, 3 * H:4 * H])
    hb = o_b * jnp.tanh(i_b * g_b)

    # TODO(synk): nn.Dropout(last_output) is identity in eval mode; no mask.
    h_cat = jnp.concatenate([hf, hb], axis=-1).astype(_MATMUL_DTYPE)
    out_ref[...] = (jnp.dot(h_cat, cls_w_ref[...],
                            preferred_element_type=jnp.float32)
                    + cls_b_ref[...])


# ----------------------------------------------------------------------------
# pallas_call wrappers
# ----------------------------------------------------------------------------
def bilstm_layer(x, fwd, bwd):
    """x: (T, B, d_in) time-major. Returns (T, B, 2H) bf16, lanes [fwd | bwd]."""
    wf_ih, wf_hh, bf = fwd
    wb_ih, wb_hh, bb = bwd
    T, B, d_in = x.shape
    H = wf_hh.shape[0]
    TB, vmem_limit = _bilstm_tile(B, T, d_in, H)

    return pl.pallas_call(
        _bilstm_layer_kernel,
        out_shape=jax.ShapeDtypeStruct((T, B, 2 * H), jnp.bfloat16),
        grid_spec=pltpu.PrefetchScalarGridSpec(
            num_scalar_prefetch=0,
            grid=(pl.cdiv(B, TB),),
            in_specs=[
                pl.BlockSpec((T, TB, d_in), lambda i: (0, i, 0)),
                pl.BlockSpec((d_in, 4 * H), lambda i: (0, 0)),
                pl.BlockSpec((H, 4 * H), lambda i: (0, 0)),
                pl.BlockSpec((1, 4 * H), lambda i: (0, 0)),
                pl.BlockSpec((d_in, 4 * H), lambda i: (0, 0)),
                pl.BlockSpec((H, 4 * H), lambda i: (0, 0)),
                pl.BlockSpec((1, 4 * H), lambda i: (0, 0)),
            ],
            out_specs=pl.BlockSpec((T, TB, 2 * H), lambda i: (0, i, 0)),
            scratch_shapes=[
                pltpu.VMEM((T, TB, 4 * H), jnp.float32),   # fwd gate pre-activations
                pltpu.VMEM((T, TB, 4 * H), jnp.float32),   # bwd gate pre-activations
                pltpu.VMEM((T, TB, H), jnp.float32),       # fwd hidden states
                pltpu.VMEM((T, TB, H), jnp.float32),       # bwd hidden states
            ],
        ),
        compiler_params=pltpu.CompilerParams(
            dimension_semantics=("parallel",),
            vmem_limit_bytes=vmem_limit,
        ),
    )(x, wf_ih, wf_hh, bf, wb_ih, wb_hh, bb)


def final_bilstm_classifier(x, fwd, bwd_w_ih, bwd_b, cls_w, cls_b):
    """Last bidirectional layer + classifier.  x: (T, B, d_in) -> (B, C) f32."""
    wf_ih, wf_hh, bf = fwd
    T, B, d_in = x.shape
    H = wf_hh.shape[0]
    C = cls_w.shape[1]
    TB, vmem_limit = _final_tile(B, T, d_in, H, C)

    return pl.pallas_call(
        _final_bilstm_cls_kernel,
        out_shape=jax.ShapeDtypeStruct((B, C), jnp.float32),
        grid_spec=pltpu.PrefetchScalarGridSpec(
            num_scalar_prefetch=0,
            grid=(pl.cdiv(B, TB),),
            in_specs=[
                pl.BlockSpec((T, TB, d_in), lambda i: (0, i, 0)),
                pl.BlockSpec((d_in, 4 * H), lambda i: (0, 0)),
                pl.BlockSpec((H, 4 * H), lambda i: (0, 0)),
                pl.BlockSpec((1, 4 * H), lambda i: (0, 0)),
                pl.BlockSpec((d_in, 4 * H), lambda i: (0, 0)),
                pl.BlockSpec((1, 4 * H), lambda i: (0, 0)),
                pl.BlockSpec((2 * H, C), lambda i: (0, 0)),
                pl.BlockSpec((1, C), lambda i: (0, 0)),
            ],
            out_specs=pl.BlockSpec((TB, C), lambda i: (i, 0)),
            scratch_shapes=[pltpu.VMEM((T, TB, 4 * H), jnp.float32)],
        ),
        compiler_params=pltpu.CompilerParams(
            dimension_semantics=("parallel",),
            vmem_limit_bytes=vmem_limit,
        ),
    )(x, wf_ih, wf_hh, bf, bwd_w_ih, bwd_b, cls_w, cls_b)


# ----------------------------------------------------------------------------
# Parameter init (deterministic, mirrors PyTorch shapes)
# ----------------------------------------------------------------------------
def init_params(key, n_vocab, hidden_dim, embedding_dim, n_layers, n_classes):
    k_emb, k_lstm, k_cls = jax.random.split(key, 3)
    params = {}

    # nn.Embedding(n_vocab, embedding_dim, padding_idx=0): N(0,1), row 0 zeroed.
    emb = jax.random.normal(k_emb, (n_vocab, embedding_dim), jnp.float32)
    params["embedding"] = emb.at[0].set(0.0)

    num_dirs = 2  # bidirectional=True
    bound = 1.0 / (hidden_dim ** 0.5)
    layers = []
    keys = jax.random.split(k_lstm, n_layers * num_dirs * 4)
    ki = 0
    for layer in range(n_layers):
        d_in = embedding_dim if layer == 0 else hidden_dim * num_dirs
        dirs = {}
        for dname in ("fwd", "bwd"):
            # PyTorch: weight_ih (4H, d_in), weight_hh (4H, H), b_ih/b_hh (4H,)
            w_ih = jax.random.uniform(keys[ki], (4 * hidden_dim, d_in),
                                      jnp.float32, -bound, bound); ki += 1
            w_hh = jax.random.uniform(keys[ki], (4 * hidden_dim, hidden_dim),
                                      jnp.float32, -bound, bound); ki += 1
            b_ih = jax.random.uniform(keys[ki], (4 * hidden_dim,),
                                      jnp.float32, -bound, bound); ki += 1
            b_hh = jax.random.uniform(keys[ki], (4 * hidden_dim,),
                                      jnp.float32, -bound, bound); ki += 1
            dirs[dname] = (w_ih.T, w_hh.T, (b_ih + b_hh)[None, :])
        layers.append(dirs)
    params["lstm"] = layers

    fan_in = hidden_dim * num_dirs
    cb = 1.0 / (fan_in ** 0.5)
    kw, kb = jax.random.split(k_cls)
    params["cls_w"] = jax.random.uniform(kw, (fan_in, n_classes),
                                         jnp.float32, -cb, cb)
    params["cls_b"] = jax.random.uniform(kb, (1, n_classes),
                                         jnp.float32, -cb, cb)
    return params


# ----------------------------------------------------------------------------
# Forward pass (matches SentenceClassifier.forward, eval mode)
# ----------------------------------------------------------------------------
def sentence_classifier_forward(params, token_ids):
    B, T = token_ids.shape
    # Pad batch to a sublane multiple so the kernels' (T,TB,d)->(T*TB,d)
    # merges stay layout-preserving and the batch grid tiles evenly.
    Bp = max(8, _round_up(B, 8))
    if Bp != B:
        token_ids = jnp.pad(token_ids, ((0, Bp - B), (0, 0)))  # pad with idx 0

    # embeddings = self.embedding(inputs); gathered directly time-major (T,Bp,E).
    # TODO(synk): embedding row-gather stays in XLA (jnp.take); it could be
    # moved into the first LSTM kernel via scalar-prefetch DMA gather.
    x = jnp.take(params["embedding"], token_ids.T, axis=0)       # (T, Bp, E) f32

    to_bf16 = lambda w: w.astype(jnp.bfloat16)

    # output, _ = self.lstm(embeddings)   (bidirectional, batch_first)
    layers = params["lstm"]
    for layer in layers[:-1]:
        fwd = (to_bf16(layer["fwd"][0]), to_bf16(layer["fwd"][1]), layer["fwd"][2])
        bwd = (to_bf16(layer["bwd"][0]), to_bf16(layer["bwd"][1]), layer["bwd"][2])
        x = bilstm_layer(x, fwd, bwd)      # (T, Bp, 2H) bf16, lanes [fwd | bwd]
        # TODO(synk): inter-layer LSTM dropout is identity (eval semantics).

    # last_output = output[:, -1, :]; dropout (identity); logits = classifier(...)
    last = layers[-1]
    logits = final_bilstm_classifier(
        x,
        (to_bf16(last["fwd"][0]), to_bf16(last["fwd"][1]), last["fwd"][2]),
        to_bf16(last["bwd"][0]), last["bwd"][2],
        to_bf16(params["cls_w"]), params["cls_b"])
    return logits[:B]


# ----------------------------------------------------------------------------
# Pure-JAX f32 reference (PyTorch semantics) for a sanity check
# ----------------------------------------------------------------------------
def _reference_forward(params, token_ids):
    emb = jnp.take(params["embedding"], token_ids, axis=0)        # (B, T, E)

    def run_dir(x, w_ih, w_hh, b, reverse):
        B, T, _ = x.shape
        H = w_hh.shape[0]

        def cell(carry, xt):
            h, c = carry
            g = xt @ w_ih + h @ w_hh + b
            i = jax.nn.sigmoid(g[:, :H])
            f = jax.nn.sigmoid(g[:, H:2 * H])
            gg = jnp.tanh(g[:, 2 * H:3 * H])
            o = jax.nn.sigmoid(g[:, 3 * H:])
            c = f * c + i * gg
            h = o * jnp.tanh(c)
            return (h, c), h

        xs = jnp.swapaxes(x, 0, 1)
        if reverse:
            xs = xs[::-1]
        z = jnp.zeros((B, H), jnp.float32)
        _, hs = lax.scan(cell, (z, z), xs)
        if reverse:
            hs = hs[::-1]
        return jnp.swapaxes(hs, 0, 1)

    x = emb
    for layer in params["lstm"]:
        fwd = run_dir(x, *layer["fwd"], reverse=False)
        bwd = run_dir(x, *layer["bwd"], reverse=True)
        x = jnp.concatenate([fwd, bwd], axis=-1)
    last = x[:, -1, :]
    return last @ params["cls_w"] + params["cls_b"]


# ----------------------------------------------------------------------------
if __name__ == "__main__":
    n_vocab, hidden_dim, embedding_dim = 100, 32, 32
    n_layers, n_classes = 2, 4
    B, T = 2, 8

    key = jax.random.PRNGKey(0)
    k_params, k_tok = jax.random.split(key)
    params = init_params(k_params, n_vocab, hidden_dim, embedding_dim,
                         n_layers, n_classes)
    token_ids = jax.random.randint(k_tok, (B, T), 0, n_vocab, dtype=jnp.int32)

    logits = jax.jit(sentence_classifier_forward)(params, token_ids)
    jax.block_until_ready(logits)

    assert logits.shape == (B, n_classes)
    assert bool(jnp.all(jnp.isfinite(logits)))

    # Check vs f32 reference (kernel uses bf16 MXU inputs): abs OR relative tol.
    ref = _reference_forward(params, token_ids)
    abs_err = jnp.max(jnp.abs(logits - ref))
    rel_err = abs_err / (jnp.max(jnp.abs(ref)) + 1e-6)
    assert bool(abs_err < 0.15) or bool(rel_err < 0.05), "kernel/reference mismatch"

    print("KERNEL_OK")
</pallas_src>

<mosaic_0001>
module attributes {stable_mosaic.version = 11 : i64} {
  func.func @_bilstm_layer_kernel(%arg0: i32, %arg1: memref<8x8x32xf32, #tpu.memory_space<vmem>>, %arg2: memref<32x128xbf16, #tpu.memory_space<vmem>>, %arg3: memref<32x128xbf16, #tpu.memory_space<vmem>>, %arg4: memref<1x128xf32, #tpu.memory_space<vmem>>, %arg5: memref<32x128xbf16, #tpu.memory_space<vmem>>, %arg6: memref<32x128xbf16, #tpu.memory_space<vmem>>, %arg7: memref<1x128xf32, #tpu.memory_space<vmem>>, %arg8: memref<8x8x64xbf16, #tpu.memory_space<vmem>>, %arg9: memref<8x8x128xf32, #tpu.memory_space<vmem>>, %arg10: memref<8x8x128xf32, #tpu.memory_space<vmem>>, %arg11: memref<8x8x32xf32, #tpu.memory_space<vmem>>, %arg12: memref<8x8x32xf32, #tpu.memory_space<vmem>>) attributes {dimension_semantics = [#tpu.dimension_semantics<parallel>], iteration_bounds = array<i64: 1>, scalar_prefetch = 0 : i64, scratch_operands = 4 : i64, tpu.core_type = #tpu.core_type<tc>, window_params = [{transform_indices = @transform_0, window_bounds = array<i64: 8, 8, 32>}, {pipeline_mode = #tpu.pipeline_mode<synchronous>, transform_indices = @transform_1, window_bounds = array<i64: 32, 128>}, {pipeline_mode = #tpu.pipeline_mode<synchronous>, transform_indices = @transform_2, window_bounds = array<i64: 32, 128>}, {pipeline_mode = #tpu.pipeline_mode<synchronous>, transform_indices = @transform_3, window_bounds = array<i64: 1, 128>}, {pipeline_mode = #tpu.pipeline_mode<synchronous>, transform_indices = @transform_4, window_bounds = array<i64: 32, 128>}, {pipeline_mode = #tpu.pipeline_mode<synchronous>, transform_indices = @transform_5, window_bounds = array<i64: 32, 128>}, {pipeline_mode = #tpu.pipeline_mode<synchronous>, transform_indices = @transform_6, window_bounds = array<i64: 1, 128>}, {transform_indices = @transform_7, window_bounds = array<i64: 8, 8, 64>}]} {
    %c0 = arith.constant 0 : index
    %c0_0 = arith.constant 0 : index
    %c0_1 = arith.constant 0 : index
    %0 = vector.load %arg1[%c0, %c0_0, %c0_1] : memref<8x8x32xf32, #tpu.memory_space<vmem>>, vector<8x8x32xf32>
    %1 = arith.truncf %0 : vector<8x8x32xf32> to vector<8x8x32xbf16>
    %2 = vector.shape_cast %1 : vector<8x8x32xbf16> to vector<64x32xbf16>
    %c0_2 = arith.constant 0 : index
    %c0_3 = arith.constant 0 : index
    %3 = vector.load %arg2[%c0_2, %c0_3] : memref<32x128xbf16, #tpu.memory_space<vmem>>, vector<32x128xbf16>
    %cst = arith.constant dense<0.000000e+00> : vector<64x128xf32>
    %4 = tpu.matmul %2, %3, %cst {dimension_numbers = #tpu.dot_dimension_numbers<[1], [0], [0], [1], [0, 0, 1, 1], [], []>} : vector<64x32xbf16>, vector<32x128xbf16>, vector<64x128xf32> -> vector<64x128xf32>
    %c0_4 = arith.constant 0 : index
    %c0_5 = arith.constant 0 : index
    %5 = vector.load %arg4[%c0_4, %c0_5] : memref<1x128xf32, #tpu.memory_space<vmem>>, vector<1x128xf32>
    %6 = vector.broadcast %5 : vector<1x128xf32> to vector<64x128xf32>
    %7 = arith.addf %4, %6 : vector<64x128xf32>
    %8 = vector.shape_cast %7 : vector<64x128xf32> to vector<8x8x128xf32>
    %c0_6 = arith.constant 0 : index
    %c0_7 = arith.constant 0 : index
    %c0_8 = arith.constant 0 : index
    %9 = vector.load %arg9[%c0_6, %c0_7, %c0_8] : memref<8x8x128xf32, #tpu.memory_space<vmem>>, vector<8x8x128xf32>
    tpu.vector_store %arg9[%c0_6, %c0_7, %c0_8], %8 {strides = array<i32>} : memref<8x8x128xf32, #tpu.memory_space<vmem>>, vector<8x8x128xf32>,
    %c0_9 = arith.constant 0 : index
    %c0_10 = arith.constant 0 : index
    %10 = vector.load %arg5[%c0_9, %c0_10] : memref<32x128xbf16, #tpu.memory_space<vmem>>, vector<32x128xbf16>
    %cst_11 = arith.constant dense<0.000000e+00> : vector<64x128xf32>
    %11 = tpu.matmul %2, %10, %cst_11 {dimension_numbers = #tpu.dot_dimension_numbers<[1], [0], [0], [1], [0, 0, 1, 1], [], []>} : vector<64x32xbf16>, vector<32x128xbf16>, vector<64x128xf32> -> vector<64x128xf32>
    %c0_12 = arith.constant 0 : index
    %c0_13 = arith.constant 0 : index
    %12 = vector.load %arg7[%c0_12, %c0_13] : memref<1x128xf32, #tpu.memory_space<vmem>>, vector<1x128xf32>
    %13 = vector.broadcast %12 : vector<1x128xf32> to vector<64x128xf32>
    %14 = arith.addf %11, %13 : vector<64x128xf32>
    %15 = vector.shape_cast %14 : vector<64x128xf32> to vector<8x8x128xf32>
    %c0_14 = arith.constant 0 : index
    %c0_15 = arith.constant 0 : index
    %c0_16 = arith.constant 0 : index
    %16 = vector.load %arg10[%c0_14, %c0_15, %c0_16] : memref<8x8x128xf32, #tpu.memory_space<vmem>>, vector<8x8x128xf32>
    tpu.vector_store %arg10[%c0_14, %c0_15, %c0_16], %15 {strides = array<i32>} : memref<8x8x128xf32, #tpu.memory_space<vmem>>, vector<8x8x128xf32>,
    %c0_17 = arith.constant 0 : index
    %c0_18 = arith.constant 0 : index
    %17 = vector.load %arg3[%c0_17, %c0_18] : memref<32x128xbf16, #tpu.memory_space<vmem>>, vector<32x128xbf16>
    %c0_19 = arith.constant 0 : index
    %c0_20 = arith.constant 0 : index
    %18 = vector.load %arg6[%c0_19, %c0_20] : memref<32x128xbf16, #tpu.memory_space<vmem>>, vector<32x128xbf16>
    %cst_21 = arith.constant 0.000000e+00 : f32
    %19 = vector.broadcast %cst_21 : f32 to vector<8x32xf32>
    %c0_i32 = arith.constant 0 : i32
    %c7_i32 = arith.constant 7 : i32
    %20 = arith.subi %c7_i32, %c0_i32 : i32
    %21 = arith.index_cast %c0_i32 : i32 to index
    %c0_22 = arith.constant 0 : index
    %c0_23 = arith.constant 0 : index
    %22 = vector.load %arg9[%21, %c0_22, %c0_23] : memref<8x8x128xf32, #tpu.memory_space<vmem>>, vector<1x8x128xf32>
    %23 = vector.shape_cast %22 : vector<1x8x128xf32> to vector<8x128xf32>
    %24 = arith.truncf %19 : vector<8x32xf32> to vector<8x32xbf16>
    %cst_24 = arith.constant dense<0.000000e+00> : vector<8x128xf32>
    %25 = tpu.matmul %24, %17, %cst_24 {dimension_numbers = #tpu.dot_dimension_numbers<[1], [0], [0], [1], [0, 0, 1, 1], [], []>} : vector<8x32xbf16>, vector<32x128xbf16>, vector<8x128xf32> -> vector<8x128xf32>
    %26 = arith.addf %23, %25 : vector<8x128xf32>
    %27 = vector.extract_strided_slice %26 {offsets = [0, 0], sizes = [8, 32], strides = [1, 1]} : vector<8x128xf32> to vector<8x32xf32>
    %28 = arith.negf %27 : vector<8x32xf32>
    %29 = math.exp %28 : vector<8x32xf32>
    %cst_25 = arith.constant 1.000000e+00 : f32
    %30 = vector.broadcast %cst_25 : f32 to vector<8x32xf32>
    %31 = arith.addf %30, %29 : vector<8x32xf32>
    %32 = arith.divf %30, %31 : vector<8x32xf32>
    %33 = vector.extract_strided_slice %26 {offsets = [0, 32], sizes = [8, 32], strides = [1, 1]} : vector<8x128xf32> to vector<8x32xf32>
    %34 = arith.negf %33 : vector<8x32xf32>
    %35 = math.exp %34 : vector<8x32xf32>
    %cst_26 = arith.constant 1.000000e+00 : f32
    %36 = vector.broadcast %cst_26 : f32 to vector<8x32xf32>
    %37 = arith.addf %36, %35 : vector<8x32xf32>
    %38 = arith.divf %36, %37 : vector<8x32xf32>
    %39 = vector.extract_strided_slice %26 {offsets = [0, 64], sizes = [8, 32], strides = [1, 1]} : vector<8x128xf32> to vector<8x32xf32>
    %40 = math.tanh %39 : vector<8x32xf32>
    %41 = vector.extract_strided_slice %26 {offsets = [0, 96], sizes = [8, 32], strides = [1, 1]} : vector<8x128xf32> to vector<8x32xf32>
    %42 = arith.negf %41 : vector<8x32xf32>
    %43 = math.exp %42 : vector<8x32xf32>
    %cst_27 = arith.constant 1.000000e+00 : f32
    %44 = vector.broadcast %cst_27 : f32 to vector<8x32xf32>
    %45 = arith.addf %44, %43 : vector<8x32xf32>
    %46 = arith.divf %44, %45 : vector<8x32xf32>
    %47 = arith.mulf %38, %19 : vector<8x32xf32>
    %48 = arith.mulf %32, %40 : vector<8x32xf32>
    %49 = arith.addf %47, %48 : vector<8x32xf32>
    %50 = math.tanh %49 : vector<8x32xf32>
    %51 = arith.mulf %46, %50 : vector<8x32xf32>
    %52 = arith.index_cast %c0_i32 : i32 to index
    %c0_28 = arith.constant 0 : index
    %c0_29 = arith.constant 0 : index
    %53 = vector.load %arg11[%52, %c0_28, %c0_29] : memref<8x8x32xf32, #tpu.memory_space<vmem>>, vector<1x8x32xf32>
    %54 = vector.shape_cast %53 : vector<1x8x32xf32> to vector<8x32xf32>
    %55 = vector.shape_cast %51 : vector<8x32xf32> to vector<1x8x32xf32>
    tpu.vector_store %arg11[%52, %c0_28, %c0_29], %55 {strides = array<i32>} : memref<8x8x32xf32, #tpu.memory_space<vmem>>, vector<1x8x32xf32>,
    %56 = arith.index_cast %20 : i32 to index
    %c0_30 = arith.constant 0 : index
    %c0_31 = arith.constant 0 : index
    %57 = vector.load %arg10[%56, %c0_30, %c0_31] : memref<8x8x128xf32, #tpu.memory_space<vmem>>, vector<1x8x128xf32>
    %58 = vector.shape_cast %57 : vector<1x8x128xf32> to vector<8x128xf32>
    %59 = arith.truncf %19 : vector<8x32xf32> to vector<8x32xbf16>
    %cst_32 = arith.constant dense<0.000000e+00> : vector<8x128xf32>
    %60 = tpu.matmul %59, %18, %cst_32 {dimension_numbers = #tpu.dot_dimension_numbers<[1], [0], [0], [1], [0, 0, 1, 1], [], []>} : vector<8x32xbf16>, vector<32x128xbf16>, vector<8x128xf32> -> vector<8x128xf32>
    %61 = arith.addf %58, %60 : vector<8x128xf32>
    %62 = vector.extract_strided_slice %61 {offsets = [0, 0], sizes = [8, 32], strides = [1, 1]} : vector<8x128xf32> to vector<8x32xf32>
    %63 = arith.negf %62 : vector<8x32xf32>
    %64 = math.exp %63 : vector<8x32xf32>
    %cst_33 = arith.constant 1.000000e+00 : f32
    %65 = vector.broadcast %cst_33 : f32 to vector<8x32xf32>
    %66 = arith.addf %65, %64 : vector<8x32xf32>
    %67 = arith.divf %65, %66 : vector<8x32xf32>
    %68 = vector.extract_strided_slice %61 {offsets = [0, 32], sizes = [8, 32], strides = [1, 1]} : vector<8x128xf32> to vector<8x32xf32>
    %69 = arith.negf %68 : vector<8x32xf32>
    %70 = math.exp %69 : vector<8x32xf32>
    %cst_34 = arith.constant 1.000000e+00 : f32
    %71 = vector.broadcast %cst_34 : f32 to vector<8x32xf32>
    %72 = arith.addf %71, %70 : vector<8x32xf32>
    %73 = arith.divf %71, %72 : vector<8x32xf32>
    %74 = vector.extract_strided_slice %61 {offsets = [0, 64], sizes = [8, 32], strides = [1, 1]} : vector<8x128xf32> to vector<8x32xf32>
    %75 = math.tanh %74 : vector<8x32xf32>
    %76 = vector.extract_strided_slice %61 {offsets = [0, 96], sizes = [8, 32], strides = [1, 1]} : vector<8x128xf32> to vector<8x32xf32>
    %77 = arith.negf %76 : vector<8x32xf32>
    %78 = math.exp %77 : vector<8x32xf32>
    %cst_35 = arith.constant 1.000000e+00 : f32
    %79 = vector.broadcast %cst_35 : f32 to vector<8x32xf32>
    %80 = arith.addf %79, %78 : vector<8x32xf32>
    %81 = arith.divf %79, %80 : vector<8x32xf32>
    %82 = arith.mulf %73, %19 : vector<8x32xf32>
    %83 = arith.mulf %67, %75 : vector<8x32xf32>
    %84 = arith.addf %82, %83 : vector<8x32xf32>
    %85 = math.tanh %84 : vector<8x32xf32>
    %86 = arith.mulf %81, %85 : vector<8x32xf32>
    %87 = arith.index_cast %20 : i32 to index
    %c0_36 = arith.constant 0 : index
    %c0_37 = arith.constant 0 : index
    %88 = vector.load %arg12[%87, %c0_36, %c0_37] : memref<8x8x32xf32, #tpu.memory_space<vmem>>, vector<1x8x32xf32>
    %89 = vector.shape_cast %88 : vector<1x8x32xf32> to vector<8x32xf32>
    %90 = vector.shape_cast %86 : vector<8x32xf32> to vector<1x8x32xf32>
    tpu.vector_store %arg12[%87, %c0_36, %c0_37], %90 {strides = array<i32>} : memref<8x8x32xf32, #tpu.memory_space<vmem>>, vector<1x8x32xf32>,
    %c1_i32 = arith.constant 1 : i32
    %c7_i32_38 = arith.constant 7 : i32
    %91 = arith.subi %c7_i32_38, %c1_i32 : i32
    %92 = arith.index_cast %c1_i32 : i32 to index
    %c0_39 = arith.constant 0 : index
    %c0_40 = arith.constant 0 : index
    %93 = vector.load %arg9[%92, %c0_39, %c0_40] : memref<8x8x128xf32, #tpu.memory_space<vmem>>, vector<1x8x128xf32>
    %94 = vector.shape_cast %93 : vector<1x8x128xf32> to vector<8x128xf32>
    %95 = arith.truncf %51 : vector<8x32xf32> to vector<8x32xbf16>
    %cst_41 = arith.constant dense<0.000000e+00> : vector<8x128xf32>
    %96 = tpu.matmul %95, %17, %cst_41 {dimension_numbers = #tpu.dot_dimension_numbers<[1], [0], [0], [1], [0, 0, 1, 1], [], []>} : vector<8x32xbf16>, vector<32x128xbf16>, vector<8x128xf32> -> vector<8x128xf32>
    %97 = arith.addf %94, %96 : vector<8x128xf32>
    %98 = vector.extract_strided_slice %97 {offsets = [0, 0], sizes = [8, 32], strides = [1, 1]} : vector<8x128xf32> to vector<8x32xf32>
    %99 = arith.negf %98 : vector<8x32xf32>
    %100 = math.exp %99 : vector<8x32xf32>
    %cst_42 = arith.constant 1.000000e+00 : f32
    %101 = vector.broadcast %cst_42 : f32 to vector<8x32xf32>
    %102 = arith.addf %101, %100 : vector<8x32xf32>
    %103 = arith.divf %101, %102 : vector<8x32xf32>
    %104 = vector.extract_strided_slice %97 {offsets = [0, 32], sizes = [8, 32], strides = [1, 1]} : vector<8x128xf32> to vector<8x32xf32>
    %105 = arith.negf %104 : vector<8x32xf32>
    %106 = math.exp %105 : vector<8x32xf32>
    %cst_43 = arith.constant 1.000000e+00 : f32
    %107 = vector.broadcast %cst_43 : f32 to vector<8x32xf32>
    %108 = arith.addf %107, %106 : vector<8x32xf32>
    %109 = arith.divf %107, %108 : vector<8x32xf32>
    %110 = vector.extract_strided_slice %97 {offsets = [0, 64], sizes = [8, 32], strides = [1, 1]} : vector<8x128xf32> to vector<8x32xf32>
    %111 = math.tanh %110 : vector<8x32xf32>
    %112 = vector.extract_strided_slice %97 {offsets = [0, 96], sizes = [8, 32], strides = [1, 1]} : vector<8x128xf32> to vector<8x32xf32>
    %113 = arith.negf %112 : vector<8x32xf32>
    %114 = math.exp %113 : vector<8x32xf32>
    %cst_44 = arith.constant 1.000000e+00 : f32
    %115 = vector.broadcast %cst_44 : f32 to vector<8x32xf32>
    %116 = arith.addf %115, %114 : vector<8x32xf32>
    %117 = arith.divf %115, %116 : vector<8x32xf32>
    %118 = arith.mulf %109, %49 : vector<8x32xf32>
    %119 = arith.mulf %103, %111 : vector<8x32xf32>
    %120 = arith.addf %118, %119 : vector<8x32xf32>
    %121 = math.tanh %120 : vector<8x32xf32>
    %122 = arith.mulf %117, %121 : vector<8x32xf32>
    %123 = arith.index_cast %c1_i32 : i32 to index
    %c0_45 = arith.constant 0 : index
    %c0_46 = arith.constant 0 : index
    %124 = vector.load %arg11[%123, %c0_45, %c0_46] : memref<8x8x32xf32, #tpu.memory_space<vmem>>, vector<1x8x32xf32>
    %125 = vector.shape_cast %124 : vector<1x8x32xf32> to vector<8x32xf32>
    %126 = vector.shape_cast %122 : vector<8x32xf32> to vector<1x8x32xf32>
    tpu.vector_store %arg11[%123, %c0_45, %c0_46], %126 {strides = array<i32>} : memref<8x8x32xf32, #tpu.memory_space<vmem>>, vector<1x8x32xf32>,
    %127 = arith.index_cast %91 : i32 to index
    %c0_47 = arith.constant 0 : index
    %c0_48 = arith.constant 0 : index
    %128 = vector.load %arg10[%127, %c0_47, %c0_48] : memref<8x8x128xf32, #tpu.memory_space<vmem>>, vector<1x8x128xf32>
    %129 = vector.shape_cast %128 : vector<1x8x128xf32> to vector<8x128xf32>
    %130 = arith.truncf %86 : vector<8x32xf32> to vector<8x32xbf16>
    %cst_49 = arith.constant dense<0.000000e+00> : vector<8x128xf32>
    %131 = tpu.matmul %130, %18, %cst_49 {dimension_numbers = #tpu.dot_dimension_numbers<[1], [0], [0], [1], [0, 0, 1, 1], [], []>} : vector<8x32xbf16>, vector<32x128xbf16>, vector<8x128xf32> -> vector<8x128xf32>
    %132 = arith.addf %129, %131 : vector<8x128xf32>
    %133 = vector.extract_strided_slice %132 {offsets = [0, 0], sizes = [8, 32], strides = [1, 1]} : vector<8x128xf32> to vector<8x32xf32>
    %134 = arith.negf %133 : vector<8x32xf32>
    %135 = math.exp %134 : vector<8x32xf32>
    %cst_50 = arith.constant 1.000000e+00 : f32
    %136 = vector.broadcast %cst_50 : f32 to vector<8x32xf32>
    %137 = arith.addf %136, %135 : vector<8x32xf32>
    %138 = arith.divf %136, %137 : vector<8x32xf32>
    %139 = vector.extract_strided_slice %132 {offsets = [0, 32], sizes = [8, 32], strides = [1, 1]} : vector<8x128xf32> to vector<8x32xf32>
    %140 = arith.negf %139 : vector<8x32xf32>
    %141 = math.exp %140 : vector<8x32xf32>
    %cst_51 = arith.constant 1.000000e+00 : f32
    %142 = vector.broadcast %cst_51 : f32 to vector<8x32xf32>
    %143 = arith.addf %142, %141 : vector<8x32xf32>
    %144 = arith.divf %142, %143 : vector<8x32xf32>
    %145 = vector.extract_strided_slice %132 {offsets = [0, 64], sizes = [8, 32], strides = [1, 1]} : vector<8x128xf32> to vector<8x32xf32>
    %146 = math.tanh %145 : vector<8x32xf32>
    %147 = vector.extract_strided_slice %132 {offsets = [0, 96], sizes = [8, 32], strides = [1, 1]} : vector<8x128xf32> to vector<8x32xf32>
    %148 = arith.negf %147 : vector<8x32xf32>
    %149 = math.exp %148 : vector<8x32xf32>
    %cst_52 = arith.constant 1.000000e+00 : f32
    %150 = vector.broadcast %cst_52 : f32 to vector<8x32xf32>
    %151 = arith.addf %150, %149 : vector<8x32xf32>
    %152 = arith.divf %150, %151 : vector<8x32xf32>
    %153 = arith.mulf %144, %84 : vector<8x32xf32>
    %154 = arith.mulf %138, %146 : vector<8x32xf32>
    %155 = arith.addf %153, %154 : vector<8x32xf32>
    %156 = math.tanh %155 : vector<8x32xf32>
    %157 = arith.mulf %152, %156 : vector<8x32xf32>
    %158 = arith.index_cast %91 : i32 to index
    %c0_53 = arith.constant 0 : index
    %c0_54 = arith.constant 0 : index
    %159 = vector.load %arg12[%158, %c0_53, %c0_54] : memref<8x8x32xf32, #tpu.memory_space<vmem>>, vector<1x8x32xf32>
    %160 = vector.shape_cast %159 : vector<1x8x32xf32> to vector<8x32xf32>
    %161 = vector.shape_cast %157 : vector<8x32xf32> to vector<1x8x32xf32>
    tpu.vector_store %arg12[%158, %c0_53, %c0_54], %161 {strides = array<i32>} : memref<8x8x32xf32, #tpu.memory_space<vmem>>, vector<1x8x32xf32>,
    %c2_i32 = arith.constant 2 : i32
    %c7_i32_55 = arith.constant 7 : i32
    %162 = arith.subi %c7_i32_55, %c2_i32 : i32
    %163 = arith.index_cast %c2_i32 : i32 to index
    %c0_56 = arith.constant 0 : index
    %c0_57 = arith.constant 0 : index
    %164 = vector.load %arg9[%163, %c0_56, %c0_57] : memref<8x8x128xf32, #tpu.memory_space<vmem>>, vector<1x8x128xf32>
    %165 = vector.shape_cast %164 : vector<1x8x128xf32> to vector<8x128xf32>
    %166 = arith.truncf %122 : vector<8x32xf32> to vector<8x32xbf16>
    %cst_58 = arith.constant dense<0.000000e+00> : vector<8x128xf32>
    %167 = tpu.matmul %166, %17, %cst_58 {dimension_numbers = #tpu.dot_dimension_numbers<[1], [0], [0], [1], [0, 0, 1, 1], [], []>} : vector<8x32xbf16>, vector<32x128xbf16>, vector<8x128xf32> -> vector<8x128xf32>
    %168 = arith.addf %165, %167 : vector<8x128xf32>
    %169 = vector.extract_strided_slice %168 {offsets = [0, 0], sizes = [8, 32], strides = [1, 1]} : vector<8x128xf32> to vector<8x32xf32>
    %170 = arith.negf %169 : vector<8x32xf32>
    %171 = math.exp %170 : vector<8x32xf32>
    %cst_59 = arith.constant 1.000000e+00 : f32
    %172 = vector.broadcast %cst_59 : f32 to vector<8x32xf32>
    %173 = arith.addf %172, %171 : vector<8x32xf32>
    %174 = arith.divf %172, %173 : vector<8x32xf32>
    %175 = vector.extract_strided_slice %168 {offsets = [0, 32], sizes = [8, 32], strides = [1, 1]} : vector<8x128xf32> to vector<8x32xf32>
    %176 = arith.negf %175 : vector<8x32xf32>
    %177 = math.exp %176 : vector<8x32xf32>
    %cst_60 = arith.constant 1.000000e+00 : f32
    %178 = vector.broadcast %cst_60 : f32 to vector<8x32xf32>
    %179 = arith.addf %178, %177 : vector<8x32xf32>
    %180 = arith.divf %178, %179 : vector<8x32xf32>
    %181 = vector.extract_strided_slice %168 {offsets = [0, 64], sizes = [8, 32], strides = [1, 1]} : vector<8x128xf32> to vector<8x32xf32>
    %182 = math.tanh %181 : vector<8x32xf32>
    %183 = vector.extract_strided_slice %168 {offsets = [0, 96], sizes = [8, 32], strides = [1, 1]} : vector<8x128xf32> to vector<8x32xf32>
    %184 = arith.negf %183 : vector<8x32xf32>
    %185 = math.exp %184 : vector<8x32xf32>
    %cst_61 = arith.constant 1.000000e+00 : f32
    %186 = vector.broadcast %cst_61 : f32 to vector<8x32xf32>
    %187 = arith.addf %186, %185 : vector<8x32xf32>
    %188 = arith.divf %186, %187 : vector<8x32xf32>
    %189 = arith.mulf %180, %120 : vector<8x32xf32>
    %190 = arith.mulf %174, %182 : vector<8x32xf32>
    %191 = arith.addf %189, %190 : vector<8x32xf32>
    %192 = math.tanh %191 : vector<8x32xf32>
    %193 = arith.mulf %188, %192 : vector<8x32xf32>
    %194 = arith.index_cast %c2_i32 : i32 to index
    %c0_62 = arith.constant 0 : index
    %c0_63 = arith.constant 0 : index
    %195 = vector.load %arg11[%194, %c0_62, %c0_63] : memref<8x8x32xf32, #tpu.memory_space<vmem>>, vector<1x8x32xf32>
    %196 = vector.shape_cast %195 : vector<1x8x32xf32> to vector<8x32xf32>
    %197 = vector.shape_cast %193 : vector<8x32xf32> to vector<1x8x32xf32>
    tpu.vector_store %arg11[%194, %c0_62, %c0_63], %197 {strides = array<i32>} : memref<8x8x32xf32, #tpu.memory_space<vmem>>, vector<1x8x32xf32>,
    %198 = arith.index_cast %162 : i32 to index
    %c0_64 = arith.constant 0 : index
    %c0_65 = arith.constant 0 : index
    %199 = vector.load %arg10[%198, %c0_64, %c0_65] : memref<8x8x128xf32, #tpu.memory_space<vmem>>, vector<1x8x128xf32>
    %200 = vector.shape_cast %199 : vector<1x8x128xf32> to vector<8x128xf32>
    %201 = arith.truncf %157 : vector<8x32xf32> to vector<8x32xbf16>
    %cst_66 = arith.constant dense<0.000000e+00> : vector<8x128xf32>
    %202 = tpu.matmul %201, %18, %cst_66 {dimension_numbers = #tpu.dot_dimension_numbers<[1], [0], [0], [1], [0, 0, 1, 1], [], []>} : vector<8x32xbf16>, vector<32x128xbf16>, vector<8x128xf32> -> vector<8x128xf32>
    %203 = arith.addf %200, %202 : vector<8x128xf32>
    %204 = vector.extract_strided_slice %203 {offsets = [0, 0], sizes = [8, 32], strides = [1, 1]} : vector<8x128xf32> to vector<8x32xf32>
    %205 = arith.negf %204 : vector<8x32xf32>
    %206 = math.exp %205 : vector<8x32xf32>
    %cst_67 = arith.constant 1.000000e+00 : f32
    %207 = vector.broadcast %cst_67 : f32 to vector<8x32xf32>
    %208 = arith.addf %207, %206 : vector<8x32xf32>
    %209 = arith.divf %207, %208 : vector<8x32xf32>
    %210 = vector.extract_strided_slice %203 {offsets = [0, 32], sizes = [8, 32], strides = [1, 1]} : vector<8x128xf32> to vector<8x32xf32>
    %211 = arith.negf %210 : vector<8x32xf32>
    %212 = math.exp %211 : vector<8x32xf32>
    %cst_68 = arith.constant 1.000000e+00 : f32
    %213 = vector.broadcast %cst_68 : f32 to vector<8x32xf32>
    %214 = arith.addf %213, %212 : vector<8x32xf32>
    %215 = arith.divf %213, %214 : vector<8x32xf32>
    %216 = vector.extract_strided_slice %203 {offsets = [0, 64], sizes = [8, 32], strides = [1, 1]} : vector<8x128xf32> to vector<8x32xf32>
    %217 = math.tanh %216 : vector<8x32xf32>
    %218 = vector.extract_strided_slice %203 {offsets = [0, 96], sizes = [8, 32], strides = [1, 1]} : vector<8x128xf32> to vector<8x32xf32>
    %219 = arith.negf %218 : vector<8x32xf32>
    %220 = math.exp %219 : vector<8x32xf32>
    %cst_69 = arith.constant 1.000000e+00 : f32
    %221 = vector.broadcast %cst_69 : f32 to vector<8x32xf32>
    %222 = arith.addf %221, %220 : vector<8x32xf32>
    %223 = arith.divf %221, %222 : vector<8x32xf32>
    %224 = arith.mulf %215, %155 : vector<8x32xf32>
    %225 = arith.mulf %209, %217 : vector<8x32xf32>
    %226 = arith.addf %224, %225 : vector<8x32xf32>
    %227 = math.tanh %226 : vector<8x32xf32>
    %228 = arith.mulf %223, %227 : vector<8x32xf32>
    %229 = arith.index_cast %162 : i32 to index
    %c0_70 = arith.constant 0 : index
    %c0_71 = arith.constant 0 : index
    %230 = vector.load %arg12[%229, %c0_70, %c0_71] : memref<8x8x32xf32, #tpu.memory_space<vmem>>, vector<1x8x32xf32>
    %231 = vector.shape_cast %230 : vector<1x8x32xf32> to vector<8x32xf32>
    %232 = vector.shape_cast %228 : vector<8x32xf32> to vector<1x8x32xf32>
    tpu.vector_store %arg12[%229, %c0_70, %c0_71], %232 {strides = array<i32>} : memref<8x8x32xf32, #tpu.memory_space<vmem>>, vector<1x8x32xf32>,
    %c3_i32 = arith.constant 3 : i32
    %c7_i32_72 = arith.constant 7 : i32
    %233 = arith.subi %c7_i32_72, %c3_i32 : i32
    %234 = arith.index_cast %c3_i32 : i32 to index
    %c0_73 = arith.constant 0 : index
    %c0_74 = arith.constant 0 : index
    %235 = vector.load %arg9[%234, %c0_73, %c0_74] : memref<8x8x128xf32, #tpu.memory_space<vmem>>, vector<1x8x128xf32>
    %236 = vector.shape_cast %235 : vector<1x8x128xf32> to vector<8x128xf32>
    %237 = arith.truncf %193 : vector<8x32xf32> to vector<8x32xbf16>
    %cst_75 = arith.constant dense<0.000000e+00> : vector<8x128xf32>
    %238 = tpu.matmul %237, %17, %cst_75 {dimension_numbers = #tpu.dot_dimension_numbers<[1], [0], [0], [1], [0, 0, 1, 1], [], []>} : vector<8x32xbf16>, vector<32x128xbf16>, vector<8x128xf32> -> vector<8x128xf32>
    %239 = arith.addf %236, %238 : vector<8x128xf32>
    %240 = vector.extract_strided_slice %239 {offsets = [0, 0], sizes = [8, 32], strides = [1, 1]} : vector<8x128xf32> to vector<8x32xf32>
    %241 = arith.negf %240 : vector<8x32xf32>
    %242 = math.exp %241 : vector<8x32xf32>
    %cst_76 = arith.constant 1.000000e+00 : f32
    %243 = vector.broadcast %cst_76 : f32 to vector<8x32xf32>
    %244 = arith.addf %243, %242 : vector<8x32xf32>
    %245 = arith.divf %243, %244 : vector<8x32xf32>
    %246 = vector.extract_strided_slice %239 {offsets = [0, 32], sizes = [8, 32], strides = [1, 1]} : vector<8x128xf32> to vector<8x32xf32>
    %247 = arith.negf %246 : vector<8x32xf32>
    %248 = math.exp %247 : vector<8x32xf32>
    %cst_77 = arith.constant 1.000000e+00 : f32
    %249 = vector.broadcast %cst_77 : f32 to vector<8x32xf32>
    %250 = arith.addf %249, %248 : vector<8x32xf32>
    %251 = arith.divf %249, %250 : vector<8x32xf32>
    %252 = vector.extract_strided_slice %239 {offsets = [0, 64], sizes = [8, 32], strides = [1, 1]} : vector<8x128xf32> to vector<8x32xf32>
    %253 = math.tanh %252 : vector<8x32xf32>
    %254 = vector.extract_strided_slice %239 {offsets = [0, 96], sizes = [8, 32], strides = [1, 1]} : vector<8x128xf32> to vector<8x32xf32>
    %255 = arith.negf %254 : vector<8x32xf32>
    %256 = math.exp %255 : vector<8x32xf32>
    %cst_78 = arith.constant 1.000000e+00 : f32
    %257 = vector.broadcast %cst_78 : f32 to vector<8x32xf32>
    %258 = arith.addf %257, %256 : vector<8x32xf32>
    %259 = arith.divf %257, %258 : vector<8x32xf32>
    %260 = arith.mulf %251, %191 : vector<8x32xf32>
    %261 = arith.mulf %245, %253 : vector<8x32xf32>
    %262 = arith.addf %260, %261 : vector<8x32xf32>
    %263 = math.tanh %262 : vector<8x32xf32>
    %264 = arith.mulf %259, %263 : vector<8x32xf32>
    %265 = arith.index_cast %c3_i32 : i32 to index
    %c0_79 = arith.constant 0 : index
    %c0_80 = arith.constant 0 : index
    %266 = vector.load %arg11[%265, %c0_79, %c0_80] : memref<8x8x32xf32, #tpu.memory_space<vmem>>, vector<1x8x32xf32>
    %267 = vector.shape_cast %266 : vector<1x8x32xf32> to vector<8x32xf32>
    %268 = vector.shape_cast %264 : vector<8x32xf32> to vector<1x8x32xf32>
    tpu.vector_store %arg11[%265, %c0_79, %c0_80], %268 {strides = array<i32>} : memref<8x8x32xf32, #tpu.memory_space<vmem>>, vector<1x8x32xf32>,
    %269 = arith.index_cast %233 : i32 to index
    %c0_81 = arith.constant 0 : index
    %c0_82 = arith.constant 0 : index
    %270 = vector.load %arg10[%269, %c0_81, %c0_82] : memref<8x8x128xf32, #tpu.memory_space<vmem>>, vector<1x8x128xf32>
    %271 = vector.shape_cast %270 : vector<1x8x128xf32> to vector<8x128xf32>
    %272 = arith.truncf %228 : vector<8x32xf32> to vector<8x32xbf16>
    %cst_83 = arith.constant dense<0.000000e+00> : vector<8x128xf32>
    %273 = tpu.matmul %272, %18, %cst_83 {dimension_numbers = #tpu.dot_dimension_numbers<[1], [0], [0], [1], [0, 0, 1, 1], [], []>} : vector<8x32xbf16>, vector<32x128xbf16>, vector<8x128xf32> -> vector<8x128xf32>
    %274 = arith.addf %271, %273 : vector<8x128xf32>
    %275 = vector.extract_strided_slice %274 {offsets = [0, 0], sizes = [8, 32], strides = [1, 1]} : vector<8x128xf32> to vector<8x32xf32>
    %276 = arith.negf %275 : vector<8x32xf32>
    %277 = math.exp %276 : vector<8x32xf32>
    %cst_84 = arith.constant 1.000000e+00 : f32
    %278 = vector.broadcast %cst_84 : f32 to vector<8x32xf32>
    %279 = arith.addf %278, %277 : vector<8x32xf32>
    %280 = arith.divf %278, %279 : vector<8x32xf32>
    %281 = vector.extract_strided_slice %274 {offsets = [0, 32], sizes = [8, 32], strides = [1, 1]} : vector<8x128xf32> to vector<8x32xf32>
    %282 = arith.negf %281 : vector<8x32xf32>
    %283 = math.exp %282 : vector<8x32xf32>
    %cst_85 = arith.constant 1.000000e+00 : f32
    %284 = vector.broadcast %cst_85 : f32 to vector<8x32xf32>
    %285 = arith.addf %284, %283 : vector<8x32xf32>
    %286 = arith.divf %284, %285 : vector<8x32xf32>
    %287 = vector.extract_strided_slice %274 {offsets = [0, 64], sizes = [8, 32], strides = [1, 1]} : vector<8x128xf32> to vector<8x32xf32>
    %288 = math.tanh %287 : vector<8x32xf32>
    %289 = vector.extract_strided_slice %274 {offsets = [0, 96], sizes = [8, 32], strides = [1, 1]} : vector<8x128xf32> to vector<8x32xf32>
    %290 = arith.negf %289 : vector<8x32xf32>
    %291 = math.exp %290 : vector<8x32xf32>
    %cst_86 = arith.constant 1.000000e+00 : f32
    %292 = vector.broadcast %cst_86 : f32 to vector<8x32xf32>
    %293 = arith.addf %292, %291 : vector<8x32xf32>
    %294 = arith.divf %292, %293 : vector<8x32xf32>
    %295 = arith.mulf %286, %226 : vector<8x32xf32>
    %296 = arith.mulf %280, %288 : vector<8x32xf32>
    %297 = arith.addf %295, %296 : vector<8x32xf32>
    %298 = math.tanh %297 : vector<8x32xf32>
    %299 = arith.mulf %294, %298 : vector<8x32xf32>
    %300 = arith.index_cast %233 : i32 to index
    %c0_87 = arith.constant 0 : index
    %c0_88 = arith.constant 0 : index
    %301 = vector.load %arg12[%300, %c0_87, %c0_88] : memref<8x8x32xf32, #tpu.memory_space<vmem>>, vector<1x8x32xf32>
    %302 = vector.shape_cast %301 : vector<1x8x32xf32> to vector<8x32xf32>
    %303 = vector.shape_cast %299 : vector<8x32xf32> to vector<1x8x32xf32>
    tpu.vector_store %arg12[%300, %c0_87, %c0_88], %303 {strides = array<i32>} : memref<8x8x32xf32, #tpu.memory_space<vmem>>, vector<1x8x32xf32>,
    %c4_i32 = arith.constant 4 : i32
    %c7_i32_89 = arith.constant 7 : i32
    %304 = arith.subi %c7_i32_89, %c4_i32 : i32
    %305 = arith.index_cast %c4_i32 : i32 to index
    %c0_90 = arith.constant 0 : index
    %c0_91 = arith.constant 0 : index
    %306 = vector.load %arg9[%305, %c0_90, %c0_91] : memref<8x8x128xf32, #tpu.memory_space<vmem>>, vector<1x8x128xf32>
    %307 = vector.shape_cast %306 : vector<1x8x128xf32> to vector<8x128xf32>
    %308 = arith.truncf %264 : vector<8x32xf32> to vector<8x32xbf16>
    %cst_92 = arith.constant dense<0.000000e+00> : vector<8x128xf32>
    %309 = tpu.matmul %308, %17, %cst_92 {dimension_numbers = #tpu.dot_dimension_numbers<[1], [0], [0], [1], [0, 0, 1, 1], [], []>} : vector<8x32xbf16>, vector<32x128xbf16>, vector<8x128xf32> -> vector<8x128xf32>
    %310 = arith.addf %307, %309 : vector<8x128xf32>
    %311 = vector.extract_strided_slice %310 {offsets = [0, 0], sizes = [8, 32], strides = [1, 1]} : vector<8x128xf32> to vector<8x32xf32>
    %312 = arith.negf %311 : vector<8x32xf32>
    %313 = math.exp %312 : vector<8x32xf32>
    %cst_93 = arith.constant 1.000000e+00 : f32
    %314 = vector.broadcast %cst_93 : f32 to vector<8x32xf32>
    %315 = arith.addf %314, %313 : vector<8x32xf32>
    %316 = arith.divf %314, %315 : vector<8x32xf32>
    %317 = vector.extract_strided_slice %310 {offsets = [0, 32], sizes = [8, 32], strides = [1, 1]} : vector<8x128xf32> to vector<8x32xf32>
    %318 = arith.negf %317 : vector<8x32xf32>
    %319 = math.exp %318 : vector<8x32xf32>
    %cst_94 = arith.constant 1.000000e+00 : f32
    %320 = vector.broadcast %cst_94 : f32 to vector<8x32xf32>
    %321 = arith.addf %320, %319 : vector<8x32xf32>
    %322 = arith.divf %320, %321 : vector<8x32xf32>
    %323 = vector.extract_strided_slice %310 {offsets = [0, 64], sizes = [8, 32], strides = [1, 1]} : vector<8x128xf32> to vector<8x32xf32>
    %324 = math.tanh %323 : vector<8x32xf32>
    %325 = vector.extract_strided_slice %310 {offsets = [0, 96], sizes = [8, 32], strides = [1, 1]} : vector<8x128xf32> to vector<8x32xf32>
    %326 = arith.negf %325 : vector<8x32xf32>
    %327 = math.exp %326 : vector<8x32xf32>
    %cst_95 = arith.constant 1.000000e+00 : f32
    %328 = vector.broadcast %cst_95 : f32 to vector<8x32xf32>
    %329 = arith.addf %328, %327 : vector<8x32xf32>
    %330 = arith.divf %328, %329 : vector<8x32xf32>
    %331 = arith.mulf %322, %262 : vector<8x32xf32>
    %332 = arith.mulf %316, %324 : vector<8x32xf32>
    %333 = arith.addf %331, %332 : vector<8x32xf32>
    %334 = math.tanh %333 : vector<8x32xf32>
    %335 = arith.mulf %330, %334 : vector<8x32xf32>
    %336 = arith.index_cast %c4_i32 : i32 to index
    %c0_96 = arith.constant 0 : index
    %c0_97 = arith.constant 0 : index
    %337 = vector.load %arg11[%336, %c0_96, %c0_97] : memref<8x8x32xf32, #tpu.memory_space<vmem>>, vector<1x8x32xf32>
    %338 = vector.shape_cast %337 : vector<1x8x32xf32> to vector<8x32xf32>
    %339 = vector.shape_cast %335 : vector<8x32xf32> to vector<1x8x32xf32>
    tpu.vector_store %arg11[%336, %c0_96, %c0_97], %339 {strides = array<i32>} : memref<8x8x32xf32, #tpu.memory_space<vmem>>, vector<1x8x32xf32>,
    %340 = arith.index_cast %304 : i32 to index
    %c0_98 = arith.constant 0 : index
    %c0_99 = arith.constant 0 : index
    %341 = vector.load %arg10[%340, %c0_98, %c0_99] : memref<8x8x128xf32, #tpu.memory_space<vmem>>, vector<1x8x128xf32>
    %342 = vector.shape_cast %341 : vector<1x8x128xf32> to vector<8x128xf32>
    %343 = arith.truncf %299 : vector<8x32xf32> to vector<8x32xbf16>
    %cst_100 = arith.constant dense<0.000000e+00> : vector<8x128xf32>
    %344 = tpu.matmul %343, %18, %cst_100 {dimension_numbers = #tpu.dot_dimension_numbers<[1], [0], [0], [1], [0, 0, 1, 1], [], []>} : vector<8x32xbf16>, vector<32x128xbf16>, vector<8x128xf32> -> vector<8x128xf32>
    %345 = arith.addf %342, %344 : vector<8x128xf32>
    %346 = vector.extract_strided_slice %345 {offsets = [0, 0], sizes = [8, 32], strides = [1, 1]} : vector<8x128xf32> to vector<8x32xf32>
    %347 = arith.negf %346 : vector<8x32xf32>
    %348 = math.exp %347 : vector<8x32xf32>
    %cst_101 = arith.constant 1.000000e+00 : f32
    %349 = vector.broadcast %cst_101 : f32 to vector<8x32xf32>
    %350 = arith.addf %349, %348 : vector<8x32xf32>
    %351 = arith.divf %349, %350 : vector<8x32xf32>
    %352 = vector.extract_strided_slice %345 {offsets = [0, 32], sizes = [8, 32], strides = [1, 1]} : vector<8x128xf32> to vector<8x32xf32>
    %353 = arith.negf %352 : vector<8x32xf32>
    %354 = math.exp %353 : vector<8x32xf32>
    %cst_102 = arith.constant 1.000000e+00 : f32
    %355 = vector.broadcast %cst_102 : f32 to vector<8x32xf32>
    %356 = arith.addf %355, %354 : vector<8x32xf32>
    %357 = arith.divf %355, %356 : vector<8x32xf32>
    %358 = vector.extract_strided_slice %345 {offsets = [0, 64], sizes = [8, 32], strides = [1, 1]} : vector<8x128xf32> to vector<8x32xf32>
    %359 = math.tanh %358 : vector<8x32xf32>
    %360 = vector.extract_strided_slice %345 {offsets = [0, 96], sizes = [8, 32], strides = [1, 1]} : vector<8x128xf32> to vector<8x32xf32>
    %361 = arith.negf %360 : vector<8x32xf32>
    %362 = math.exp %361 : vector<8x32xf32>
    %cst_103 = arith.constant 1.000000e+00 : f32
    %363 = vector.broadcast %cst_103 : f32 to vector<8x32xf32>
    %364 = arith.addf %363, %362 : vector<8x32xf32>
    %365 = arith.divf %363, %364 : vector<8x32xf32>
    %366 = arith.mulf %357, %297 : vector<8x32xf32>
    %367 = arith.mulf %351, %359 : vector<8x32xf32>
    %368 = arith.addf %366, %367 : vector<8x32xf32>
    %369 = math.tanh %368 : vector<8x32xf32>
    %370 = arith.mulf %365, %369 : vector<8x32xf32>
    %371 = arith.index_cast %304 : i32 to index
    %c0_104 = arith.constant 0 : index
    %c0_105 = arith.constant 0 : index
    %372 = vector.load %arg12[%371, %c0_104, %c0_105] : memref<8x8x32xf32, #tpu.memory_space<vmem>>, vector<1x8x32xf32>
    %373 = vector.shape_cast %372 : vector<1x8x32xf32> to vector<8x32xf32>
    %374 = vector.shape_cast %370 : vector<8x32xf32> to vector<1x8x32xf32>
    tpu.vector_store %arg12[%371, %c0_104, %c0_105], %374 {strides = array<i32>} : memref<8x8x32xf32, #tpu.memory_space<vmem>>, vector<1x8x32xf32>,
    %c5_i32 = arith.constant 5 : i32
    %c7_i32_106 = arith.constant 7 : i32
    %375 = arith.subi %c7_i32_106, %c5_i32 : i32
    %376 = arith.index_cast %c5_i32 : i32 to index
    %c0_107 = arith.constant 0 : index
    %c0_108 = arith.constant 0 : index
    %377 = vector.load %arg9[%376, %c0_107, %c0_108] : memref<8x8x128xf32, #tpu.memory_space<vmem>>, vector<1x8x128xf32>
    %378 = vector.shape_cast %377 : vector<1x8x128xf32> to vector<8x128xf32>
    %379 = arith.truncf %335 : vector<8x32xf32> to vector<8x32xbf16>
    %cst_109 = arith.constant dense<0.000000e+00> : vector<8x128xf32>
    %380 = tpu.matmul %379, %17, %cst_109 {dimension_numbers = #tpu.dot_dimension_numbers<[1], [0], [0], [1], [0, 0, 1, 1], [], []>} : vector<8x32xbf16>, vector<32x128xbf16>, vector<8x128xf32> -> vector<8x128xf32>
    %381 = arith.addf %378, %380 : vector<8x128xf32>
    %382 = vector.extract_strided_slice %381 {offsets = [0, 0], sizes = [8, 32], strides = [1, 1]} : vector<8x128xf32> to vector<8x32xf32>
    %383 = arith.negf %382 : vector<8x32xf32>
    %384 = math.exp %383 : vector<8x32xf32>
    %cst_110 = arith.constant 1.000000e+00 : f32
    %385 = vector.broadcast %cst_110 : f32 to vector<8x32xf32>
    %386 = arith.addf %385, %384 : vector<8x32xf32>
    %387 = arith.divf %385, %386 : vector<8x32xf32>
    %388 = vector.extract_strided_slice %381 {offsets = [0, 32], sizes = [8, 32], strides = [1, 1]} : vector<8x128xf32> to vector<8x32xf32>
    %389 = arith.negf %388 : vector<8x32xf32>
    %390 = math.exp %389 : vector<8x32xf32>
    %cst_111 = arith.constant 1.000000e+00 : f32
    %391 = vector.broadcast %cst_111 : f32 to vector<8x32xf32>
    %392 = arith.addf %391, %390 : vector<8x32xf32>
    %393 = arith.divf %391, %392 : vector<8x32xf32>
    %394 = vector.extract_strided_slice %381 {offsets = [0, 64], sizes = [8, 32], strides = [1, 1]} : vector<8x128xf32> to vector<8x32xf32>
    %395 = math.tanh %394 : vector<8x32xf32>
    %396 = vector.extract_strided_slice %381 {offsets = [0, 96], sizes = [8, 32], strides = [1, 1]} : vector<8x128xf32> to vector<8x32xf32>
    %397 = arith.negf %396 : vector<8x32xf32>
    %398 = math.exp %397 : vector<8x32xf32>
    %cst_112 = arith.constant 1.000000e+00 : f32
    %399 = vector.broadcast %cst_112 : f32 to vector<8x32xf32>
    %400 = arith.addf %399, %398 : vector<8x32xf32>
    %401 = arith.divf %399, %400 : vector<8x32xf32>
    %402 = arith.mulf %393, %333 : vector<8x32xf32>
    %403 = arith.mulf %387, %395 : vector<8x32xf32>
    %404 = arith.addf %402, %403 : vector<8x32xf32>
    %405 = math.tanh %404 : vector<8x32xf32>
    %406 = arith.mulf %401, %405 : vector<8x32xf32>
    %407 = arith.index_cast %c5_i32 : i32 to index
    %c0_113 = arith.constant 0 : index
    %c0_114 = arith.constant 0 : index
    %408 = vector.load %arg11[%407, %c0_113, %c0_114] : memref<8x8x32xf32, #tpu.memory_space<vmem>>, vector<1x8x32xf32>
    %409 = vector.shape_cast %408 : vector<1x8x32xf32> to vector<8x32xf32>
    %410 = vector.shape_cast %406 : vector<8x32xf32> to vector<1x8x32xf32>
    tpu.vector_store %arg11[%407, %c0_113, %c0_114], %410 {strides = array<i32>} : memref<8x8x32xf32, #tpu.memory_space<vmem>>, vector<1x8x32xf32>,
    %411 = arith.index_cast %375 : i32 to index
    %c0_115 = arith.constant 0 : index
    %c0_116 = arith.constant 0 : index
    %412 = vector.load %arg10[%411, %c0_115, %c0_116] : memref<8x8x128xf32, #tpu.memory_space<vmem>>, vector<1x8x128xf32>
    %413 = vector.shape_cast %412 : vector<1x8x128xf32> to vector<8x128xf32>
    %414 = arith.truncf %370 : vector<8x32xf32> to vector<8x32xbf16>
    %cst_117 = arith.constant dense<0.000000e+00> : vector<8x128xf32>
    %415 = tpu.matmul %414, %18, %cst_117 {dimension_numbers = #tpu.dot_dimension_numbers<[1], [0], [0], [1], [0, 0, 1, 1], [], []>} : vector<8x32xbf16>, vector<32x128xbf16>, vector<8x128xf32> -> vector<8x128xf32>
    %416 = arith.addf %413, %415 : vector<8x128xf32>
    %417 = vector.extract_strided_slice %416 {offsets = [0, 0], sizes = [8, 32], strides = [1, 1]} : vector<8x128xf32> to vector<8x32xf32>
    %418 = arith.negf %417 : vector<8x32xf32>
    %419 = math.exp %418 : vector<8x32xf32>
    %cst_118 = arith.constant 1.000000e+00 : f32
    %420 = vector.broadcast %cst_118 : f32 to vector<8x32xf32>
    %421 = arith.addf %420, %419 : vector<8x32xf32>
    %422 = arith.divf %420, %421 : vector<8x32xf32>
    %423 = vector.extract_strided_slice %416 {offsets = [0, 32], sizes = [8, 32], strides = [1, 1]} : vector<8x128xf32> to vector<8x32xf32>
    %424 = arith.negf %423 : vector<8x32xf32>
    %425 = math.exp %424 : vector<8x32xf32>
    %cst_119 = arith.constant 1.000000e+00 : f32
    %426 = vector.broadcast %cst_119 : f32 to vector<8x32xf32>
    %427 = arith.addf %426, %425 : vector<8x32xf32>
    %428 = arith.divf %426, %427 : vector<8x32xf32>
    %429 = vector.extract_strided_slice %416 {offsets = [0, 64], sizes = [8, 32], strides = [1, 1]} : vector<8x128xf32> to vector<8x32xf32>
    %430 = math.tanh %429 : vector<8x32xf32>
    %431 = vector.extract_strided_slice %416 {offsets = [0, 96], sizes = [8, 32], strides = [1, 1]} : vector<8x128xf32> to vector<8x32xf32>
    %432 = arith.negf %431 : vector<8x32xf32>
    %433 = math.exp %432 : vector<8x32xf32>
    %cst_120 = arith.constant 1.000000e+00 : f32
    %434 = vector.broadcast %cst_120 : f32 to vector<8x32xf32>
    %435 = arith.addf %434, %433 : vector<8x32xf32>
    %436 = arith.divf %434, %435 : vector<8x32xf32>
    %437 = arith.mulf %428, %368 : vector<8x32xf32>
    %438 = arith.mulf %422, %430 : vector<8x32xf32>
    %439 = arith.addf %437, %438 : vector<8x32xf32>
    %440 = math.tanh %439 : vector<8x32xf32>
    %441 = arith.mulf %436, %440 : vector<8x32xf32>
    %442 = arith.index_cast %375 : i32 to index
    %c0_121 = arith.constant 0 : index
    %c0_122 = arith.constant 0 : index
    %443 = vector.load %arg12[%442, %c0_121, %c0_122] : memref<8x8x32xf32, #tpu.memory_space<vmem>>, vector<1x8x32xf32>
    %444 = vector.shape_cast %443 : vector<1x8x32xf32> to vector<8x32xf32>
    %445 = vector.shape_cast %441 : vector<8x32xf32> to vector<1x8x32xf32>
    tpu.vector_store %arg12[%442, %c0_121, %c0_122], %445 {strides = array<i32>} : memref<8x8x32xf32, #tpu.memory_space<vmem>>, vector<1x8x32xf32>,
    %c6_i32 = arith.constant 6 : i32
    %c7_i32_123 = arith.constant 7 : i32
    %446 = arith.subi %c7_i32_123, %c6_i32 : i32
    %447 = arith.index_cast %c6_i32 : i32 to index
    %c0_124 = arith.constant 0 : index
    %c0_125 = arith.constant 0 : index
    %448 = vector.load %arg9[%447, %c0_124, %c0_125] : memref<8x8x128xf32, #tpu.memory_space<vmem>>, vector<1x8x128xf32>
    %449 = vector.shape_cast %448 : vector<1x8x128xf32> to vector<8x128xf32>
    %450 = arith.truncf %406 : vector<8x32xf32> to vector<8x32xbf16>
    %cst_126 = arith.constant dense<0.000000e+00> : vector<8x128xf32>
    %451 = tpu.matmul %450, %17, %cst_126 {dimension_numbers = #tpu.dot_dimension_numbers<[1], [0], [0], [1], [0, 0, 1, 1], [], []>} : vector<8x32xbf16>, vector<32x128xbf16>, vector<8x128xf32> -> vector<8x128xf32>
    %452 = arith.addf %449, %451 : vector<8x128xf32>
    %453 = vector.extract_strided_slice %452 {offsets = [0, 0], sizes = [8, 32], strides = [1, 1]} : vector<8x128xf32> to vector<8x32xf32>
    %454 = arith.negf %453 : vector<8x32xf32>
    %455 = math.exp %454 : vector<8x32xf32>
    %cst_127 = arith.constant 1.000000e+00 : f32
    %456 = vector.broadcast %cst_127 : f32 to vector<8x32xf32>
    %457 = arith.addf %456, %455 : vector<8x32xf32>
    %458 = arith.divf %456, %457 : vector<8x32xf32>
    %459 = vector.extract_strided_slice %452 {offsets = [0, 32], sizes = [8, 32], strides = [1, 1]} : vector<8x128xf32> to vector<8x32xf32>
    %460 = arith.negf %459 : vector<8x32xf32>
    %461 = math.exp %460 : vector<8x32xf32>
    %cst_128 = arith.constant 1.000000e+00 : f32
    %462 = vector.broadcast %cst_128 : f32 to vector<8x32xf32>
    %463 = arith.addf %462, %461 : vector<8x32xf32>
    %464 = arith.divf %462, %463 : vector<8x32xf32>
    %465 = vector.extract_strided_slice %452 {offsets = [0, 64], sizes = [8, 32], strides = [1, 1]} : vector<8x128xf32> to vector<8x32xf32>
    %466 = math.tanh %465 : vector<8x32xf32>
    %467 = vector.extract_strided_slice %452 {offsets = [0, 96], sizes = [8, 32], strides = [1, 1]} : vector<8x128xf32> to vector<8x32xf32>
    %468 = arith.negf %467 : vector<8x32xf32>
    %469 = math.exp %468 : vector<8x32xf32>
    %cst_129 = arith.constant 1.000000e+00 : f32
    %470 = vector.broadcast %cst_129 : f32 to vector<8x32xf32>
    %471 = arith.addf %470, %469 : vector<8x32xf32>
    %472 = arith.divf %470, %471 : vector<8x32xf32>
    %473 = arith.mulf %464, %404 : vector<8x32xf32>
    %474 = arith.mulf %458, %466 : vector<8x32xf32>
    %475 = arith.addf %473, %474 : vector<8x32xf32>
    %476 = math.tanh %475 : vector<8x32xf32>
    %477 = arith.mulf %472, %476 : vector<8x32xf32>
    %478 = arith.index_cast %c6_i32 : i32 to index
    %c0_130 = arith.constant 0 : index
    %c0_131 = arith.constant 0 : index
    %479 = vector.load %arg11[%478, %c0_130, %c0_131] : memref<8x8x32xf32, #tpu.memory_space<vmem>>, vector<1x8x32xf32>
    %480 = vector.shape_cast %479 : vector<1x8x32xf32> to vector<8x32xf32>
    %481 = vector.shape_cast %477 : vector<8x32xf32> to vector<1x8x32xf32>
    tpu.vector_store %arg11[%478, %c0_130, %c0_131], %481 {strides = array<i32>} : memref<8x8x32xf32, #tpu.memory_space<vmem>>, vector<1x8x32xf32>,
    %482 = arith.index_cast %446 : i32 to index
    %c0_132 = arith.constant 0 : index
    %c0_133 = arith.constant 0 : index
    %483 = vector.load %arg10[%482, %c0_132, %c0_133] : memref<8x8x128xf32, #tpu.memory_space<vmem>>, vector<1x8x128xf32>
    %484 = vector.shape_cast %483 : vector<1x8x128xf32> to vector<8x128xf32>
    %485 = arith.truncf %441 : vector<8x32xf32> to vector<8x32xbf16>
    %cst_134 = arith.constant dense<0.000000e+00> : vector<8x128xf32>
    %486 = tpu.matmul %485, %18, %cst_134 {dimension_numbers = #tpu.dot_dimension_numbers<[1], [0], [0], [1], [0, 0, 1, 1], [], []>} : vector<8x32xbf16>, vector<32x128xbf16>, vector<8x128xf32> -> vector<8x128xf32>
    %487 = arith.addf %484, %486 : vector<8x128xf32>
    %488 = vector.extract_strided_slice %487 {offsets = [0, 0], sizes = [8, 32], strides = [1, 1]} : vector<8x128xf32> to vector<8x32xf32>
    %489 = arith.negf %488 : vector<8x32xf32>
    %490 = math.exp %489 : vector<8x32xf32>
    %cst_135 = arith.constant 1.000000e+00 : f32
    %491 = vector.broadcast %cst_135 : f32 to vector<8x32xf32>
    %492 = arith.addf %491, %490 : vector<8x32xf32>
    %493 = arith.divf %491, %492 : vector<8x32xf32>
    %494 = vector.extract_strided_slice %487 {offsets = [0, 32], sizes = [8, 32], strides = [1, 1]} : vector<8x128xf32> to vector<8x32xf32>
    %495 = arith.negf %494 : vector<8x32xf32>
    %496 = math.exp %495 : vector<8x32xf32>
    %cst_136 = arith.constant 1.000000e+00 : f32
    %497 = vector.broadcast %cst_136 : f32 to vector<8x32xf32>
    %498 = arith.addf %497, %496 : vector<8x32xf32>
    %499 = arith.divf %497, %498 : vector<8x32xf32>
    %500 = vector.extract_strided_slice %487 {offsets = [0, 64], sizes = [8, 32], strides = [1, 1]} : vector<8x128xf32> to vector<8x32xf32>
    %501 = math.tanh %500 : vector<8x32xf32>
    %502 = vector.extract_strided_slice %487 {offsets = [0, 96], sizes = [8, 32], strides = [1, 1]} : vector<8x128xf32> to vector<8x32xf32>
    %503 = arith.negf %502 : vector<8x32xf32>
    %504 = math.exp %503 : vector<8x32xf32>
    %cst_137 = arith.constant 1.000000e+00 : f32
    %505 = vector.broadcast %cst_137 : f32 to vector<8x32xf32>
    %506 = arith.addf %505, %504 : vector<8x32xf32>
    %507 = arith.divf %505, %506 : vector<8x32xf32>
    %508 = arith.mulf %499, %439 : vector<8x32xf32>
    %509 = arith.mulf %493, %501 : vector<8x32xf32>
    %510 = arith.addf %508, %509 : vector<8x32xf32>
    %511 = math.tanh %510 : vector<8x32xf32>
    %512 = arith.mulf %507, %511 : vector<8x32xf32>
    %513 = arith.index_cast %446 : i32 to index
    %c0_138 = arith.constant 0 : index
    %c0_139 = arith.constant 0 : index
    %514 = vector.load %arg12[%513, %c0_138, %c0_139] : memref<8x8x32xf32, #tpu.memory_space<vmem>>, vector<1x8x32xf32>
    %515 = vector.shape_cast %514 : vector<1x8x32xf32> to vector<8x32xf32>
    %516 = vector.shape_cast %512 : vector<8x32xf32> to vector<1x8x32xf32>
    tpu.vector_store %arg12[%513, %c0_138, %c0_139], %516 {strides = array<i32>} : memref<8x8x32xf32, #tpu.memory_space<vmem>>, vector<1x8x32xf32>,
    %c7_i32_140 = arith.constant 7 : i32
    %c7_i32_141 = arith.constant 7 : i32
    %517 = arith.subi %c7_i32_141, %c7_i32_140 : i32
    %518 = arith.index_cast %c7_i32_140 : i32 to index
    %c0_142 = arith.constant 0 : index
    %c0_143 = arith.constant 0 : index
    %519 = vector.load %arg9[%518, %c0_142, %c0_143] : memref<8x8x128xf32, #tpu.memory_space<vmem>>, vector<1x8x128xf32>
    %520 = vector.shape_cast %519 : vector<1x8x128xf32> to vector<8x128xf32>
    %521 = arith.truncf %477 : vector<8x32xf32> to vector<8x32xbf16>
    %cst_144 = arith.constant dense<0.000000e+00> : vector<8x128xf32>
    %522 = tpu.matmul %521, %17, %cst_144 {dimension_numbers = #tpu.dot_dimension_numbers<[1], [0], [0], [1], [0, 0, 1, 1], [], []>} : vector<8x32xbf16>, vector<32x128xbf16>, vector<8x128xf32> -> vector<8x128xf32>
    %523 = arith.addf %520, %522 : vector<8x128xf32>
    %524 = vector.extract_strided_slice %523 {offsets = [0, 0], sizes = [8, 32], strides = [1, 1]} : vector<8x128xf32> to vector<8x32xf32>
    %525 = arith.negf %524 : vector<8x32xf32>
    %526 = math.exp %525 : vector<8x32xf32>
    %cst_145 = arith.constant 1.000000e+00 : f32
    %527 = vector.broadcast %cst_145 : f32 to vector<8x32xf32>
    %528 = arith.addf %527, %526 : vector<8x32xf32>
    %529 = arith.divf %527, %528 : vector<8x32xf32>
    %530 = vector.extract_strided_slice %523 {offsets = [0, 32], sizes = [8, 32], strides = [1, 1]} : vector<8x128xf32> to vector<8x32xf32>
    %531 = arith.negf %530 : vector<8x32xf32>
    %532 = math.exp %531 : vector<8x32xf32>
    %cst_146 = arith.constant 1.000000e+00 : f32
    %533 = vector.broadcast %cst_146 : f32 to vector<8x32xf32>
    %534 = arith.addf %533, %532 : vector<8x32xf32>
    %535 = arith.divf %533, %534 : vector<8x32xf32>
    %536 = vector.extract_strided_slice %523 {offsets = [0, 64], sizes = [8, 32], strides = [1, 1]} : vector<8x128xf32> to vector<8x32xf32>
    %537 = math.tanh %536 : vector<8x32xf32>
    %538 = vector.extract_strided_slice %523 {offsets = [0, 96], sizes = [8, 32], strides = [1, 1]} : vector<8x128xf32> to vector<8x32xf32>
    %539 = arith.negf %538 : vector<8x32xf32>
    %540 = math.exp %539 : vector<8x32xf32>
    %cst_147 = arith.constant 1.000000e+00 : f32
    %541 = vector.broadcast %cst_147 : f32 to vector<8x32xf32>
    %542 = arith.addf %541, %540 : vector<8x32xf32>
    %543 = arith.divf %541, %542 : vector<8x32xf32>
    %544 = arith.mulf %535, %475 : vector<8x32xf32>
    %545 = arith.mulf %529, %537 : vector<8x32xf32>
    %546 = arith.addf %544, %545 : vector<8x32xf32>
    %547 = math.tanh %546 : vector<8x32xf32>
    %548 = arith.mulf %543, %547 : vector<8x32xf32>
    %549 = arith.index_cast %c7_i32_140 : i32 to index
    %c0_148 = arith.constant 0 : index
    %c0_149 = arith.constant 0 : index
    %550 = vector.load %arg11[%549, %c0_148, %c0_149] : memref<8x8x32xf32, #tpu.memory_space<vmem>>, vector<1x8x32xf32>
    %551 = vector.shape_cast %550 : vector<1x8x32xf32> to vector<8x32xf32>
    %552 = vector.shape_cast %548 : vector<8x32xf32> to vector<1x8x32xf32>
    tpu.vector_store %arg11[%549, %c0_148, %c0_149], %552 {strides = array<i32>} : memref<8x8x32xf32, #tpu.memory_space<vmem>>, vector<1x8x32xf32>,
    %553 = arith.index_cast %517 : i32 to index
    %c0_150 = arith.constant 0 : index
    %c0_151 = arith.constant 0 : index
    %554 = vector.load %arg10[%553, %c0_150, %c0_151] : memref<8x8x128xf32, #tpu.memory_space<vmem>>, vector<1x8x128xf32>
    %555 = vector.shape_cast %554 : vector<1x8x128xf32> to vector<8x128xf32>
    %556 = arith.truncf %512 : vector<8x32xf32> to vector<8x32xbf16>
    %cst_152 = arith.constant dense<0.000000e+00> : vector<8x128xf32>
    %557 = tpu.matmul %556, %18, %cst_152 {dimension_numbers = #tpu.dot_dimension_numbers<[1], [0], [0], [1], [0, 0, 1, 1], [], []>} : vector<8x32xbf16>, vector<32x128xbf16>, vector<8x128xf32> -> vector<8x128xf32>
    %558 = arith.addf %555, %557 : vector<8x128xf32>
    %559 = vector.extract_strided_slice %558 {offsets = [0, 0], sizes = [8, 32], strides = [1, 1]} : vector<8x128xf32> to vector<8x32xf32>
    %560 = arith.negf %559 : vector<8x32xf32>
    %561 = math.exp %560 : vector<8x32xf32>
    %cst_153 = arith.constant 1.000000e+00 : f32
    %562 = vector.broadcast %cst_153 : f32 to vector<8x32xf32>
    %563 = arith.addf %562, %561 : vector<8x32xf32>
    %564 = arith.divf %562, %563 : vector<8x32xf32>
    %565 = vector.extract_strided_slice %558 {offsets = [0, 32], sizes = [8, 32], strides = [1, 1]} : vector<8x128xf32> to vector<8x32xf32>
    %566 = arith.negf %565 : vector<8x32xf32>
    %567 = math.exp %566 : vector<8x32xf32>
    %cst_154 = arith.constant 1.000000e+00 : f32
    %568 = vector.broadcast %cst_154 : f32 to vector<8x32xf32>
    %569 = arith.addf %568, %567 : vector<8x32xf32>
    %570 = arith.divf %568, %569 : vector<8x32xf32>
    %571 = vector.extract_strided_slice %558 {offsets = [0, 64], sizes = [8, 32], strides = [1, 1]} : vector<8x128xf32> to vector<8x32xf32>
    %572 = math.tanh %571 : vector<8x32xf32>
    %573 = vector.extract_strided_slice %558 {offsets = [0, 96], sizes = [8, 32], strides = [1, 1]} : vector<8x128xf32> to vector<8x32xf32>
    %574 = arith.negf %573 : vector<8x32xf32>
    %575 = math.exp %574 : vector<8x32xf32>
    %cst_155 = arith.constant 1.000000e+00 : f32
    %576 = vector.broadcast %cst_155 : f32 to vector<8x32xf32>
    %577 = arith.addf %576, %575 : vector<8x32xf32>
    %578 = arith.divf %576, %577 : vector<8x32xf32>
    %579 = arith.mulf %570, %510 : vector<8x32xf32>
    %580 = arith.mulf %564, %572 : vector<8x32xf32>
    %581 = arith.addf %579, %580 : vector<8x32xf32>
    %582 = math.tanh %581 : vector<8x32xf32>
    %583 = arith.mulf %578, %582 : vector<8x32xf32>
    %584 = arith.index_cast %517 : i32 to index
    %c0_156 = arith.constant 0 : index
    %c0_157 = arith.constant 0 : index
    %585 = vector.load %arg12[%584, %c0_156, %c0_157] : memref<8x8x32xf32, #tpu.memory_space<vmem>>, vector<1x8x32xf32>
    %586 = vector.shape_cast %585 : vector<1x8x32xf32> to vector<8x32xf32>
    %587 = vector.shape_cast %583 : vector<8x32xf32> to vector<1x8x32xf32>
    tpu.vector_store %arg12[%584, %c0_156, %c0_157], %587 {strides = array<i32>} : memref<8x8x32xf32, #tpu.memory_space<vmem>>, vector<1x8x32xf32>,
    %c8_i32 = arith.constant 8 : i32
    %c0_158 = arith.constant 0 : index
    %c0_159 = arith.constant 0 : index
    %c0_160 = arith.constant 0 : index
    %588 = vector.load %arg11[%c0_158, %c0_159, %c0_160] : memref<8x8x32xf32, #tpu.memory_space<vmem>>, vector<8x8x32xf32>
    %c0_161 = arith.constant 0 : index
    %c0_162 = arith.constant 0 : index
    %c0_163 = arith.constant 0 : index
    %589 = vector.load %arg12[%c0_161, %c0_162, %c0_163] : memref<8x8x32xf32, #tpu.memory_space<vmem>>, vector<8x8x32xf32>
    %590 = tpu.concatenate %588, %589 in 2 : vector<8x8x32xf32>, vector<8x8x32xf32> -> vector<8x8x64xf32>
    %591 = arith.truncf %590 : vector<8x8x64xf32> to vector<8x8x64xbf16>
    %c0_164 = arith.constant 0 : index
    %c0_165 = arith.constant 0 : index
    %c0_166 = arith.constant 0 : index
    %592 = vector.load %arg8[%c0_164, %c0_165, %c0_166] : memref<8x8x64xbf16, #tpu.memory_space<vmem>>, vector<8x8x64xbf16>
    tpu.vector_store %arg8[%c0_164, %c0_165, %c0_166], %591 {strides = array<i32>} : memref<8x8x64xbf16, #tpu.memory_space<vmem>>, vector<8x8x64xbf16>,
    return
  }
  func.func @transform_0(%arg0: i32) -> (i32, i32, i32) {
    %c0_i32 = arith.constant 0 : i32
    %c0_i32_0 = arith.constant 0 : i32
    %c0_i32_1 = arith.constant 0 : i32
    return %c0_i32, %arg0, %c0_i32_0 : i32, i32, i32
  }
  func.func @transform_1(%arg0: i32) -> (i32, i32) {
    %c0_i32 = arith.constant 0 : i32
    %c0_i32_0 = arith.constant 0 : i32
    %c0_i32_1 = arith.constant 0 : i32
    return %c0_i32, %c0_i32_0 : i32, i32
  }
  func.func @transform_2(%arg0: i32) -> (i32, i32) {
    %c0_i32 = arith.constant 0 : i32
    %c0_i32_0 = arith.constant 0 : i32
    %c0_i32_1 = arith.constant 0 : i32
    return %c0_i32, %c0_i32_0 : i32, i32
  }
  func.func @transform_3(%arg0: i32) -> (i32, i32) {
    %c0_i32 = arith.constant 0 : i32
    %c0_i32_0 = arith.constant 0 : i32
    %c0_i32_1 = arith.constant 0 : i32
    return %c0_i32, %c0_i32_0 : i32, i32
  }
  func.func @transform_4(%arg0: i32) -> (i32, i32) {
    %c0_i32 = arith.constant 0 : i32
    %c0_i32_0 = arith.constant 0 : i32
    %c0_i32_1 = arith.constant 0 : i32
    return %c0_i32, %c0_i32_0 : i32, i32
  }
  func.func @transform_5(%arg0: i32) -> (i32, i32) {
    %c0_i32 = arith.constant 0 : i32
    %c0_i32_0 = arith.constant 0 : i32
    %c0_i32_1 = arith.constant 0 : i32
    return %c0_i32, %c0_i32_0 : i32, i32
  }
  func.func @transform_6(%arg0: i32) -> (i32, i32) {
    %c0_i32 = arith.constant 0 : i32
    %c0_i32_0 = arith.constant 0 : i32
    %c0_i32_1 = arith.constant 0 : i32
    return %c0_i32, %c0_i32_0 : i32, i32
  }
  func.func @transform_7(%arg0: i32) -> (i32, i32, i32) {
    %c0_i32 = arith.constant 0 : i32
    %c0_i32_0 = arith.constant 0 : i32
    %c0_i32_1 = arith.constant 0 : i32
    return %c0_i32, %arg0, %c0_i32_0 : i32, i32, i32
  }
}

module attributes {stable_mosaic.version = 11 : i64} {
  func.func @_final_bilstm_cls_kernel(%arg0: i32, %arg1: memref<8x8x64xbf16, #tpu.memory_space<vmem>>, %arg2: memref<64x128xbf16, #tpu.memory_space<vmem>>, %arg3: memref<32x128xbf16, #tpu.memory_space<vmem>>, %arg4: memref<1x128xf32, #tpu.memory_space<vmem>>, %arg5: memref<64x128xbf16, #tpu.memory_space<vmem>>, %arg6: memref<1x128xf32, #tpu.memory_space<vmem>>, %arg7: memref<64x4xbf16, #tpu.memory_space<vmem>>, %arg8: memref<1x4xf32, #tpu.memory_space<vmem>>, %arg9: memref<8x4xf32, #tpu.memory_space<vmem>>, %arg10: memref<8x8x128xf32, #tpu.memory_space<vmem>>) attributes {dimension_semantics = [#tpu.dimension_semantics<parallel>], iteration_bounds = array<i64: 1>, scalar_prefetch = 0 : i64, scratch_operands = 1 : i64, tpu.core_type = #tpu.core_type<tc>, window_params = [{transform_indices = @transform_0, window_bounds = array<i64: 8, 8, 64>}, {pipeline_mode = #tpu.pipeline_mode<synchronous>, transform_indices = @transform_1, window_bounds = array<i64: 64, 128>}, {pipeline_mode = #tpu.pipeline_mode<synchronous>, transform_indices = @transform_2, window_bounds = array<i64: 32, 128>}, {pipeline_mode = #tpu.pipeline_mode<synchronous>, transform_indices = @transform_3, window_bounds = array<i64: 1, 128>}, {pipeline_mode = #tpu.pipeline_mode<synchronous>, transform_indices = @transform_4, window_bounds = array<i64: 64, 128>}, {pipeline_mode = #tpu.pipeline_mode<synchronous>, transform_indices = @transform_5, window_bounds = array<i64: 1, 128>}, {pipeline_mode = #tpu.pipeline_mode<synchronous>, transform_indices = @transform_6, window_bounds = array<i64: 64, 4>}, {pipeline_mode = #tpu.pipeline_mode<synchronous>, transform_indices = @transform_7, window_bounds = array<i64: 1, 4>}, {transform_indices = @transform_8, window_bounds = array<i64: 8, 4>}]} {
    %c0 = arith.constant 0 : index
    %c0_0 = arith.constant 0 : index
    %c0_1 = arith.constant 0 : index
    %0 = vector.load %arg1[%c0, %c0_0, %c0_1] : memref<8x8x64xbf16, #tpu.memory_space<vmem>>, vector<8x8x64xbf16>
    %1 = vector.shape_cast %0 : vector<8x8x64xbf16> to vector<64x64xbf16>
    %c0_2 = arith.constant 0 : index
    %c0_3 = arith.constant 0 : index
    %2 = vector.load %arg2[%c0_2, %c0_3] : memref<64x128xbf16, #tpu.memory_space<vmem>>, vector<64x128xbf16>
    %cst = arith.constant dense<0.000000e+00> : vector<64x128xf32>
    %3 = tpu.matmul %1, %2, %cst {dimension_numbers = #tpu.dot_dimension_numbers<[1], [0], [0], [1], [0, 0, 1, 1], [], []>} : vector<64x64xbf16>, vector<64x128xbf16>, vector<64x128xf32> -> vector<64x128xf32>
    %c0_4 = arith.constant 0 : index
    %c0_5 = arith.constant 0 : index
    %4 = vector.load %arg4[%c0_4, %c0_5] : memref<1x128xf32, #tpu.memory_space<vmem>>, vector<1x128xf32>
    %5 = vector.broadcast %4 : vector<1x128xf32> to vector<64x128xf32>
    %6 = arith.addf %3, %5 : vector<64x128xf32>
    %7 = vector.shape_cast %6 : vector<64x128xf32> to vector<8x8x128xf32>
    %c0_6 = arith.constant 0 : index
    %c0_7 = arith.constant 0 : index
    %c0_8 = arith.constant 0 : index
    %8 = vector.load %arg10[%c0_6, %c0_7, %c0_8] : memref<8x8x128xf32, #tpu.memory_space<vmem>>, vector<8x8x128xf32>
    tpu.vector_store %arg10[%c0_6, %c0_7, %c0_8], %7 {strides = array<i32>} : memref<8x8x128xf32, #tpu.memory_space<vmem>>, vector<8x8x128xf32>,
    %9 = vector.extract_strided_slice %0 {offsets = [7, 0, 0], sizes = [1, 8, 64], strides = [1, 1, 1]} : vector<8x8x64xbf16> to vector<1x8x64xbf16>
    %10 = vector.shape_cast %9 : vector<1x8x64xbf16> to vector<8x64xbf16>
    %c0_9 = arith.constant 0 : index
    %c0_10 = arith.constant 0 : index
    %11 = vector.load %arg5[%c0_9, %c0_10] : memref<64x128xbf16, #tpu.memory_space<vmem>>, vector<64x128xbf16>
    %cst_11 = arith.constant dense<0.000000e+00> : vector<8x128xf32>
    %12 = tpu.matmul %10, %11, %cst_11 {dimension_numbers = #tpu.dot_dimension_numbers<[1], [0], [0], [1], [0, 0, 1, 1], [], []>} : vector<8x64xbf16>, vector<64x128xbf16>, vector<8x128xf32> -> vector<8x128xf32>
    %c0_12 = arith.constant 0 : index
    %c0_13 = arith.constant 0 : index
    %13 = vector.load %arg6[%c0_12, %c0_13] : memref<1x128xf32, #tpu.memory_space<vmem>>, vector<1x128xf32>
    %14 = vector.broadcast %13 : vector<1x128xf32> to vector<8x128xf32>
    %15 = arith.addf %12, %14 : vector<8x128xf32>
    %c0_14 = arith.constant 0 : index
    %c0_15 = arith.constant 0 : index
    %16 = vector.load %arg3[%c0_14, %c0_15] : memref<32x128xbf16, #tpu.memory_space<vmem>>, vector<32x128xbf16>
    %cst_16 = arith.constant 0.000000e+00 : f32
    %17 = vector.broadcast %cst_16 : f32 to vector<8x32xf32>
    %c0_i32 = arith.constant 0 : i32
    %18 = arith.index_cast %c0_i32 : i32 to index
    %c0_17 = arith.constant 0 : index
    %c0_18 = arith.constant 0 : index
    %19 = vector.load %arg10[%18, %c0_17, %c0_18] : memref<8x8x128xf32, #tpu.memory_space<vmem>>, vector<1x8x128xf32>
    %20 = vector.shape_cast %19 : vector<1x8x128xf32> to vector<8x128xf32>
    %21 = arith.truncf %17 : vector<8x32xf32> to vector<8x32xbf16>
    %cst_19 = arith.constant dense<0.000000e+00> : vector<8x128xf32>
    %22 = tpu.matmul %21, %16, %cst_19 {dimension_numbers = #tpu.dot_dimension_numbers<[1], [0], [0], [1], [0, 0, 1, 1], [], []>} : vector<8x32xbf16>, vector<32x128xbf16>, vector<8x128xf32> -> vector<8x128xf32>
    %23 = arith.addf %20, %22 : vector<8x128xf32>
    %24 = vector.extract_strided_slice %23 {offsets = [0, 0], sizes = [8, 32], strides = [1, 1]} : vector<8x128xf32> to vector<8x32xf32>
    %25 = arith.negf %24 : vector<8x32xf32>
    %26 = math.exp %25 : vector<8x32xf32>
    %cst_20 = arith.constant 1.000000e+00 : f32
    %27 = vector.broadcast %cst_20 : f32 to vector<8x32xf32>
    %28 = arith.addf %27, %26 : vector<8x32xf32>
    %29 = arith.divf %27, %28 : vector<8x32xf32>
    %30 = vector.extract_strided_slice %23 {offsets = [0, 32], sizes = [8, 32], strides = [1, 1]} : vector<8x128xf32> to vector<8x32xf32>
    %31 = arith.negf %30 : vector<8x32xf32>
    %32 = math.exp %31 : vector<8x32xf32>
    %cst_21 = arith.constant 1.000000e+00 : f32
    %33 = vector.broadcast %cst_21 : f32 to vector<8x32xf32>
    %34 = arith.addf %33, %32 : vector<8x32xf32>
    %35 = arith.divf %33, %34 : vector<8x32xf32>
    %36 = vector.extract_strided_slice %23 {offsets = [0, 64], sizes = [8, 32], strides = [1, 1]} : vector<8x128xf32> to vector<8x32xf32>
    %37 = math.tanh %36 : vector<8x32xf32>
    %38 = vector.extract_strided_slice %23 {offsets = [0, 96], sizes = [8, 32], strides = [1, 1]} : vector<8x128xf32> to vector<8x32xf32>
    %39 = arith.negf %38 : vector<8x32xf32>
    %40 = math.exp %39 : vector<8x32xf32>
    %cst_22 = arith.constant 1.000000e+00 : f32
    %41 = vector.broadcast %cst_22 : f32 to vector<8x32xf32>
    %42 = arith.addf %41, %40 : vector<8x32xf32>
    %43 = arith.divf %41, %42 : vector<8x32xf32>
    %44 = arith.mulf %35, %17 : vector<8x32xf32>
    %45 = arith.mulf %29, %37 : vector<8x32xf32>
    %46 = arith.addf %44, %45 : vector<8x32xf32>
    %47 = math.tanh %46 : vector<8x32xf32>
    %48 = arith.mulf %43, %47 : vector<8x32xf32>
    %c1_i32 = arith.constant 1 : i32
    %49 = arith.index_cast %c1_i32 : i32 to index
    %c0_23 = arith.constant 0 : index
    %c0_24 = arith.constant 0 : index
    %50 = vector.load %arg10[%49, %c0_23, %c0_24] : memref<8x8x128xf32, #tpu.memory_space<vmem>>, vector<1x8x128xf32>
    %51 = vector.shape_cast %50 : vector<1x8x128xf32> to vector<8x128xf32>
    %52 = arith.truncf %48 : vector<8x32xf32> to vector<8x32xbf16>
    %cst_25 = arith.constant dense<0.000000e+00> : vector<8x128xf32>
    %53 = tpu.matmul %52, %16, %cst_25 {dimension_numbers = #tpu.dot_dimension_numbers<[1], [0], [0], [1], [0, 0, 1, 1], [], []>} : vector<8x32xbf16>, vector<32x128xbf16>, vector<8x128xf32> -> vector<8x128xf32>
    %54 = arith.addf %51, %53 : vector<8x128xf32>
    %55 = vector.extract_strided_slice %54 {offsets = [0, 0], sizes = [8, 32], strides = [1, 1]} : vector<8x128xf32> to vector<8x32xf32>
    %56 = arith.negf %55 : vector<8x32xf32>
    %57 = math.exp %56 : vector<8x32xf32>
    %cst_26 = arith.constant 1.000000e+00 : f32
    %58 = vector.broadcast %cst_26 : f32 to vector<8x32xf32>
    %59 = arith.addf %58, %57 : vector<8x32xf32>
    %60 = arith.divf %58, %59 : vector<8x32xf32>
    %61 = vector.extract_strided_slice %54 {offsets = [0, 32], sizes = [8, 32], strides = [1, 1]} : vector<8x128xf32> to vector<8x32xf32>
    %62 = arith.negf %61 : vector<8x32xf32>
    %63 = math.exp %62 : vector<8x32xf32>
    %cst_27 = arith.constant 1.000000e+00 : f32
    %64 = vector.broadcast %cst_27 : f32 to vector<8x32xf32>
    %65 = arith.addf %64, %63 : vector<8x32xf32>
    %66 = arith.divf %64, %65 : vector<8x32xf32>
    %67 = vector.extract_strided_slice %54 {offsets = [0, 64], sizes = [8, 32], strides = [1, 1]} : vector<8x128xf32> to vector<8x32xf32>
    %68 = math.tanh %67 : vector<8x32xf32>
    %69 = vector.extract_strided_slice %54 {offsets = [0, 96], sizes = [8, 32], strides = [1, 1]} : vector<8x128xf32> to vector<8x32xf32>
    %70 = arith.negf %69 : vector<8x32xf32>
    %71 = math.exp %70 : vector<8x32xf32>
    %cst_28 = arith.constant 1.000000e+00 : f32
    %72 = vector.broadcast %cst_28 : f32 to vector<8x32xf32>
    %73 = arith.addf %72, %71 : vector<8x32xf32>
    %74 = arith.divf %72, %73 : vector<8x32xf32>
    %75 = arith.mulf %66, %46 : vector<8x32xf32>
    %76 = arith.mulf %60, %68 : vector<8x32xf32>
    %77 = arith.addf %75, %76 : vector<8x32xf32>
    %78 = math.tanh %77 : vector<8x32xf32>
    %79 = arith.mulf %74, %78 : vector<8x32xf32>
    %c2_i32 = arith.constant 2 : i32
    %80 = arith.index_cast %c2_i32 : i32 to index
    %c0_29 = arith.constant 0 : index
    %c0_30 = arith.constant 0 : index
    %81 = vector.load %arg10[%80, %c0_29, %c0_30] : memref<8x8x128xf32, #tpu.memory_space<vmem>>, vector<1x8x128xf32>
    %82 = vector.shape_cast %81 : vector<1x8x128xf32> to vector<8x128xf32>
    %83 = arith.truncf %79 : vector<8x32xf32> to vector<8x32xbf16>
    %cst_31 = arith.constant dense<0.000000e+00> : vector<8x128xf32>
    %84 = tpu.matmul %83, %16, %cst_31 {dimension_numbers = #tpu.dot_dimension_numbers<[1], [0], [0], [1], [0, 0, 1, 1], [], []>} : vector<8x32xbf16>, vector<32x128xbf16>, vector<8x128xf32> -> vector<8x128xf32>
    %85 = arith.addf %82, %84 : vector<8x128xf32>
    %86 = vector.extract_strided_slice %85 {offsets = [0, 0], sizes = [8, 32], strides = [1, 1]} : vector<8x128xf32> to vector<8x32xf32>
    %87 = arith.negf %86 : vector<8x32xf32>
    %88 = math.exp %87 : vector<8x32xf32>
    %cst_32 = arith.constant 1.000000e+00 : f32
    %89 = vector.broadcast %cst_32 : f32 to vector<8x32xf32>
    %90 = arith.addf %89, %88 : vector<8x32xf32>
    %91 = arith.divf %89, %90 : vector<8x32xf32>
    %92 = vector.extract_strided_slice %85 {offsets = [0, 32], sizes = [8, 32], strides = [1, 1]} : vector<8x128xf32> to vector<8x32xf32>
    %93 = arith.negf %92 : vector<8x32xf32>
    %94 = math.exp %93 : vector<8x32xf32>
    %cst_33 = arith.constant 1.000000e+00 : f32
    %95 = vector.broadcast %cst_33 : f32 to vector<8x32xf32>
    %96 = arith.addf %95, %94 : vector<8x32xf32>
    %97 = arith.divf %95, %96 : vector<8x32xf32>
    %98 = vector.extract_strided_slice %85 {offsets = [0, 64], sizes = [8, 32], strides = [1, 1]} : vector<8x128xf32> to vector<8x32xf32>
    %99 = math.tanh %98 : vector<8x32xf32>
    %100 = vector.extract_strided_slice %85 {offsets = [0, 96], sizes = [8, 32], strides = [1, 1]} : vector<8x128xf32> to vector<8x32xf32>
    %101 = arith.negf %100 : vector<8x32xf32>
    %102 = math.exp %101 : vector<8x32xf32>
    %cst_34 = arith.constant 1.000000e+00 : f32
    %103 = vector.broadcast %cst_34 : f32 to vector<8x32xf32>
    %104 = arith.addf %103, %102 : vector<8x32xf32>
    %105 = arith.divf %103, %104 : vector<8x32xf32>
    %106 = arith.mulf %97, %77 : vector<8x32xf32>
    %107 = arith.mulf %91, %99 : vector<8x32xf32>
    %108 = arith.addf %106, %107 : vector<8x32xf32>
    %109 = math.tanh %108 : vector<8x32xf32>
    %110 = arith.mulf %105, %109 : vector<8x32xf32>
    %c3_i32 = arith.constant 3 : i32
    %111 = arith.index_cast %c3_i32 : i32 to index
    %c0_35 = arith.constant 0 : index
    %c0_36 = arith.constant 0 : index
    %112 = vector.load %arg10[%111, %c0_35, %c0_36] : memref<8x8x128xf32, #tpu.memory_space<vmem>>, vector<1x8x128xf32>
    %113 = vector.shape_cast %112 : vector<1x8x128xf32> to vector<8x128xf32>
    %114 = arith.truncf %110 : vector<8x32xf32> to vector<8x32xbf16>
    %cst_37 = arith.constant dense<0.000000e+00> : vector<8x128xf32>
    %115 = tpu.matmul %114, %16, %cst_37 {dimension_numbers = #tpu.dot_dimension_numbers<[1], [0], [0], [1], [0, 0, 1, 1], [], []>} : vector<8x32xbf16>, vector<32x128xbf16>, vector<8x128xf32> -> vector<8x128xf32>
    %116 = arith.addf %113, %115 : vector<8x128xf32>
    %117 = vector.extract_strided_slice %116 {offsets = [0, 0], sizes = [8, 32], strides = [1, 1]} : vector<8x128xf32> to vector<8x32xf32>
    %118 = arith.negf %117 : vector<8x32xf32>
    %119 = math.exp %118 : vector<8x32xf32>
    %cst_38 = arith.constant 1.000000e+00 : f32
    %120 = vector.broadcast %cst_38 : f32 to vector<8x32xf32>
    %121 = arith.addf %120, %119 : vector<8x32xf32>
    %122 = arith.divf %120, %121 : vector<8x32xf32>
    %123 = vector.extract_strided_slice %116 {offsets = [0, 32], sizes = [8, 32], strides = [1, 1]} : vector<8x128xf32> to vector<8x32xf32>
    %124 = arith.negf %123 : vector<8x32xf32>
    %125 = math.exp %124 : vector<8x32xf32>
    %cst_39 = arith.constant 1.000000e+00 : f32
    %126 = vector.broadcast %cst_39 : f32 to vector<8x32xf32>
    %127 = arith.addf %126, %125 : vector<8x32xf32>
    %128 = arith.divf %126, %127 : vector<8x32xf32>
    %129 = vector.extract_strided_slice %116 {offsets = [0, 64], sizes = [8, 32], strides = [1, 1]} : vector<8x128xf32> to vector<8x32xf32>
    %130 = math.tanh %129 : vector<8x32xf32>
    %131 = vector.extract_strided_slice %116 {offsets = [0, 96], sizes = [8, 32], strides = [1, 1]} : vector<8x128xf32> to vector<8x32xf32>
    %132 = arith.negf %131 : vector<8x32xf32>
    %133 = math.exp %132 : vector<8x32xf32>
    %cst_40 = arith.constant 1.000000e+00 : f32
    %134 = vector.broadcast %cst_40 : f32 to vector<8x32xf32>
    %135 = arith.addf %134, %133 : vector<8x32xf32>
    %136 = arith.divf %134, %135 : vector<8x32xf32>
    %137 = arith.mulf %128, %108 : vector<8x32xf32>
    %138 = arith.mulf %122, %130 : vector<8x32xf32>
    %139 = arith.addf %137, %138 : vector<8x32xf32>
    %140 = math.tanh %139 : vector<8x32xf32>
    %141 = arith.mulf %136, %140 : vector<8x32xf32>
    %c4_i32 = arith.constant 4 : i32
    %142 = arith.index_cast %c4_i32 : i32 to index
    %c0_41 = arith.constant 0 : index
    %c0_42 = arith.constant 0 : index
    %143 = vector.load %arg10[%142, %c0_41, %c0_42] : memref<8x8x128xf32, #tpu.memory_space<vmem>>, vector<1x8x128xf32>
    %144 = vector.shape_cast %143 : vector<1x8x128xf32> to vector<8x128xf32>
    %145 = arith.truncf %141 : vector<8x32xf32> to vector<8x32xbf16>
    %cst_43 = arith.constant dense<0.000000e+00> : vector<8x128xf32>
    %146 = tpu.matmul %145, %16, %cst_43 {dimension_numbers = #tpu.dot_dimension_numbers<[1], [0], [0], [1], [0, 0, 1, 1], [], []>} : vector<8x32xbf16>, vector<32x128xbf16>, vector<8x128xf32> -> vector<8x128xf32>
    %147 = arith.addf %144, %146 : vector<8x128xf32>
    %148 = vector.extract_strided_slice %147 {offsets = [0, 0], sizes = [8, 32], strides = [1, 1]} : vector<8x128xf32> to vector<8x32xf32>
    %149 = arith.negf %148 : vector<8x32xf32>
    %150 = math.exp %149 : vector<8x32xf32>
    %cst_44 = arith.constant 1.000000e+00 : f32
    %151 = vector.broadcast %cst_44 : f32 to vector<8x32xf32>
    %152 = arith.addf %151, %150 : vector<8x32xf32>
    %153 = arith.divf %151, %152 : vector<8x32xf32>
    %154 = vector.extract_strided_slice %147 {offsets = [0, 32], sizes = [8, 32], strides = [1, 1]} : vector<8x128xf32> to vector<8x32xf32>
    %155 = arith.negf %154 : vector<8x32xf32>
    %156 = math.exp %155 : vector<8x32xf32>
    %cst_45 = arith.constant 1.000000e+00 : f32
    %157 = vector.broadcast %cst_45 : f32 to vector<8x32xf32>
    %158 = arith.addf %157, %156 : vector<8x32xf32>
    %159 = arith.divf %157, %158 : vector<8x32xf32>
    %160 = vector.extract_strided_slice %147 {offsets = [0, 64], sizes = [8, 32], strides = [1, 1]} : vector<8x128xf32> to vector<8x32xf32>
    %161 = math.tanh %160 : vector<8x32xf32>
    %162 = vector.extract_strided_slice %147 {offsets = [0, 96], sizes = [8, 32], strides = [1, 1]} : vector<8x128xf32> to vector<8x32xf32>
    %163 = arith.negf %162 : vector<8x32xf32>
    %164 = math.exp %163 : vector<8x32xf32>
    %cst_46 = arith.constant 1.000000e+00 : f32
    %165 = vector.broadcast %cst_46 : f32 to vector<8x32xf32>
    %166 = arith.addf %165, %164 : vector<8x32xf32>
    %167 = arith.divf %165, %166 : vector<8x32xf32>
    %168 = arith.mulf %159, %139 : vector<8x32xf32>
    %169 = arith.mulf %153, %161 : vector<8x32xf32>
    %170 = arith.addf %168, %169 : vector<8x32xf32>
    %171 = math.tanh %170 : vector<8x32xf32>
    %172 = arith.mulf %167, %171 : vector<8x32xf32>
    %c5_i32 = arith.constant 5 : i32
    %173 = arith.index_cast %c5_i32 : i32 to index
    %c0_47 = arith.constant 0 : index
    %c0_48 = arith.constant 0 : index
    %174 = vector.load %arg10[%173, %c0_47, %c0_48] : memref<8x8x128xf32, #tpu.memory_space<vmem>>, vector<1x8x128xf32>
    %175 = vector.shape_cast %174 : vector<1x8x128xf32> to vector<8x128xf32>
    %176 = arith.truncf %172 : vector<8x32xf32> to vector<8x32xbf16>
    %cst_49 = arith.constant dense<0.000000e+00> : vector<8x128xf32>
    %177 = tpu.matmul %176, %16, %cst_49 {dimension_numbers = #tpu.dot_dimension_numbers<[1], [0], [0], [1], [0, 0, 1, 1], [], []>} : vector<8x32xbf16>, vector<32x128xbf16>, vector<8x128xf32> -> vector<8x128xf32>
    %178 = arith.addf %175, %177 : vector<8x128xf32>
    %179 = vector.extract_strided_slice %178 {offsets = [0, 0], sizes = [8, 32], strides = [1, 1]} : vector<8x128xf32> to vector<8x32xf32>
    %180 = arith.negf %179 : vector<8x32xf32>
    %181 = math.exp %180 : vector<8x32xf32>
    %cst_50 = arith.constant 1.000000e+00 : f32
    %182 = vector.broadcast %cst_50 : f32 to vector<8x32xf32>
    %183 = arith.addf %182, %181 : vector<8x32xf32>
    %184 = arith.divf %182, %183 : vector<8x32xf32>
    %185 = vector.extract_strided_slice %178 {offsets = [0, 32], sizes = [8, 32], strides = [1, 1]} : vector<8x128xf32> to vector<8x32xf32>
    %186 = arith.negf %185 : vector<8x32xf32>
    %187 = math.exp %186 : vector<8x32xf32>
    %cst_51 = arith.constant 1.000000e+00 : f32
    %188 = vector.broadcast %cst_51 : f32 to vector<8x32xf32>
    %189 = arith.addf %188, %187 : vector<8x32xf32>
    %190 = arith.divf %188, %189 : vector<8x32xf32>
    %191 = vector.extract_strided_slice %178 {offsets = [0, 64], sizes = [8, 32], strides = [1, 1]} : vector<8x128xf32> to vector<8x32xf32>
    %192 = math.tanh %191 : vector<8x32xf32>
    %193 = vector.extract_strided_slice %178 {offsets = [0, 96], sizes = [8, 32], strides = [1, 1]} : vector<8x128xf32> to vector<8x32xf32>
    %194 = arith.negf %193 : vector<8x32xf32>
    %195 = math.exp %194 : vector<8x32xf32>
    %cst_52 = arith.constant 1.000000e+00 : f32
    %196 = vector.broadcast %cst_52 : f32 to vector<8x32xf32>
    %197 = arith.addf %196, %195 : vector<8x32xf32>
    %198 = arith.divf %196, %197 : vector<8x32xf32>
    %199 = arith.mulf %190, %170 : vector<8x32xf32>
    %200 = arith.mulf %184, %192 : vector<8x32xf32>
    %201 = arith.addf %199, %200 : vector<8x32xf32>
    %202 = math.tanh %201 : vector<8x32xf32>
    %203 = arith.mulf %198, %202 : vector<8x32xf32>
    %c6_i32 = arith.constant 6 : i32
    %204 = arith.index_cast %c6_i32 : i32 to index
    %c0_53 = arith.constant 0 : index
    %c0_54 = arith.constant 0 : index
    %205 = vector.load %arg10[%204, %c0_53, %c0_54] : memref<8x8x128xf32, #tpu.memory_space<vmem>>, vector<1x8x128xf32>
    %206 = vector.shape_cast %205 : vector<1x8x128xf32> to vector<8x128xf32>
    %207 = arith.truncf %203 : vector<8x32xf32> to vector<8x32xbf16>
    %cst_55 = arith.constant dense<0.000000e+00> : vector<8x128xf32>
    %208 = tpu.matmul %207, %16, %cst_55 {dimension_numbers = #tpu.dot_dimension_numbers<[1], [0], [0], [1], [0, 0, 1, 1], [], []>} : vector<8x32xbf16>, vector<32x128xbf16>, vector<8x128xf32> -> vector<8x128xf32>
    %209 = arith.addf %206, %208 : vector<8x128xf32>
    %210 = vector.extract_strided_slice %209 {offsets = [0, 0], sizes = [8, 32], strides = [1, 1]} : vector<8x128xf32> to vector<8x32xf32>
    %211 = arith.negf %210 : vector<8x32xf32>
    %212 = math.exp %211 : vector<8x32xf32>
    %cst_56 = arith.constant 1.000000e+00 : f32
    %213 = vector.broadcast %cst_56 : f32 to vector<8x32xf32>
    %214 = arith.addf %213, %212 : vector<8x32xf32>
    %215 = arith.divf %213, %214 : vector<8x32xf32>
    %216 = vector.extract_strided_slice %209 {offsets = [0, 32], sizes = [8, 32], strides = [1, 1]} : vector<8x128xf32> to vector<8x32xf32>
    %217 = arith.negf %216 : vector<8x32xf32>
    %218 = math.exp %217 : vector<8x32xf32>
    %cst_57 = arith.constant 1.000000e+00 : f32
    %219 = vector.broadcast %cst_57 : f32 to vector<8x32xf32>
    %220 = arith.addf %219, %218 : vector<8x32xf32>
    %221 = arith.divf %219, %220 : vector<8x32xf32>
    %222 = vector.extract_strided_slice %209 {offsets = [0, 64], sizes = [8, 32], strides = [1, 1]} : vector<8x128xf32> to vector<8x32xf32>
    %223 = math.tanh %222 : vector<8x32xf32>
    %224 = vector.extract_strided_slice %209 {offsets = [0, 96], sizes = [8, 32], strides = [1, 1]} : vector<8x128xf32> to vector<8x32xf32>
    %225 = arith.negf %224 : vector<8x32xf32>
    %226 = math.exp %225 : vector<8x32xf32>
    %cst_58 = arith.constant 1.000000e+00 : f32
    %227 = vector.broadcast %cst_58 : f32 to vector<8x32xf32>
    %228 = arith.addf %227, %226 : vector<8x32xf32>
    %229 = arith.divf %227, %228 : vector<8x32xf32>
    %230 = arith.mulf %221, %201 : vector<8x32xf32>
    %231 = arith.mulf %215, %223 : vector<8x32xf32>
    %232 = arith.addf %230, %231 : vector<8x32xf32>
    %233 = math.tanh %232 : vector<8x32xf32>
    %234 = arith.mulf %229, %233 : vector<8x32xf32>
    %c7_i32 = arith.constant 7 : i32
    %235 = arith.index_cast %c7_i32 : i32 to index
    %c0_59 = arith.constant 0 : index
    %c0_60 = arith.constant 0 : index
    %236 = vector.load %arg10[%235, %c0_59, %c0_60] : memref<8x8x128xf32, #tpu.memory_space<vmem>>, vector<1x8x128xf32>
    %237 = vector.shape_cast %236 : vector<1x8x128xf32> to vector<8x128xf32>
    %238 = arith.truncf %234 : vector<8x32xf32> to vector<8x32xbf16>
    %cst_61 = arith.constant dense<0.000000e+00> : vector<8x128xf32>
    %239 = tpu.matmul %238, %16, %cst_61 {dimension_numbers = #tpu.dot_dimension_numbers<[1], [0], [0], [1], [0, 0, 1, 1], [], []>} : vector<8x32xbf16>, vector<32x128xbf16>, vector<8x128xf32> -> vector<8x128xf32>
    %240 = arith.addf %237, %239 : vector<8x128xf32>
    %241 = vector.extract_strided_slice %240 {offsets = [0, 0], sizes = [8, 32], strides = [1, 1]} : vector<8x128xf32> to vector<8x32xf32>
    %242 = arith.negf %241 : vector<8x32xf32>
    %243 = math.exp %242 : vector<8x32xf32>
    %cst_62 = arith.constant 1.000000e+00 : f32
    %244 = vector.broadcast %cst_62 : f32 to vector<8x32xf32>
    %245 = arith.addf %244, %243 : vector<8x32xf32>
    %246 = arith.divf %244, %245 : vector<8x32xf32>
    %247 = vector.extract_strided_slice %240 {offsets = [0, 32], sizes = [8, 32], strides = [1, 1]} : vector<8x128xf32> to vector<8x32xf32>
    %248 = arith.negf %247 : vector<8x32xf32>
    %249 = math.exp %248 : vector<8x32xf32>
    %cst_63 = arith.constant 1.000000e+00 : f32
    %250 = vector.broadcast %cst_63 : f32 to vector<8x32xf32>
    %251 = arith.addf %250, %249 : vector<8x32xf32>
    %252 = arith.divf %250, %251 : vector<8x32xf32>
    %253 = vector.extract_strided_slice %240 {offsets = [0, 64], sizes = [8, 32], strides = [1, 1]} : vector<8x128xf32> to vector<8x32xf32>
    %254 = math.tanh %253 : vector<8x32xf32>
    %255 = vector.extract_strided_slice %240 {offsets = [0, 96], sizes = [8, 32], strides = [1, 1]} : vector<8x128xf32> to vector<8x32xf32>
    %256 = arith.negf %255 : vector<8x32xf32>
    %257 = math.exp %256 : vector<8x32xf32>
    %cst_64 = arith.constant 1.000000e+00 : f32
    %258 = vector.broadcast %cst_64 : f32 to vector<8x32xf32>
    %259 = arith.addf %258, %257 : vector<8x32xf32>
    %260 = arith.divf %258, %259 : vector<8x32xf32>
    %261 = arith.mulf %252, %232 : vector<8x32xf32>
    %262 = arith.mulf %246, %254 : vector<8x32xf32>
    %263 = arith.addf %261, %262 : vector<8x32xf32>
    %264 = math.tanh %263 : vector<8x32xf32>
    %265 = arith.mulf %260, %264 : vector<8x32xf32>
    %c8_i32 = arith.constant 8 : i32
    %266 = vector.extract_strided_slice %15 {offsets = [0, 0], sizes = [8, 32], strides = [1, 1]} : vector<8x128xf32> to vector<8x32xf32>
    %267 = arith.negf %266 : vector<8x32xf32>
    %268 = math.exp %267 : vector<8x32xf32>
    %cst_65 = arith.constant 1.000000e+00 : f32
    %269 = vector.broadcast %cst_65 : f32 to vector<8x32xf32>
    %270 = arith.addf %269, %268 : vector<8x32xf32>
    %271 = arith.divf %269, %270 : vector<8x32xf32>
    %272 = vector.extract_strided_slice %15 {offsets = [0, 64], sizes = [8, 32], strides = [1, 1]} : vector<8x128xf32> to vector<8x32xf32>
    %273 = math.tanh %272 : vector<8x32xf32>
    %274 = vector.extract_strided_slice %15 {offsets = [0, 96], sizes = [8, 32], strides = [1, 1]} : vector<8x128xf32> to vector<8x32xf32>
    %275 = arith.negf %274 : vector<8x32xf32>
    %276 = math.exp %275 : vector<8x32xf32>
    %cst_66 = arith.constant 1.000000e+00 : f32
    %277 = vector.broadcast %cst_66 : f32 to vector<8x32xf32>
    %278 = arith.addf %277, %276 : vector<8x32xf32>
    %279 = arith.divf %277, %278 : vector<8x32xf32>
    %280 = arith.mulf %271, %273 : vector<8x32xf32>
    %281 = math.tanh %280 : vector<8x32xf32>
    %282 = arith.mulf %279, %281 : vector<8x32xf32>
    %283 = tpu.concatenate %265, %282 in 1 : vector<8x32xf32>, vector<8x32xf32> -> vector<8x64xf32>
    %284 = arith.truncf %283 : vector<8x64xf32> to vector<8x64xbf16>
    %c0_67 = arith.constant 0 : index
    %c0_68 = arith.constant 0 : index
    %285 = vector.load %arg7[%c0_67, %c0_68] : memref<64x4xbf16, #tpu.memory_space<vmem>>, vector<64x4xbf16>
    %cst_69 = arith.constant dense<0.000000e+00> : vector<8x4xf32>
    %286 = tpu.matmul %284, %285, %cst_69 {dimension_numbers = #tpu.dot_dimension_numbers<[1], [0], [0], [1], [0, 0, 1, 1], [], []>} : vector<8x64xbf16>, vector<64x4xbf16>, vector<8x4xf32> -> vector<8x4xf32>
    %c0_70 = arith.constant 0 : index
    %c0_71 = arith.constant 0 : index
    %287 = vector.load %arg8[%c0_70, %c0_71] : memref<1x4xf32, #tpu.memory_space<vmem>>, vector<1x4xf32>
    %288 = vector.broadcast %287 : vector<1x4xf32> to vector<8x4xf32>
    %289 = arith.addf %286, %288 : vector<8x4xf32>
    %c0_72 = arith.constant 0 : index
    %c0_73 = arith.constant 0 : index
    %290 = vector.load %arg9[%c0_72, %c0_73] : memref<8x4xf32, #tpu.memory_space<vmem>>, vector<8x4xf32>
    tpu.vector_store %arg9[%c0_72, %c0_73], %289 {strides = array<i32>} : memref<8x4xf32, #tpu.memory_space<vmem>>, vector<8x4xf32>,
    return
  }
  func.func @transform_0(%arg0: i32) -> (i32, i32, i32) {
    %c0_i32 = arith.constant 0 : i32
    %c0_i32_0 = arith.constant 0 : i32
    %c0_i32_1 = arith.constant 0 : i32
    return %c0_i32, %arg0, %c0_i32_0 : i32, i32, i32
  }
  func.func @transform_1(%arg0: i32) -> (i32, i32) {
    %c0_i32 = arith.constant 0 : i32
    %c0_i32_0 = arith.constant 0 : i32
    %c0_i32_1 = arith.constant 0 : i32
    return %c0_i32, %c0_i32_0 : i32, i32
  }
  func.func @transform_2(%arg0: i32) -> (i32, i32) {
    %c0_i32 = arith.constant 0 : i32
    %c0_i32_0 = arith.constant 0 : i32
    %c0_i32_1 = arith.constant 0 : i32
    return %c0_i32, %c0_i32_0 : i32, i32
  }
  func.func @transform_3(%arg0: i32) -> (i32, i32) {
    %c0_i32 = arith.constant 0 : i32
    %c0_i32_0 = arith.constant 0 : i32
    %c0_i32_1 = arith.constant 0 : i32
    return %c0_i32, %c0_i32_0 : i32, i32
  }
  func.func @transform_4(%arg0: i32) -> (i32, i32) {
    %c0_i32 = arith.constant 0 : i32
    %c0_i32_0 = arith.constant 0 : i32
    %c0_i32_1 = arith.constant 0 : i32
    return %c0_i32, %c0_i32_0 : i32, i32
  }
  func.func @transform_5(%arg0: i32) -> (i32, i32) {
    %c0_i32 = arith.constant 0 : i32
    %c0_i32_0 = arith.constant 0 : i32
    %c0_i32_1 = arith.constant 0 : i32
    return %c0_i32, %c0_i32_0 : i32, i32
  }
  func.func @transform_6(%arg0: i32) -> (i32, i32) {
    %c0_i32 = arith.constant 0 : i32
    %c0_i32_0 = arith.constant 0 : i32
    %c0_i32_1 = arith.constant 0 : i32
    return %c0_i32, %c0_i32_0 : i32, i32
  }
  func.func @transform_7(%arg0: i32) -> (i32, i32) {
    %c0_i32 = arith.constant 0 : i32
    %c0_i32_0 = arith.constant 0 : i32
    %c0_i32_1 = arith.constant 0 : i32
    return %c0_i32, %c0_i32_0 : i32, i32
  }
  func.func @transform_8(%arg0: i32) -> (i32, i32) {
    %c0_i32 = arith.constant 0 : i32
    %c0_i32_0 = arith.constant 0 : i32
    return %arg0, %c0_i32 : i32, i32
  }
}

</mosaic_0001>

<llo_original>
// kernel: sentence_classifier_forward.3
$region0: #{sentence_classifier_forward.3}
  #allocation0 [shape = 'u32[]', space=smem, size = 0x4, offset = 0x4, fixed_abs, tag = 'smem constant byte address 0x4 - core index']
  #allocation1 [shape = 'u32[144,128]{1,0:T(1,128)}', space=vmem, size = 0x12000, scoped, tag = 'internal scratch']
  #allocation2 [shape = 'f32[8,8,128]{2,1,0:T(8,128)}', space=vmem, size = 0x8000, scoped, tag = 'scratch operand']
  %s0 = inlined_call_operand.vmem [shape: bf16[8,8,64], index: 0, kind: input, shape index: {}]
  %s1 = inlined_call_operand.vmem [shape: bf16[64,128], index: 1, kind: input, shape index: {}]
  %s2 = inlined_call_operand.vmem [shape: bf16[32,128], index: 2, kind: input, shape index: {}]
  %s3 = inlined_call_operand.vmem [shape: f32[1,128], index: 3, kind: input, shape index: {}]
  %s4 = inlined_call_operand.vmem [shape: bf16[64,128], index: 4, kind: input, shape index: {}]
  %s5 = inlined_call_operand.vmem [shape: f32[1,128], index: 5, kind: input, shape index: {}]
  %s6 = inlined_call_operand.vmem [shape: bf16[64,4], index: 6, kind: input, shape index: {}]
  %s7 = inlined_call_operand.vmem [shape: f32[1,4], index: 7, kind: input, shape index: {}]
  %s8 = inlined_call_operand.vmem [shape: f32[8,4], index: 8, kind: output, shape index: {}]
  %s9 = sld [smem:[#allocation0]]
  $region42: #{sentence_classifier_forward.3} parent=0
    _
  %s11 = ssub.s32 1, %s9
  %s12 = scalar_select 0, %s11, %s9
  // Predicated region
  $region2: #{sentence_classifier_forward.3} parent=0 // pred_check
    _
  $region3: #{sentence_classifier_forward.3} parent=0 // pred_check_branch
    %14 = sbr.rel (0) target = $region5
  $region4: #{sentence_classifier_forward.3} parent=0 // pred_region
    _
  $region5: #{sentence_classifier_forward.3} parent=0 // pred_fallthru
    _
  // Predicated region
  $region6: #{sentence_classifier_forward.3} parent=0 // pred_check
    _
  $region7: #{sentence_classifier_forward.3} parent=0 // pred_check_branch
    %16 = sbr.rel (0) target = $region9
  $region8: #{sentence_classifier_forward.3} parent=0 // pred_region
    _
  $region9: #{sentence_classifier_forward.3} parent=0 // pred_fallthru
    _
  // Predicated region
  $region10: #{sentence_classifier_forward.3} parent=0 // pred_check
    _
  $region11: #{sentence_classifier_forward.3} parent=0 // pred_check_branch
    %18 = sbr.rel (0) target = $region13
  $region12: #{sentence_classifier_forward.3} parent=0 // pred_region
    _
  $region13: #{sentence_classifier_forward.3} parent=0 // pred_fallthru
    _
  // Predicated region
  $region14: #{sentence_classifier_forward.3} parent=0 // pred_check
    _
  $region15: #{sentence_classifier_forward.3} parent=0 // pred_check_branch
    %20 = sbr.rel (0) target = $region17
  $region16: #{sentence_classifier_forward.3} parent=0 // pred_region
    _
  $region17: #{sentence_classifier_forward.3} parent=0 // pred_fallthru
    _
  // Predicated region
  $region18: #{sentence_classifier_forward.3} parent=0 // pred_check
    _
  $region19: #{sentence_classifier_forward.3} parent=0 // pred_check_branch
    %22 = sbr.rel (0) target = $region21
  $region20: #{sentence_classifier_forward.3} parent=0 // pred_region
    _
  $region21: #{sentence_classifier_forward.3} parent=0 // pred_fallthru
    _
  // Predicated region
  $region22: #{sentence_classifier_forward.3} parent=0 // pred_check
    _
  $region23: #{sentence_classifier_forward.3} parent=0 // pred_check_branch
    %24 = sbr.rel (0) target = $region25
  $region24: #{sentence_classifier_forward.3} parent=0 // pred_region
    _
  $region25: #{sentence_classifier_forward.3} parent=0 // pred_fallthru
    _
  // Predicated region
  $region26: #{sentence_classifier_forward.3} parent=0 // pred_check
    _
  $region27: #{sentence_classifier_forward.3} parent=0 // pred_check_branch
    %26 = sbr.rel (0) target = $region29
  $region28: #{sentence_classifier_forward.3} parent=0 // pred_region
    _
  $region29: #{sentence_classifier_forward.3} parent=0 // pred_fallthru
    _
  // Predicated region
  $region30: #{sentence_classifier_forward.3} parent=0 // pred_check
    _
  $region31: #{sentence_classifier_forward.3} parent=0 // pred_check_branch
    %28 = sbr.rel (0) target = $region33
  $region32: #{sentence_classifier_forward.3} parent=0 // pred_region
    _
  $region33: #{sentence_classifier_forward.3} parent=0 // pred_fallthru
    _
  %v30 = vld [vmem:[%s0] sm:$0xf]
  %v31 = vld [vmem:[%s0 + $0x4] sm:$0xf]
  %v32 = vld [vmem:[%s0 + $0x8] sm:$0xf]
  %v33 = vld [vmem:[%s0 + $0xc] sm:$0xf]
  %v34 = vld [vmem:[%s0 + $0x10] sm:$0xf]
  %v35 = vld [vmem:[%s0 + $0x14] sm:$0xf]
  %v36 = vld [vmem:[%s0 + $0x18] sm:$0xf]
  %v37 = vld [vmem:[%s0 + $0x1c] sm:$0xf]
  %v38 = vld [vmem:[%s1] sm:$0xf]
  %v39 = vld [vmem:[%s1 + $0x4] sm:$0xf]
  %v40 = vld [vmem:[%s1 + $0x8] sm:$0xf]
  %v41 = vld [vmem:[%s1 + $0xc] sm:$0xf]
  %v42 = vld [vmem:[%s1 + $0x10] sm:$0xf]
  %v43 = vld [vmem:[%s1 + $0x14] sm:$0xf]
  %v44 = vld [vmem:[%s1 + $0x18] sm:$0xf]
  %v45 = vld [vmem:[%s1 + $0x1c] sm:$0xf]
  %v46 = vld [vmem:[%s3] sm:$0x1]
  %v48 = vlaneseq
  %v49 = vshrl.u32 %v48, 7
  %v50 = vsub.s32 0, %v49
  %v51 = vrot.slane %v46, %v50
  %v61 = vunpack.c.l.b16 %v30
  %v62 = vunpack.c.l.b16 %v31
  %v63 = vunpack.c.l.b16 %v32
  %v64 = vunpack.c.l.b16 %v33
  %v65 = vunpack.c.l.b16 %v34
  %v66 = vunpack.c.l.b16 %v35
  %v67 = vunpack.c.l.b16 %v36
  %v68 = vunpack.c.l.b16 %v37
  %v69 = vpack.c.b16 %v62, %v61
  %v70 = vpack.c.b16 %v64, %v63
  %v71 = vpack.c.b16 %v66, %v65
  %v72 = vpack.c.b16 %v68, %v67
  %v81 = vunpack.c.l.b16 %v38
  %v82 = vunpack.c.l.b16 %v39
  %v83 = vunpack.c.l.b16 %v40
  %v84 = vunpack.c.l.b16 %v41
  %v85 = vunpack.c.l.b16 %v42
  %v86 = vunpack.c.l.b16 %v43
  %v87 = vunpack.c.l.b16 %v44
  %v88 = vunpack.c.l.b16 %v45
  %v89 = vpack.c.b16 %v82, %v81
  %v90 = vpack.c.b16 %v84, %v83
  %v91 = vpack.c.b16 %v86, %v85
  %v92 = vpack.c.b16 %v88, %v87
  %vm97 = vcmask 523264
  %v99 = vsel %vm97, %v69, 0
  %v102 = vsel %vm97, %v70, 0
  %v105 = vsel %vm97, %v71, 0
  %v108 = vsel %vm97, %v72, 0
  %110 = vmatprep.subr.bf16.mxu0 0
  %111 = vmatpush1.bf16.msra.mxu0 %v89
  %112 = vmatprep.subr.bf16.mxu0 0
  %113 = vmatpush1.bf16.msra.mxu0 %v90
  %114 = vmatprep.subr.bf16.mxu0 0
  %115 = vmatpush1.bf16.msra.mxu0 %v91
  %116 = vmatprep.subr.bf16.mxu0 0
  %117 = vmatpush1.bf16.msra.mxu0 %v92
  %118 = vmatprep.subr.bf16.mxu0 0
  %119 = vmatpush1.bf16.msra.mxu0 0
  %120 = vmatprep.subr.bf16.mxu0 0
  %121 = vmatpush1.bf16.msra.mxu0 0
  %122 = vmatprep.subr.bf16.mxu0 0
  %123 = vmatpush1.bf16.msra.mxu0 0
  %124 = vmatprep.subr.bf16.mxu0 0
  %125 = vmatpush1.bf16.msra.mxu0 0
  %126 = vmatprep.subr.bf16.mxu0 0
  %127 = vmatpush1.bf16.msra.mxu0 0
  %128 = vmatprep.subr.bf16.mxu0 0
  %129 = vmatpush1.bf16.msra.mxu0 0
  %130 = vmatprep.subr.bf16.mxu0 0
  %131 = vmatpush1.bf16.msra.mxu0 0
  %132 = vmatprep.subr.bf16.mxu0 0
  %133 = vmatpush1.bf16.msra.mxu0 0
  %134 = vmatprep.subr.bf16.mxu0 0
  %135 = vmatpush1.bf16.msra.mxu0 0
  %136 = vmatprep.subr.bf16.mxu0 0
  %137 = vmatpush1.bf16.msra.mxu0 0
  %138 = vmatprep.subr.bf16.mxu0 0
  %139 = vmatpush1.bf16.msra.mxu0 0
  %140 = vmatprep.subr.bf16.mxu0 0
  %141 = vmatpush1.bf16.msra.mxu0 0
  %142 = vmatprep.mubr.bf16.mxu0 0
  %143 = vmatmul.mubr.bf16.gmra.mrb[0].mxu0 %v99
  %v144 = vpop.f32.mrb[0].mxu0
  %v145 = vadd.f32 %v51, %v144
  %v146 = vpop.f32.mrb[0].mxu0
  %v147 = vpop.f32.mrb[0].mxu0
  %v148 = vadd.f32 %v51, %v147
  %v149 = vpop.f32.mrb[0].mxu0
  %150 = vmatprep.mubr.bf16.mxu0 0
  %151 = vmatmul.mubr.bf16.gmra.mrb[0].mxu0 %v102
  %v152 = vpop.f32.mrb[0].mxu0
  %v153 = vadd.f32 %v51, %v152
  %v154 = vpop.f32.mrb[0].mxu0
  %v155 = vpop.f32.mrb[0].mxu0
  %v156 = vadd.f32 %v51, %v155
  %v157 = vpop.f32.mrb[0].mxu0
  %158 = vmatprep.mubr.bf16.mxu0 0
  %159 = vmatmul.mubr.bf16.gmra.mrb[0].mxu0 %v105
  %v160 = vpop.f32.mrb[0].mxu0
  %v161 = vadd.f32 %v51, %v160
  %v162 = vpop.f32.mrb[0].mxu0
  %v163 = vpop.f32.mrb[0].mxu0
  %v164 = vadd.f32 %v51, %v163
  %v165 = vpop.f32.mrb[0].mxu0
  %166 = vmatprep.mubr.bf16.mxu0 0
  %167 = vmatmul.mubr.bf16.gmra.mrb[0].mxu0 %v108
  %v168 = vpop.f32.mrb[0].mxu0
  %v169 = vadd.f32 %v51, %v168
  %v170 = vpop.f32.mrb[0].mxu0
  %v171 = vpop.f32.mrb[0].mxu0
  %v172 = vadd.f32 %v51, %v171
  %v173 = vpop.f32.mrb[0].mxu0
  %174 = vdwg.mxu0
  %175 = vst [vmem:[#allocation2] sm:$0xff] %v145
  %176 = vst [vmem:[#allocation2 + $0x8] sm:$0xff] %v148
  %177 = vst [vmem:[#allocation2 + $0x10] sm:$0xff] %v153
  %178 = vst [vmem:[#allocation2 + $0x18] sm:$0xff] %v156
  %179 = vst [vmem:[#allocation2 + $0x20] sm:$0xff] %v161
  %180 = vst [vmem:[#allocation2 + $0x28] sm:$0xff] %v164
  %181 = vst [vmem:[#allocation2 + $0x30] sm:$0xff] %v169
  %182 = vst [vmem:[#allocation2 + $0x38] sm:$0xff] %v172
  %v183 = vld [vmem:[%s4] sm:$0xf]
  %v184 = vld [vmem:[%s4 + $0x4] sm:$0xf]
  %v185 = vld [vmem:[%s4 + $0x8] sm:$0xf]
  %v186 = vld [vmem:[%s4 + $0xc] sm:$0xf]
  %v187 = vld [vmem:[%s4 + $0x10] sm:$0xf]
  %v188 = vld [vmem:[%s4 + $0x14] sm:$0xf]
  %v189 = vld [vmem:[%s4 + $0x18] sm:$0xf]
  %v190 = vld [vmem:[%s4 + $0x1c] sm:$0xf]
  %v191 = vld [vmem:[%s5] sm:$0x1]
  %v193 = vlaneseq
  %v194 = vshrl.u32 %v193, 7
  %v195 = vsub.s32 0, %v194
  %v196 = vrot.slane %v191, %v195
  %v206 = vunpack.c.l.b16 %v183
  %v207 = vunpack.c.l.b16 %v184
  %v208 = vunpack.c.l.b16 %v185
  %v209 = vunpack.c.l.b16 %v186
  %v210 = vunpack.c.l.b16 %v187
  %v211 = vunpack.c.l.b16 %v188
  %v212 = vunpack.c.l.b16 %v189
  %v213 = vunpack.c.l.b16 %v190
  %v214 = vpack.c.b16 %v207, %v206
  %v215 = vpack.c.b16 %v209, %v208
  %v216 = vpack.c.b16 %v211, %v210
  %v217 = vpack.c.b16 %v213, %v212
  %v223 = vsel %vm97, %v37, 0
  %225 = vmatprep.subr.bf16.mxu0 0
  %226 = vmatpush1.bf16.msra.mxu0 %v214
  %227 = vmatprep.subr.bf16.mxu0 0
  %228 = vmatpush1.bf16.msra.mxu0 %v215
  %229 = vmatprep.subr.bf16.mxu0 0
  %230 = vmatpush1.bf16.msra.mxu0 %v216
  %231 = vmatprep.subr.bf16.mxu0 0
  %232 = vmatpush1.bf16.msra.mxu0 %v217
  %233 = vmatprep.subr.bf16.mxu0 0
  %234 = vmatpush1.bf16.msra.mxu0 0
  %235 = vmatprep.subr.bf16.mxu0 0
  %236 = vmatpush1.bf16.msra.mxu0 0
  %237 = vmatprep.subr.bf16.mxu0 0
  %238 = vmatpush1.bf16.msra.mxu0 0
  %239 = vmatprep.subr.bf16.mxu0 0
  %240 = vmatpush1.bf16.msra.mxu0 0
  %241 = vmatprep.subr.bf16.mxu0 0
  %242 = vmatpush1.bf16.msra.mxu0 0
  %243 = vmatprep.subr.bf16.mxu0 0
  %244 = vmatpush1.bf16.msra.mxu0 0
  %245 = vmatprep.subr.bf16.mxu0 0
  %246 = vmatpush1.bf16.msra.mxu0 0
  %247 = vmatprep.subr.bf16.mxu0 0
  %248 = vmatpush1.bf16.msra.mxu0 0
  %249 = vmatprep.subr.bf16.mxu0 0
  %250 = vmatpush1.bf16.msra.mxu0 0
  %251 = vmatprep.subr.bf16.mxu0 0
  %252 = vmatpush1.bf16.msra.mxu0 0
  %253 = vmatprep.subr.bf16.mxu0 0
  %254 = vmatpush1.bf16.msra.mxu0 0
  %255 = vmatprep.subr.bf16.mxu0 0
  %256 = vmatpush1.bf16.msra.mxu0 0
  %257 = vmatprep.mubr.bf16.mxu0 0
  %258 = vmatmul.mubr.bf16.gmra.mrb[0].mxu0 %v223
  %v259 = vpop.f32.mrb[0].mxu0
  %v260 = vadd.f32 %v196, %v259
  %v261 = vpop.f32.mrb[0].mxu0
  %v262 = vpop.f32.mrb[0].mxu0
  %v263 = vpop.f32.mrb[0].mxu0
  %264 = vdwg.mxu0
  %v265 = vld [vmem:[%s2] sm:$0xf]
  %v266 = vld [vmem:[%s2 + $0x4] sm:$0xf]
  %v267 = vld [vmem:[%s2 + $0x8] sm:$0xf]
  %v268 = vld [vmem:[%s2 + $0xc] sm:$0xf]
  %v269 = vld [vmem:[#allocation2] sm:$0xff]
  %v274 = vunpack.c.l.b16 %v265
  %v275 = vunpack.c.l.b16 %v266
  %v276 = vunpack.c.l.b16 %v267
  %v277 = vunpack.c.l.b16 %v268
  %v278 = vpack.c.b16 %v275, %v274
  %v279 = vpack.c.b16 %v277, %v276
  %vm282 = vcmask 261120
  %v284 = vsel %vm282, 0, 0
  %286 = vmatprep.subr.bf16.mxu0 0
  %287 = vmatpush1.bf16.msra.mxu0 %v278
  %288 = vmatprep.subr.bf16.mxu0 0
  %289 = vmatpush1.bf16.msra.mxu0 %v279
  %290 = vmatprep.subr.bf16.mxu0 0
  %291 = vmatpush1.bf16.msra.mxu0 0
  %292 = vmatprep.subr.bf16.mxu0 0
  %293 = vmatpush1.bf16.msra.mxu0 0
  %294 = vmatprep.subr.bf16.mxu0 0
  %295 = vmatpush1.bf16.msra.mxu0 0
  %296 = vmatprep.subr.bf16.mxu0 0
  %297 = vmatpush1.bf16.msra.mxu0 0
  %298 = vmatprep.subr.bf16.mxu0 0
  %299 = vmatpush1.bf16.msra.mxu0 0
  %300 = vmatprep.subr.bf16.mxu0 0
  %301 = vmatpush1.bf16.msra.mxu0 0
  %302 = vmatprep.subr.bf16.mxu0 0
  %303 = vmatpush1.bf16.msra.mxu0 0
  %304 = vmatprep.subr.bf16.mxu0 0
  %305 = vmatpush1.bf16.msra.mxu0 0
  %306 = vmatprep.subr.bf16.mxu0 0
  %307 = vmatpush1.bf16.msra.mxu0 0
  %308 = vmatprep.subr.bf16.mxu0 0
  %309 = vmatpush1.bf16.msra.mxu0 0
  %310 = vmatprep.subr.bf16.mxu0 0
  %311 = vmatpush1.bf16.msra.mxu0 0
  %312 = vmatprep.subr.bf16.mxu0 0
  %313 = vmatpush1.bf16.msra.mxu0 0
  %314 = vmatprep.subr.bf16.mxu0 0
  %315 = vmatpush1.bf16.msra.mxu0 0
  %316 = vmatprep.subr.bf16.mxu0 0
  %317 = vmatpush1.bf16.msra.mxu0 0
  %318 = vmatprep.mubr.bf16.mxu0 0
  %319 = vmatmul.mubr.bf16.gmra.mrb[0].mxu0 %v284
  %v320 = vpop.f32.mrb[0].mxu0
  %v321 = vadd.f32 0.0, %v320
  %v322 = vpop.f32.mrb[0].mxu0
  %v323 = vpop.f32.mrb[0].mxu0
  %v324 = vpop.f32.mrb[0].mxu0
  %325 = vdwg.mxu0
  %v326 = vadd.f32 %v269, %v321
  %v327 = vxor.u32 %v326, 2147483648
  %v328 = vmul.f32 %v327, 1.442695
  %v329 = vpow.pop %v328
  %v330 = vadd.f32 %v329, 1.0
  %v331 = vrcp.pop %v330
  %v332 = vmul.f32 1.0, %v331
  %v333 = vtanh.pop %v326
  %v334 = vmul.f32 %v332, 0.0
  %336 = vrot.lane.b32.xlu0 %v333, 64
  %v337 = vpop.permute.xlu0 %336
  %v339 = vmul.f32 %v332, %v337
  %341 = vrot.lane.b32.xlu0 %v339, 32
  %v342 = vpop.permute.xlu0 %341
  %v344 = vadd.f32 %v334, %v342
  %v345 = vtanh.pop %v344
  %347 = vrot.lane.b32.xlu0 %v345, 64
  %v348 = vpop.permute.xlu0 %347
  %v350 = vmul.f32 %v332, %v348
  %s351 = scalar_lea.vmem [#allocation2], 8
  %v352 = vld [vmem:[%s351] sm:$0xff]
  %v353 = vpack.c.bf16 %v350, %v350
  %355 = vrot.lane.b32.xlu0 %v353, 32
  %v356 = vpop.permute.xlu0 %355
  %v358 = vsel %vm282, %v356, 0
  %360 = vmatprep.subr.bf16.mxu0 0
  %361 = vmatpush1.bf16.msra.mxu0 %v278
  %362 = vmatprep.subr.bf16.mxu0 0
  %363 = vmatpush1.bf16.msra.mxu0 %v279
  %364 = vmatprep.subr.bf16.mxu0 0
  %365 = vmatpush1.bf16.msra.mxu0 0
  %366 = vmatprep.subr.bf16.mxu0 0
  %367 = vmatpush1.bf16.msra.mxu0 0
  %368 = vmatprep.subr.bf16.mxu0 0
  %369 = vmatpush1.bf16.msra.mxu0 0
  %370 = vmatprep.subr.bf16.mxu0 0
  %371 = vmatpush1.bf16.msra.mxu0 0
  %372 = vmatprep.subr.bf16.mxu0 0
  %373 = vmatpush1.bf16.msra.mxu0 0
  %374 = vmatprep.subr.bf16.mxu0 0
  %375 = vmatpush1.bf16.msra.mxu0 0
  %376 = vmatprep.subr.bf16.mxu0 0
  %377 = vmatpush1.bf16.msra.mxu0 0
  %378 = vmatprep.subr.bf16.mxu0 0
  %379 = vmatpush1.bf16.msra.mxu0 0
  %380 = vmatprep.subr.bf16.mxu0 0
  %381 = vmatpush1.bf16.msra.mxu0 0
  %382 = vmatprep.subr.bf16.mxu0 0
  %383 = vmatpush1.bf16.msra.mxu0 0
  %384 = vmatprep.subr.bf16.mxu0 0
  %385 = vmatpush1.bf16.msra.mxu0 0
  %386 = vmatprep.subr.bf16.mxu0 0
  %387 = vmatpush1.bf16.msra.mxu0 0
  %388 = vmatprep.subr.bf16.mxu0 0
  %389 = vmatpush1.bf16.msra.mxu0 0
  %390 = vmatprep.subr.bf16.mxu0 0
  %391 = vmatpush1.bf16.msra.mxu0 0
  %392 = vmatprep.mubr.bf16.mxu0 0
  %393 = vmatmul.mubr.bf16.gmra.mrb[0].mxu0 %v358
  %v394 = vpop.f32.mrb[0].mxu0
  %v395 = vadd.f32 0.0, %v394
  %v396 = vpop.f32.mrb[0].mxu0
  %v397 = vpop.f32.mrb[0].mxu0
  %v398 = vpop.f32.mrb[0].mxu0
  %399 = vdwg.mxu0
  %v400 = vadd.f32 %v352, %v395
  %v401 = vxor.u32 %v400, 2147483648
  %v402 = vmul.f32 %v401, 1.442695
  %v403 = vpow.pop %v402
  %v404 = vadd.f32 %v403, 1.0
  %v405 = vrcp.pop %v404
  %v406 = vmul.f32 1.0, %v405
  %v407 = vtanh.pop %v400
  %v408 = vmul.f32 %v406, %v344
  %410 = vrot.lane.b32.xlu0 %v407, 64
  %v411 = vpop.permute.xlu0 %410
  %v413 = vmul.f32 %v406, %v411
  %415 = vrot.lane.b32.xlu0 %v413, 32
  %v416 = vpop.permute.xlu0 %415
  %v418 = vadd.f32 %v408, %v416
  %v419 = vtanh.pop %v418
  %421 = vrot.lane.b32.xlu0 %v419, 64
  %v422 = vpop.permute.xlu0 %421
  %v424 = vmul.f32 %v406, %v422
  %s425 = scalar_lea.vmem [#allocation2], 16
  %v426 = vld [vmem:[%s425] sm:$0xff]
  %v427 = vpack.c.bf16 %v424, %v424
  %429 = vrot.lane.b32.xlu0 %v427, 32
  %v430 = vpop.permute.xlu0 %429
  %v432 = vsel %vm282, %v430, 0
  %434 = vmatprep.subr.bf16.mxu0 0
  %435 = vmatpush1.bf16.msra.mxu0 %v278
  %436 = vmatprep.subr.bf16.mxu0 0
  %437 = vmatpush1.bf16.msra.mxu0 %v279
  %438 = vmatprep.subr.bf16.mxu0 0
  %439 = vmatpush1.bf16.msra.mxu0 0
  %440 = vmatprep.subr.bf16.mxu0 0
  %441 = vmatpush1.bf16.msra.mxu0 0
  %442 = vmatprep.subr.bf16.mxu0 0
  %443 = vmatpush1.bf16.msra.mxu0 0
  %444 = vmatprep.subr.bf16.mxu0 0
  %445 = vmatpush1.bf16.msra.mxu0 0
  %446 = vmatprep.subr.bf16.mxu0 0
  %447 = vmatpush1.bf16.msra.mxu0 0
  %448 = vmatprep.subr.bf16.mxu0 0
  %449 = vmatpush1.bf16.msra.mxu0 0
  %450 = vmatprep.subr.bf16.mxu0 0
  %451 = vmatpush1.bf16.msra.mxu0 0
  %452 = vmatprep.subr.bf16.mxu0 0
  %453 = vmatpush1.bf16.msra.mxu0 0
  %454 = vmatprep.subr.bf16.mxu0 0
  %455 = vmatpush1.bf16.msra.mxu0 0
  %456 = vmatprep.subr.bf16.mxu0 0
  %457 = vmatpush1.bf16.msra.mxu0 0
  %458 = vmatprep.subr.bf16.mxu0 0
  %459 = vmatpush1.bf16.msra.mxu0 0
  %460 = vmatprep.subr.bf16.mxu0 0
  %461 = vmatpush1.bf16.msra.mxu0 0
  %462 = vmatprep.subr.bf16.mxu0 0
  %463 = vmatpush1.bf16.msra.mxu0 0
  %464 = vmatprep.subr.bf16.mxu0 0
  %465 = vmatpush1.bf16.msra.mxu0 0
  %466 = vmatprep.mubr.bf16.mxu0 0
  %467 = vmatmul.mubr.bf16.gmra.mrb[0].mxu0 %v432
  %v468 = vpop.f32.mrb[0].mxu0
  %v469 = vadd.f32 0.0, %v468
  %v470 = vpop.f32.mrb[0].mxu0
  %v471 = vpop.f32.mrb[0].mxu0
  %v472 = vpop.f32.mrb[0].mxu0
  %473 = vdwg.mxu0
  %v474 = vadd.f32 %v426, %v469
  %v475 = vxor.u32 %v474, 2147483648
  %v476 = vmul.f32 %v475, 1.442695
  %v477 = vpow.pop %v476
  %v478 = vadd.f32 %v477, 1.0
  %v479 = vrcp.pop %v478
  %v480 = vmul.f32 1.0, %v479
  %v481 = vtanh.pop %v474
  %v482 = vmul.f32 %v480, %v418
  %484 = vrot.lane.b32.xlu0 %v481, 64
  %v485 = vpop.permute.xlu0 %484
  %v487 = vmul.f32 %v480, %v485
  %489 = vrot.lane.b32.xlu0 %v487, 32
  %v490 = vpop.permute.xlu0 %489
  %v492 = vadd.f32 %v482, %v490
  %v493 = vtanh.pop %v492
  %495 = vrot.lane.b32.xlu0 %v493, 64
  %v496 = vpop.permute.xlu0 %495
  %v498 = vmul.f32 %v480, %v496
  %s499 = scalar_lea.vmem [#allocation2], 24
  %v500 = vld [vmem:[%s499] sm:$0xff]
  %v501 = vpack.c.bf16 %v498, %v498
  %503 = vrot.lane.b32.xlu0 %v501, 32
  %v504 = vpop.permute.xlu0 %503
  %v506 = vsel %vm282, %v504, 0
  %508 = vmatprep.subr.bf16.mxu0 0
  %509 = vmatpush1.bf16.msra.mxu0 %v278
  %510 = vmatprep.subr.bf16.mxu0 0
  %511 = vmatpush1.bf16.msra.mxu0 %v279
  %512 = vmatprep.subr.bf16.mxu0 0
  %513 = vmatpush1.bf16.msra.mxu0 0
  %514 = vmatprep.subr.bf16.mxu0 0
  %515 = vmatpush1.bf16.msra.mxu0 0
  %516 = vmatprep.subr.bf16.mxu0 0
  %517 = vmatpush1.bf16.msra.mxu0 0
  %518 = vmatprep.subr.bf16.mxu0 0
  %519 = vmatpush1.bf16.msra.mxu0 0
  %520 = vmatprep.subr.bf16.mxu0 0
  %521 = vmatpush1.bf16.msra.mxu0 0
  %522 = vmatprep.subr.bf16.mxu0 0
  %523 = vmatpush1.bf16.msra.mxu0 0
  %524 = vmatprep.subr.bf16.mxu0 0
  %525 = vmatpush1.bf16.msra.mxu0 0
  %526 = vmatprep.subr.bf16.mxu0 0
  %527 = vmatpush1.bf16.msra.mxu0 0
  %528 = vmatprep.subr.bf16.mxu0 0
  %529 = vmatpush1.bf16.msra.mxu0 0
  %530 = vmatprep.subr.bf16.mxu0 0
  %531 = vmatpush1.bf16.msra.mxu0 0
  %532 = vmatprep.subr.bf16.mxu0 0
  %533 = vmatpush1.bf16.msra.mxu0 0
  %534 = vmatprep.subr.bf16.mxu0 0
  %535 = vmatpush1.bf16.msra.mxu0 0
  %536 = vmatprep.subr.bf16.mxu0 0
  %537 = vmatpush1.bf16.msra.mxu0 0
  %538 = vmatprep.subr.bf16.mxu0 0
  %539 = vmatpush1.bf16.msra.mxu0 0
  %540 = vmatprep.mubr.bf16.mxu0 0
  %541 = vmatmul.mubr.bf16.gmra.mrb[0].mxu0 %v506
  %v542 = vpop.f32.mrb[0].mxu0
  %v543 = vadd.f32 0.0, %v542
  %v544 = vpop.f32.mrb[0].mxu0
  %v545 = vpop.f32.mrb[0].mxu0
  %v546 = vpop.f32.mrb[0].mxu0
  %547 = vdwg.mxu0
  %v548 = vadd.f32 %v500, %v543
  %v549 = vxor.u32 %v548, 2147483648
  %v550 = vmul.f32 %v549, 1.442695
  %v551 = vpow.pop %v550
  %v552 = vadd.f32 %v551, 1.0
  %v553 = vrcp.pop %v552
  %v554 = vmul.f32 1.0, %v553
  %v555 = vtanh.pop %v548
  %v556 = vmul.f32 %v554, %v492
  %558 = vrot.lane.b32.xlu0 %v555, 64
  %v559 = vpop.permute.xlu0 %558
  %v561 = vmul.f32 %v554, %v559
  %563 = vrot.lane.b32.xlu0 %v561, 32
  %v564 = vpop.permute.xlu0 %563
  %v566 = vadd.f32 %v556, %v564
  %v567 = vtanh.pop %v566
  %569 = vrot.lane.b32.xlu0 %v567, 64
  %v570 = vpop.permute.xlu0 %569
  %v572 = vmul.f32 %v554, %v570
  %s573 = scalar_lea.vmem [#allocation2], 32
  %v574 = vld [vmem:[%s573] sm:$0xff]
  %v575 = vpack.c.bf16 %v572, %v572
  %577 = vrot.lane.b32.xlu0 %v575, 32
  %v578 = vpop.permute.xlu0 %577
  %v580 = vsel %vm282, %v578, 0
  %582 = vmatprep.subr.bf16.mxu0 0
  %583 = vmatpush1.bf16.msra.mxu0 %v278
  %584 = vmatprep.subr.bf16.mxu0 0
  %585 = vmatpush1.bf16.msra.mxu0 %v279
  %586 = vmatprep.subr.bf16.mxu0 0
  %587 = vmatpush1.bf16.msra.mxu0 0
  %588 = vmatprep.subr.bf16.mxu0 0
  %589 = vmatpush1.bf16.msra.mxu0 0
  %590 = vmatprep.subr.bf16.mxu0 0
  %591 = vmatpush1.bf16.msra.mxu0 0
  %592 = vmatprep.subr.bf16.mxu0 0
  %593 = vmatpush1.bf16.msra.mxu0 0
  %594 = vmatprep.subr.bf16.mxu0 0
  %595 = vmatpush1.bf16.msra.mxu0 0
  %596 = vmatprep.subr.bf16.mxu0 0
  %597 = vmatpush1.bf16.msra.mxu0 0
  %598 = vmatprep.subr.bf16.mxu0 0
  %599 = vmatpush1.bf16.msra.mxu0 0
  %600 = vmatprep.subr.bf16.mxu0 0
  %601 = vmatpush1.bf16.msra.mxu0 0
  %602 = vmatprep.subr.bf16.mxu0 0
  %603 = vmatpush1.bf16.msra.mxu0 0
  %604 = vmatprep.subr.bf16.mxu0 0
  %605 = vmatpush1.bf16.msra.mxu0 0
  %606 = vmatprep.subr.bf16.mxu0 0
  %607 = vmatpush1.bf16.msra.mxu0 0
  %608 = vmatprep.subr.bf16.mxu0 0
  %609 = vmatpush1.bf16.msra.mxu0 0
  %610 = vmatprep.subr.bf16.mxu0 0
  %611 = vmatpush1.bf16.msra.mxu0 0
  %612 = vmatprep.subr.bf16.mxu0 0
  %613 = vmatpush1.bf16.msra.mxu0 0
  %614 = vmatprep.mubr.bf16.mxu0 0
  %615 = vmatmul.mubr.bf16.gmra.mrb[0].mxu0 %v580
  %v616 = vpop.f32.mrb[0].mxu0
  %v617 = vadd.f32 0.0, %v616
  %v618 = vpop.f32.mrb[0].mxu0
  %v619 = vpop.f32.mrb[0].mxu0
  %v620 = vpop.f32.mrb[0].mxu0
  %621 = vdwg.mxu0
  %v622 = vadd.f32 %v574, %v617
  %v623 = vxor.u32 %v622, 2147483648
  %v624 = vmul.f32 %v623, 1.442695
  %v625 = vpow.pop %v624
  %v626 = vadd.f32 %v625, 1.0
  %v627 = vrcp.pop %v626
  %v628 = vmul.f32 1.0, %v627
  %v629 = vtanh.pop %v622
  %v630 = vmul.f32 %v628, %v566
  %632 = vrot.lane.b32.xlu0 %v629, 64
  %v633 = vpop.permute.xlu0 %632
  %v635 = vmul.f32 %v628, %v633
  %637 = vrot.lane.b32.xlu0 %v635, 32
  %v638 = vpop.permute.xlu0 %637
  %v640 = vadd.f32 %v630, %v638
  %v641 = vtanh.pop %v640
  %643 = vrot.lane.b32.xlu0 %v641, 64
  %v644 = vpop.permute.xlu0 %643
  %v646 = vmul.f32 %v628, %v644
  %s647 = scalar_lea.vmem [#allocation2], 40
  %v648 = vld [vmem:[%s647] sm:$0xff]
  %v649 = vpack.c.bf16 %v646, %v646
  %651 = vrot.lane.b32.xlu0 %v649, 32
  %v652 = vpop.permute.xlu0 %651
  %v654 = vsel %vm282, %v652, 0
  %656 = vmatprep.subr.bf16.mxu0 0
  %657 = vmatpush1.bf16.msra.mxu0 %v278
  %658 = vmatprep.subr.bf16.mxu0 0
  %659 = vmatpush1.bf16.msra.mxu0 %v279
  %660 = vmatprep.subr.bf16.mxu0 0
  %661 = vmatpush1.bf16.msra.mxu0 0
  %662 = vmatprep.subr.bf16.mxu0 0
  %663 = vmatpush1.bf16.msra.mxu0 0
  %664 = vmatprep.subr.bf16.mxu0 0
  %665 = vmatpush1.bf16.msra.mxu0 0
  %666 = vmatprep.subr.bf16.mxu0 0
  %667 = vmatpush1.bf16.msra.mxu0 0
  %668 = vmatprep.subr.bf16.mxu0 0
  %669 = vmatpush1.bf16.msra.mxu0 0
  %670 = vmatprep.subr.bf16.mxu0 0
  %671 = vmatpush1.bf16.msra.mxu0 0
  %672 = vmatprep.subr.bf16.mxu0 0
  %673 = vmatpush1.bf16.msra.mxu0 0
  %674 = vmatprep.subr.bf16.mxu0 0
  %675 = vmatpush1.bf16.msra.mxu0 0
  %676 = vmatprep.subr.bf16.mxu0 0
  %677 = vmatpush1.bf16.msra.mxu0 0
  %678 = vmatprep.subr.bf16.mxu0 0
  %679 = vmatpush1.bf16.msra.mxu0 0
  %680 = vmatprep.subr.bf16.mxu0 0
  %681 = vmatpush1.bf16.msra.mxu0 0
  %682 = vmatprep.subr.bf16.mxu0 0
  %683 = vmatpush1.bf16.msra.mxu0 0
  %684 = vmatprep.subr.bf16.mxu0 0
  %685 = vmatpush1.bf16.msra.mxu0 0
  %686 = vmatprep.subr.bf16.mxu0 0
  %687 = vmatpush1.bf16.msra.mxu0 0
  %688 = vmatprep.mubr.bf16.mxu0 0
  %689 = vmatmul.mubr.bf16.gmra.mrb[0].mxu0 %v654
  %v690 = vpop.f32.mrb[0].mxu0
  %v691 = vadd.f32 0.0, %v690
  %v692 = vpop.f32.mrb[0].mxu0
  %v693 = vpop.f32.mrb[0].mxu0
  %v694 = vpop.f32.mrb[0].mxu0
  %695 = vdwg.mxu0
  %v696 = vadd.f32 %v648, %v691
  %v697 = vxor.u32 %v696, 2147483648
  %v698 = vmul.f32 %v697, 1.442695
  %v699 = vpow.pop %v698
  %v700 = vadd.f32 %v699, 1.0
  %v701 = vrcp.pop %v700
  %v702 = vmul.f32 1.0, %v701
  %v703 = vtanh.pop %v696
  %v704 = vmul.f32 %v702, %v640
  %706 = vrot.lane.b32.xlu0 %v703, 64
  %v707 = vpop.permute.xlu0 %706
  %v709 = vmul.f32 %v702, %v707
  %711 = vrot.lane.b32.xlu0 %v709, 32
  %v712 = vpop.permute.xlu0 %711
  %v714 = vadd.f32 %v704, %v712
  %v715 = vtanh.pop %v714
  %717 = vrot.lane.b32.xlu0 %v715, 64
  %v718 = vpop.permute.xlu0 %717
  %v720 = vmul.f32 %v702, %v718
  %s721 = scalar_lea.vmem [#allocation2], 48
  %v722 = vld [vmem:[%s721] sm:$0xff]
  %v723 = vpack.c.bf16 %v720, %v720
  %725 = vrot.lane.b32.xlu0 %v723, 32
  %v726 = vpop.permute.xlu0 %725
  %v728 = vsel %vm282, %v726, 0
  %730 = vmatprep.subr.bf16.mxu0 0
  %731 = vmatpush1.bf16.msra.mxu0 %v278
  %732 = vmatprep.subr.bf16.mxu0 0
  %733 = vmatpush1.bf16.msra.mxu0 %v279
  %734 = vmatprep.subr.bf16.mxu0 0
  %735 = vmatpush1.bf16.msra.mxu0 0
  %736 = vmatprep.subr.bf16.mxu0 0
  %737 = vmatpush1.bf16.msra.mxu0 0
  %738 = vmatprep.subr.bf16.mxu0 0
  %739 = vmatpush1.bf16.msra.mxu0 0
  %740 = vmatprep.subr.bf16.mxu0 0
  %741 = vmatpush1.bf16.msra.mxu0 0
  %742 = vmatprep.subr.bf16.mxu0 0
  %743 = vmatpush1.bf16.msra.mxu0 0
  %744 = vmatprep.subr.bf16.mxu0 0
  %745 = vmatpush1.bf16.msra.mxu0 0
  %746 = vmatprep.subr.bf16.mxu0 0
  %747 = vmatpush1.bf16.msra.mxu0 0
  %748 = vmatprep.subr.bf16.mxu0 0
  %749 = vmatpush1.bf16.msra.mxu0 0
  %750 = vmatprep.subr.bf16.mxu0 0
  %751 = vmatpush1.bf16.msra.mxu0 0
  %752 = vmatprep.subr.bf16.mxu0 0
  %753 = vmatpush1.bf16.msra.mxu0 0
  %754 = vmatprep.subr.bf16.mxu0 0
  %755 = vmatpush1.bf16.msra.mxu0 0
  %756 = vmatprep.subr.bf16.mxu0 0
  %757 = vmatpush1.bf16.msra.mxu0 0
  %758 = vmatprep.subr.bf16.mxu0 0
  %759 = vmatpush1.bf16.msra.mxu0 0
  %760 = vmatprep.subr.bf16.mxu0 0
  %761 = vmatpush1.bf16.msra.mxu0 0
  %762 = vmatprep.mubr.bf16.mxu0 0
  %763 = vmatmul.mubr.bf16.gmra.mrb[0].mxu0 %v728
  %v764 = vpop.f32.mrb[0].mxu0
  %v765 = vadd.f32 0.0, %v764
  %v766 = vpop.f32.mrb[0].mxu0
  %v767 = vpop.f32.mrb[0].mxu0
  %v768 = vpop.f32.mrb[0].mxu0
  %769 = vdwg.mxu0
  %v770 = vadd.f32 %v722, %v765
  %v771 = vxor.u32 %v770, 2147483648
  %v772 = vmul.f32 %v771, 1.442695
  %v773 = vpow.pop %v772
  %v774 = vadd.f32 %v773, 1.0
  %v775 = vrcp.pop %v774
  %v776 = vmul.f32 1.0, %v775
  %v777 = vtanh.pop %v770
  %v778 = vmul.f32 %v776, %v714
  %780 = vrot.lane.b32.xlu0 %v777, 64
  %v781 = vpop.permute.xlu0 %780
  %v783 = vmul.f32 %v776, %v781
  %785 = vrot.lane.b32.xlu0 %v783, 32
  %v786 = vpop.permute.xlu0 %785
  %v788 = vadd.f32 %v778, %v786
  %v789 = vtanh.pop %v788
  %791 = vrot.lane.b32.xlu0 %v789, 64
  %v792 = vpop.permute.xlu0 %791
  %v794 = vmul.f32 %v776, %v792
  %s795 = scalar_lea.vmem [#allocation2], 56
  %v796 = vld [vmem:[%s795] sm:$0xff]
  %v797 = vpack.c.bf16 %v794, %v794
  %799 = vrot.lane.b32.xlu0 %v797, 32
  %v800 = vpop.permute.xlu0 %799
  %v802 = vsel %vm282, %v800, 0
  %804 = vmatprep.subr.bf16.mxu0 0
  %805 = vmatpush1.bf16.msra.mxu0 %v278
  %806 = vmatprep.subr.bf16.mxu0 0
  %807 = vmatpush1.bf16.msra.mxu0 %v279
  %808 = vmatprep.subr.bf16.mxu0 0
  %809 = vmatpush1.bf16.msra.mxu0 0
  %810 = vmatprep.subr.bf16.mxu0 0
  %811 = vmatpush1.bf16.msra.mxu0 0
  %812 = vmatprep.subr.bf16.mxu0 0
  %813 = vmatpush1.bf16.msra.mxu0 0
  %814 = vmatprep.subr.bf16.mxu0 0
  %815 = vmatpush1.bf16.msra.mxu0 0
  %816 = vmatprep.subr.bf16.mxu0 0
  %817 = vmatpush1.bf16.msra.mxu0 0
  %818 = vmatprep.subr.bf16.mxu0 0
  %819 = vmatpush1.bf16.msra.mxu0 0
  %820 = vmatprep.subr.bf16.mxu0 0
  %821 = vmatpush1.bf16.msra.mxu0 0
  %822 = vmatprep.subr.bf16.mxu0 0
  %823 = vmatpush1.bf16.msra.mxu0 0
  %824 = vmatprep.subr.bf16.mxu0 0
  %825 = vmatpush1.bf16.msra.mxu0 0
  %826 = vmatprep.subr.bf16.mxu0 0
  %827 = vmatpush1.bf16.msra.mxu0 0
  %828 = vmatprep.subr.bf16.mxu0 0
  %829 = vmatpush1.bf16.msra.mxu0 0
  %830 = vmatprep.subr.bf16.mxu0 0
  %831 = vmatpush1.bf16.msra.mxu0 0
  %832 = vmatprep.subr.bf16.mxu0 0
  %833 = vmatpush1.bf16.msra.mxu0 0
  %834 = vmatprep.subr.bf16.mxu0 0
  %835 = vmatpush1.bf16.msra.mxu0 0
  %836 = vmatprep.mubr.bf16.mxu0 0
  %837 = vmatmul.mubr.bf16.gmra.mrb[0].mxu0 %v802
  %v838 = vpop.f32.mrb[0].mxu0
  %v839 = vadd.f32 0.0, %v838
  %v840 = vpop.f32.mrb[0].mxu0
  %v841 = vpop.f32.mrb[0].mxu0
  %v842 = vpop.f32.mrb[0].mxu0
  %843 = vdwg.mxu0
  %v844 = vadd.f32 %v796, %v839
  %v845 = vxor.u32 %v844, 2147483648
  %v846 = vmul.f32 %v845, 1.442695
  %v847 = vpow.pop %v846
  %v848 = vadd.f32 %v847, 1.0
  %v849 = vrcp.pop %v848
  %v850 = vmul.f32 1.0, %v849
  %v851 = vtanh.pop %v844
  %v852 = vmul.f32 %v850, %v788
  %854 = vrot.lane.b32.xlu0 %v851, 64
  %v855 = vpop.permute.xlu0 %854
  %v857 = vmul.f32 %v850, %v855
  %859 = vrot.lane.b32.xlu0 %v857, 32
  %v860 = vpop.permute.xlu0 %859
  %v862 = vadd.f32 %v852, %v860
  %v863 = vtanh.pop %v862
  %865 = vrot.lane.b32.xlu0 %v863, 64
  %v866 = vpop.permute.xlu0 %865
  %v868 = vmul.f32 %v850, %v866
  %v869 = vxor.u32 %v260, 2147483648
  %v870 = vmul.f32 %v869, 1.442695
  %v871 = vpow.pop %v870
  %v872 = vadd.f32 %v871, 1.0
  %v873 = vrcp.pop %v872
  %v874 = vmul.f32 1.0, %v873
  %v875 = vtanh.pop %v260
  %877 = vrot.lane.b32.xlu0 %v875, 64
  %v878 = vpop.permute.xlu0 %877
  %v880 = vmul.f32 %v874, %v878
  %v881 = vtanh.pop %v880
  %883 = vrot.lane.b32.xlu0 %v881, 96
  %v884 = vpop.permute.xlu0 %883
  %v886 = vmul.f32 %v874, %v884
  %888 = vrot.lane.b32.xlu0 %v868, 32
  %v889 = vpop.permute.xlu0 %888
  %892 = vrot.lane.b32.xlu0 %v886, 64
  %v893 = vpop.permute.xlu0 %892
  %v895 = vsel %vm282, %v889, %v893
  %v896 = vpack.c.bf16 %v895, %v895
  %v897 = vld [vmem:[%s6] sm:$0xf]
  %v898 = vld [vmem:[%s6 + $0x4] sm:$0xf]
  %v899 = vld [vmem:[%s6 + $0x8] sm:$0xf]
  %v900 = vld [vmem:[%s6 + $0xc] sm:$0xf]
  %v901 = vld [vmem:[%s6 + $0x10] sm:$0xf]
  %v902 = vld [vmem:[%s6 + $0x14] sm:$0xf]
  %v903 = vld [vmem:[%s6 + $0x18] sm:$0xf]
  %v904 = vld [vmem:[%s6 + $0x1c] sm:$0xf]
  %v905 = vld [vmem:[%s7] sm:$0x1]
  %v907 = vlaneseq
  %v908 = vshrl.u32 %v907, 7
  %v909 = vsub.s32 0, %v908
  %v910 = vrot.slane %v905, %v909
  %v920 = vunpack.c.l.b16 %v897
  %v921 = vunpack.c.l.b16 %v898
  %v922 = vunpack.c.l.b16 %v899
  %v923 = vunpack.c.l.b16 %v900
  %v924 = vunpack.c.l.b16 %v901
  %v925 = vunpack.c.l.b16 %v902
  %v926 = vunpack.c.l.b16 %v903
  %v927 = vunpack.c.l.b16 %v904
  %v928 = vpack.c.b16 %v921, %v920
  %v929 = vpack.c.b16 %v923, %v922
  %v930 = vpack.c.b16 %v925, %v924
  %v931 = vpack.c.b16 %v927, %v926
  %v937 = vsel %vm97, %v896, 0
  %939 = vmatprep.subr.bf16.mxu0 0
  %940 = vmatpush1.bf16.msra.mxu0 %v928
  %941 = vmatprep.subr.bf16.mxu0 0
  %942 = vmatpush1.bf16.msra.mxu0 %v929
  %943 = vmatprep.subr.bf16.mxu0 0
  %944 = vmatpush1.bf16.msra.mxu0 %v930
  %945 = vmatprep.subr.bf16.mxu0 0
  %946 = vmatpush1.bf16.msra.mxu0 %v931
  %947 = vmatprep.subr.bf16.mxu0 0
  %948 = vmatpush1.bf16.msra.mxu0 0
  %949 = vmatprep.subr.bf16.mxu0 0
  %950 = vmatpush1.bf16.msra.mxu0 0
  %951 = vmatprep.subr.bf16.mxu0 0
  %952 = vmatpush1.bf16.msra.mxu0 0
  %953 = vmatprep.subr.bf16.mxu0 0
  %954 = vmatpush1.bf16.msra.mxu0 0
  %955 = vmatprep.subr.bf16.mxu0 0
  %956 = vmatpush1.bf16.msra.mxu0 0
  %957 = vmatprep.subr.bf16.mxu0 0
  %958 = vmatpush1.bf16.msra.mxu0 0
  %959 = vmatprep.subr.bf16.mxu0 0
  %960 = vmatpush1.bf16.msra.mxu0 0
  %961 = vmatprep.subr.bf16.mxu0 0
  %962 = vmatpush1.bf16.msra.mxu0 0
  %963 = vmatprep.subr.bf16.mxu0 0
  %964 = vmatpush1.bf16.msra.mxu0 0
  %965 = vmatprep.subr.bf16.mxu0 0
  %966 = vmatpush1.bf16.msra.mxu0 0
  %967 = vmatprep.subr.bf16.mxu0 0
  %968 = vmatpush1.bf16.msra.mxu0 0
  %969 = vmatprep.subr.bf16.mxu0 0
  %970 = vmatpush1.bf16.msra.mxu0 0
  %971 = vmatprep.mubr.bf16.mxu0 0
  %972 = vmatmul.mubr.bf16.gmra.mrb[0].mxu0 %v937
  %v973 = vpop.f32.mrb[0].mxu0
  %v974 = vadd.f32 %v910, %v973
  %v975 = vpop.f32.mrb[0].mxu0
  %v976 = vpop.f32.mrb[0].mxu0
  %v977 = vpop.f32.mrb[0].mxu0
  %978 = vdwg.mxu0
  %vm979 = vcmask 31744
  %980 = vst.msk [vmem:[%s8] sm:$0xff] %vm979, %v974
  // Predicated region
  $region34: #{sentence_classifier_forward.3} parent=0 // pred_check
    _
  $region35: #{sentence_classifier_forward.3} parent=0 // pred_check_branch
    %982 = sbr.rel (0) target = $region37
  $region36: #{sentence_classifier_forward.3} parent=0 // pred_region
    _
  $region37: #{sentence_classifier_forward.3} parent=0 // pred_fallthru
    _
  // Predicated region
  $region38: #{sentence_classifier_forward.3} parent=0 // pred_check
    _
  $region39: #{sentence_classifier_forward.3} parent=0 // pred_check_branch
    %984 = sbr.rel (0) target = $region41
  $region40: #{sentence_classifier_forward.3} parent=0 // pred_region
    _
  $region41: #{sentence_classifier_forward.3} parent=0 // pred_fallthru
    _

// kernel: sentence_classifier_forward.2
$region0: #{sentence_classifier_forward.2}
  #allocation0 [shape = 'u32[]', space=smem, size = 0x4, offset = 0x4, fixed_abs, tag = 'smem constant byte address 0x4 - core index']
  #allocation1 [shape = 'u32[144,128]{1,0:T(1,128)}', space=vmem, size = 0x12000, scoped, tag = 'internal scratch']
  #allocation2 [shape = 'f32[8,8,128]{2,1,0:T(8,128)}', space=vmem, size = 0x8000, scoped, tag = 'scratch operand']
  #allocation3 [shape = 'f32[8,8,128]{2,1,0:T(8,128)}', space=vmem, size = 0x8000, scoped, tag = 'scratch operand']
  #allocation4 [shape = 'f32[8,8,32]{2,1,0:T(8,128)}', space=vmem, size = 0x8000, scoped, tag = 'scratch operand']
  #allocation5 [shape = 'f32[8,8,32]{2,1,0:T(8,128)}', space=vmem, size = 0x8000, scoped, tag = 'scratch operand']
  %s0 = inlined_call_operand.vmem [shape: f32[8,8,32], index: 0, kind: input, shape index: {}]
  %s1 = inlined_call_operand.vmem [shape: bf16[32,128], index: 1, kind: input, shape index: {}]
  %s2 = inlined_call_operand.vmem [shape: bf16[32,128], index: 2, kind: input, shape index: {}]
  %s3 = inlined_call_operand.vmem [shape: f32[1,128], index: 3, kind: input, shape index: {}]
  %s4 = inlined_call_operand.vmem [shape: bf16[32,128], index: 4, kind: input, shape index: {}]
  %s5 = inlined_call_operand.vmem [shape: bf16[32,128], index: 5, kind: input, shape index: {}]
  %s6 = inlined_call_operand.vmem [shape: f32[1,128], index: 6, kind: input, shape index: {}]
  %s7 = inlined_call_operand.vmem [shape: bf16[8,8,64], index: 7, kind: output, shape index: {}]
  %s8 = sld [smem:[#allocation0]]
  $region38: #{sentence_classifier_forward.2} parent=0
    _
  %s10 = ssub.s32 1, %s8
  %s11 = scalar_select 0, %s10, %s8
  // Predicated region
  $region2: #{sentence_classifier_forward.2} parent=0 // pred_check
    _
  $region3: #{sentence_classifier_forward.2} parent=0 // pred_check_branch
    %13 = sbr.rel (0) target = $region5
  $region4: #{sentence_classifier_forward.2} parent=0 // pred_region
    _
  $region5: #{sentence_classifier_forward.2} parent=0 // pred_fallthru
    _
  // Predicated region
  $region6: #{sentence_classifier_forward.2} parent=0 // pred_check
    _
  $region7: #{sentence_classifier_forward.2} parent=0 // pred_check_branch
    %15 = sbr.rel (0) target = $region9
  $region8: #{sentence_classifier_forward.2} parent=0 // pred_region
    _
  $region9: #{sentence_classifier_forward.2} parent=0 // pred_fallthru
    _
  // Predicated region
  $region10: #{sentence_classifier_forward.2} parent=0 // pred_check
    _
  $region11: #{sentence_classifier_forward.2} parent=0 // pred_check_branch
    %17 = sbr.rel (0) target = $region13
  $region12: #{sentence_classifier_forward.2} parent=0 // pred_region
    _
  $region13: #{sentence_classifier_forward.2} parent=0 // pred_fallthru
    _
  // Predicated region
  $region14: #{sentence_classifier_forward.2} parent=0 // pred_check
    _
  $region15: #{sentence_classifier_forward.2} parent=0 // pred_check_branch
    %19 = sbr.rel (0) target = $region17
  $region16: #{sentence_classifier_forward.2} parent=0 // pred_region
    _
  $region17: #{sentence_classifier_forward.2} parent=0 // pred_fallthru
    _
  // Predicated region
  $region18: #{sentence_classifier_forward.2} parent=0 // pred_check
    _
  $region19: #{sentence_classifier_forward.2} parent=0 // pred_check_branch
    %21 = sbr.rel (0) target = $region21
  $region20: #{sentence_classifier_forward.2} parent=0 // pred_region
    _
  $region21: #{sentence_classifier_forward.2} parent=0 // pred_fallthru
    _
  // Predicated region
  $region22: #{sentence_classifier_forward.2} parent=0 // pred_check
    _
  $region23: #{sentence_classifier_forward.2} parent=0 // pred_check_branch
    %23 = sbr.rel (0) target = $region25
  $region24: #{sentence_classifier_forward.2} parent=0 // pred_region
    _
  $region25: #{sentence_classifier_forward.2} parent=0 // pred_fallthru
    _
  // Predicated region
  $region26: #{sentence_classifier_forward.2} parent=0 // pred_check
    _
  $region27: #{sentence_classifier_forward.2} parent=0 // pred_check_branch
    %25 = sbr.rel (0) target = $region29
  $region28: #{sentence_classifier_forward.2} parent=0 // pred_region
    _
  $region29: #{sentence_classifier_forward.2} parent=0 // pred_fallthru
    _
  %v27 = vld [vmem:[%s0] sm:$0xff]
  %v28 = vld [vmem:[%s0 + $0x8] sm:$0xff]
  %v29 = vld [vmem:[%s0 + $0x10] sm:$0xff]
  %v30 = vld [vmem:[%s0 + $0x18] sm:$0xff]
  %v31 = vld [vmem:[%s0 + $0x20] sm:$0xff]
  %v32 = vld [vmem:[%s0 + $0x28] sm:$0xff]
  %v33 = vld [vmem:[%s0 + $0x30] sm:$0xff]
  %v34 = vld [vmem:[%s0 + $0x38] sm:$0xff]
  %v35 = vpack.c.bf16 %v27, %v27
  %v36 = vpack.c.bf16 %v28, %v28
  %v37 = vpack.c.bf16 %v29, %v29
  %v38 = vpack.c.bf16 %v30, %v30
  %v39 = vpack.c.bf16 %v31, %v31
  %v40 = vpack.c.bf16 %v32, %v32
  %v41 = vpack.c.bf16 %v33, %v33
  %v42 = vpack.c.bf16 %v34, %v34
  %v43 = vld [vmem:[%s1] sm:$0xf]
  %v44 = vld [vmem:[%s1 + $0x4] sm:$0xf]
  %v45 = vld [vmem:[%s1 + $0x8] sm:$0xf]
  %v46 = vld [vmem:[%s1 + $0xc] sm:$0xf]
  %v47 = vld [vmem:[%s3] sm:$0x1]
  %v49 = vlaneseq
  %v50 = vshrl.u32 %v49, 7
  %v51 = vsub.s32 0, %v50
  %v52 = vrot.slane %v47, %v51
  %v62 = vunpack.c.l.b16 %v35
  %v63 = vunpack.c.l.b16 %v36
  %v64 = vunpack.c.l.b16 %v37
  %v65 = vunpack.c.l.b16 %v38
  %v66 = vunpack.c.l.b16 %v39
  %v67 = vunpack.c.l.b16 %v40
  %v68 = vunpack.c.l.b16 %v41
  %v69 = vunpack.c.l.b16 %v42
  %v70 = vpack.c.b16 %v63, %v62
  %v71 = vpack.c.b16 %v65, %v64
  %v72 = vpack.c.b16 %v67, %v66
  %v73 = vpack.c.b16 %v69, %v68
  %v78 = vunpack.c.l.b16 %v43
  %v79 = vunpack.c.l.b16 %v44
  %v80 = vunpack.c.l.b16 %v45
  %v81 = vunpack.c.l.b16 %v46
  %v82 = vpack.c.b16 %v79, %v78
  %v83 = vpack.c.b16 %v81, %v80
  %vm86 = vcmask 261120
  %v88 = vsel %vm86, %v70, 0
  %v91 = vsel %vm86, %v71, 0
  %v94 = vsel %vm86, %v72, 0
  %v97 = vsel %vm86, %v73, 0
  %99 = vmatprep.subr.bf16.mxu0 0
  %100 = vmatpush1.bf16.msra.mxu0 %v82
  %101 = vmatprep.subr.bf16.mxu0 0
  %102 = vmatpush1.bf16.msra.mxu0 %v83
  %103 = vmatprep.subr.bf16.mxu0 0
  %104 = vmatpush1.bf16.msra.mxu0 0
  %105 = vmatprep.subr.bf16.mxu0 0
  %106 = vmatpush1.bf16.msra.mxu0 0
  %107 = vmatprep.subr.bf16.mxu0 0
  %108 = vmatpush1.bf16.msra.mxu0 0
  %109 = vmatprep.subr.bf16.mxu0 0
  %110 = vmatpush1.bf16.msra.mxu0 0
  %111 = vmatprep.subr.bf16.mxu0 0
  %112 = vmatpush1.bf16.msra.mxu0 0
  %113 = vmatprep.subr.bf16.mxu0 0
  %114 = vmatpush1.bf16.msra.mxu0 0
  %115 = vmatprep.subr.bf16.mxu0 0
  %116 = vmatpush1.bf16.msra.mxu0 0
  %117 = vmatprep.subr.bf16.mxu0 0
  %118 = vmatpush1.bf16.msra.mxu0 0
  %119 = vmatprep.subr.bf16.mxu0 0
  %120 = vmatpush1.bf16.msra.mxu0 0
  %121 = vmatprep.subr.bf16.mxu0 0
  %122 = vmatpush1.bf16.msra.mxu0 0
  %123 = vmatprep.subr.bf16.mxu0 0
  %124 = vmatpush1.bf16.msra.mxu0 0
  %125 = vmatprep.subr.bf16.mxu0 0
  %126 = vmatpush1.bf16.msra.mxu0 0
  %127 = vmatprep.subr.bf16.mxu0 0
  %128 = vmatpush1.bf16.msra.mxu0 0
  %129 = vmatprep.subr.bf16.mxu0 0
  %130 = vmatpush1.bf16.msra.mxu0 0
  %131 = vmatprep.mubr.bf16.mxu0 0
  %132 = vmatmul.mubr.bf16.gmra.mrb[0].mxu0 %v88
  %v133 = vpop.f32.mrb[0].mxu0
  %v134 = vadd.f32 %v52, %v133
  %v135 = vpop.f32.mrb[0].mxu0
  %v136 = vpop.f32.mrb[0].mxu0
  %v137 = vadd.f32 %v52, %v136
  %v138 = vpop.f32.mrb[0].mxu0
  %139 = vmatprep.mubr.bf16.mxu0 0
  %140 = vmatmul.mubr.bf16.gmra.mrb[0].mxu0 %v91
  %v141 = vpop.f32.mrb[0].mxu0
  %v142 = vadd.f32 %v52, %v141
  %v143 = vpop.f32.mrb[0].mxu0
  %v144 = vpop.f32.mrb[0].mxu0
  %v145 = vadd.f32 %v52, %v144
  %v146 = vpop.f32.mrb[0].mxu0
  %147 = vmatprep.mubr.bf16.mxu0 0
  %148 = vmatmul.mubr.bf16.gmra.mrb[0].mxu0 %v94
  %v149 = vpop.f32.mrb[0].mxu0
  %v150 = vadd.f32 %v52, %v149
  %v151 = vpop.f32.mrb[0].mxu0
  %v152 = vpop.f32.mrb[0].mxu0
  %v153 = vadd.f32 %v52, %v152
  %v154 = vpop.f32.mrb[0].mxu0
  %155 = vmatprep.mubr.bf16.mxu0 0
  %156 = vmatmul.mubr.bf16.gmra.mrb[0].mxu0 %v97
  %v157 = vpop.f32.mrb[0].mxu0
  %v158 = vadd.f32 %v52, %v157
  %v159 = vpop.f32.mrb[0].mxu0
  %v160 = vpop.f32.mrb[0].mxu0
  %v161 = vadd.f32 %v52, %v160
  %v162 = vpop.f32.mrb[0].mxu0
  %163 = vdwg.mxu0
  %164 = vst [vmem:[#allocation2] sm:$0xff] %v134
  %165 = vst [vmem:[#allocation2 + $0x8] sm:$0xff] %v137
  %166 = vst [vmem:[#allocation2 + $0x10] sm:$0xff] %v142
  %167 = vst [vmem:[#allocation2 + $0x18] sm:$0xff] %v145
  %168 = vst [vmem:[#allocation2 + $0x20] sm:$0xff] %v150
  %169 = vst [vmem:[#allocation2 + $0x28] sm:$0xff] %v153
  %170 = vst [vmem:[#allocation2 + $0x30] sm:$0xff] %v158
  %171 = vst [vmem:[#allocation2 + $0x38] sm:$0xff] %v161
  %v172 = vld [vmem:[%s4] sm:$0xf]
  %v173 = vld [vmem:[%s4 + $0x4] sm:$0xf]
  %v174 = vld [vmem:[%s4 + $0x8] sm:$0xf]
  %v175 = vld [vmem:[%s4 + $0xc] sm:$0xf]
  %v176 = vld [vmem:[%s6] sm:$0x1]
  %v178 = vlaneseq
  %v179 = vshrl.u32 %v178, 7
  %v180 = vsub.s32 0, %v179
  %v181 = vrot.slane %v176, %v180
  %v187 = vunpack.c.l.b16 %v172
  %v188 = vunpack.c.l.b16 %v173
  %v189 = vunpack.c.l.b16 %v174
  %v190 = vunpack.c.l.b16 %v175
  %v191 = vpack.c.b16 %v188, %v187
  %v192 = vpack.c.b16 %v190, %v189
  %195 = vmatprep.subr.bf16.mxu0 0
  %196 = vmatpush1.bf16.msra.mxu0 %v191
  %197 = vmatprep.subr.bf16.mxu0 0
  %198 = vmatpush1.bf16.msra.mxu0 %v192
  %199 = vmatprep.subr.bf16.mxu0 0
  %200 = vmatpush1.bf16.msra.mxu0 0
  %201 = vmatprep.subr.bf16.mxu0 0
  %202 = vmatpush1.bf16.msra.mxu0 0
  %203 = vmatprep.subr.bf16.mxu0 0
  %204 = vmatpush1.bf16.msra.mxu0 0
  %205 = vmatprep.subr.bf16.mxu0 0
  %206 = vmatpush1.bf16.msra.mxu0 0
  %207 = vmatprep.subr.bf16.mxu0 0
  %208 = vmatpush1.bf16.msra.mxu0 0
  %209 = vmatprep.subr.bf16.mxu0 0
  %210 = vmatpush1.bf16.msra.mxu0 0
  %211 = vmatprep.subr.bf16.mxu0 0
  %212 = vmatpush1.bf16.msra.mxu0 0
  %213 = vmatprep.subr.bf16.mxu0 0
  %214 = vmatpush1.bf16.msra.mxu0 0
  %215 = vmatprep.subr.bf16.mxu0 0
  %216 = vmatpush1.bf16.msra.mxu0 0
  %217 = vmatprep.subr.bf16.mxu0 0
  %218 = vmatpush1.bf16.msra.mxu0 0
  %219 = vmatprep.subr.bf16.mxu0 0
  %220 = vmatpush1.bf16.msra.mxu0 0
  %221 = vmatprep.subr.bf16.mxu0 0
  %222 = vmatpush1.bf16.msra.mxu0 0
  %223 = vmatprep.subr.bf16.mxu0 0
  %224 = vmatpush1.bf16.msra.mxu0 0
  %225 = vmatprep.subr.bf16.mxu0 0
  %226 = vmatpush1.bf16.msra.mxu0 0
  %227 = vmatprep.mubr.bf16.mxu0 0
  %228 = vmatmul.mubr.bf16.gmra.mrb[0].mxu0 %v88
  %v229 = vpop.f32.mrb[0].mxu0
  %v230 = vadd.f32 %v181, %v229
  %v231 = vpop.f32.mrb[0].mxu0
  %v232 = vpop.f32.mrb[0].mxu0
  %v233 = vadd.f32 %v181, %v232
  %v234 = vpop.f32.mrb[0].mxu0
  %235 = vmatprep.mubr.bf16.mxu0 0
  %236 = vmatmul.mubr.bf16.gmra.mrb[0].mxu0 %v91
  %v237 = vpop.f32.mrb[0].mxu0
  %v238 = vadd.f32 %v181, %v237
  %v239 = vpop.f32.mrb[0].mxu0
  %v240 = vpop.f32.mrb[0].mxu0
  %v241 = vadd.f32 %v181, %v240
  %v242 = vpop.f32.mrb[0].mxu0
  %243 = vmatprep.mubr.bf16.mxu0 0
  %244 = vmatmul.mubr.bf16.gmra.mrb[0].mxu0 %v94
  %v245 = vpop.f32.mrb[0].mxu0
  %v246 = vadd.f32 %v181, %v245
  %v247 = vpop.f32.mrb[0].mxu0
  %v248 = vpop.f32.mrb[0].mxu0
  %v249 = vadd.f32 %v181, %v248
  %v250 = vpop.f32.mrb[0].mxu0
  %251 = vmatprep.mubr.bf16.mxu0 0
  %252 = vmatmul.mubr.bf16.gmra.mrb[0].mxu0 %v97
  %v253 = vpop.f32.mrb[0].mxu0
  %v254 = vadd.f32 %v181, %v253
  %v255 = vpop.f32.mrb[0].mxu0
  %v256 = vpop.f32.mrb[0].mxu0
  %v257 = vadd.f32 %v181, %v256
  %v258 = vpop.f32.mrb[0].mxu0
  %259 = vdwg.mxu0
  %260 = vst [vmem:[#allocation3] sm:$0xff] %v230
  %261 = vst [vmem:[#allocation3 + $0x8] sm:$0xff] %v233
  %262 = vst [vmem:[#allocation3 + $0x10] sm:$0xff] %v238
  %263 = vst [vmem:[#allocation3 + $0x18] sm:$0xff] %v241
  %264 = vst [vmem:[#allocation3 + $0x20] sm:$0xff] %v246
  %265 = vst [vmem:[#allocation3 + $0x28] sm:$0xff] %v249
  %266 = vst [vmem:[#allocation3 + $0x30] sm:$0xff] %v254
  %267 = vst [vmem:[#allocation3 + $0x38] sm:$0xff] %v257
  %v268 = vld [vmem:[%s2] sm:$0xf]
  %v269 = vld [vmem:[%s2 + $0x4] sm:$0xf]
  %v270 = vld [vmem:[%s2 + $0x8] sm:$0xf]
  %v271 = vld [vmem:[%s2 + $0xc] sm:$0xf]
  %v272 = vld [vmem:[%s5] sm:$0xf]
  %v273 = vld [vmem:[%s5 + $0x4] sm:$0xf]
  %v274 = vld [vmem:[%s5 + $0x8] sm:$0xf]
  %v275 = vld [vmem:[%s5 + $0xc] sm:$0xf]
  %v276 = vld [vmem:[#allocation2] sm:$0xff]
  %v281 = vunpack.c.l.b16 %v268
  %v282 = vunpack.c.l.b16 %v269
  %v283 = vunpack.c.l.b16 %v270
  %v284 = vunpack.c.l.b16 %v271
  %v285 = vpack.c.b16 %v282, %v281
  %v286 = vpack.c.b16 %v284, %v283
  %v290 = vsel %vm86, 0, 0
  %292 = vmatprep.subr.bf16.mxu0 0
  %293 = vmatpush1.bf16.msra.mxu0 %v285
  %294 = vmatprep.subr.bf16.mxu0 0
  %295 = vmatpush1.bf16.msra.mxu0 %v286
  %296 = vmatprep.subr.bf16.mxu0 0
  %297 = vmatpush1.bf16.msra.mxu0 0
  %298 = vmatprep.subr.bf16.mxu0 0
  %299 = vmatpush1.bf16.msra.mxu0 0
  %300 = vmatprep.subr.bf16.mxu0 0
  %301 = vmatpush1.bf16.msra.mxu0 0
  %302 = vmatprep.subr.bf16.mxu0 0
  %303 = vmatpush1.bf16.msra.mxu0 0
  %304 = vmatprep.subr.bf16.mxu0 0
  %305 = vmatpush1.bf16.msra.mxu0 0
  %306 = vmatprep.subr.bf16.mxu0 0
  %307 = vmatpush1.bf16.msra.mxu0 0
  %308 = vmatprep.subr.bf16.mxu0 0
  %309 = vmatpush1.bf16.msra.mxu0 0
  %310 = vmatprep.subr.bf16.mxu0 0
  %311 = vmatpush1.bf16.msra.mxu0 0
  %312 = vmatprep.subr.bf16.mxu0 0
  %313 = vmatpush1.bf16.msra.mxu0 0
  %314 = vmatprep.subr.bf16.mxu0 0
  %315 = vmatpush1.bf16.msra.mxu0 0
  %316 = vmatprep.subr.bf16.mxu0 0
  %317 = vmatpush1.bf16.msra.mxu0 0
  %318 = vmatprep.subr.bf16.mxu0 0
  %319 = vmatpush1.bf16.msra.mxu0 0
  %320 = vmatprep.subr.bf16.mxu0 0
  %321 = vmatpush1.bf16.msra.mxu0 0
  %322 = vmatprep.subr.bf16.mxu0 0
  %323 = vmatpush1.bf16.msra.mxu0 0
  %324 = vmatprep.mubr.bf16.mxu0 0
  %325 = vmatmul.mubr.bf16.gmra.mrb[0].mxu0 %v290
  %v326 = vpop.f32.mrb[0].mxu0
  %v327 = vadd.f32 0.0, %v326
  %v328 = vpop.f32.mrb[0].mxu0
  %v329 = vpop.f32.mrb[0].mxu0
  %v330 = vpop.f32.mrb[0].mxu0
  %331 = vdwg.mxu0
  %v332 = vadd.f32 %v276, %v327
  %v333 = vxor.u32 %v332, 2147483648
  %v334 = vmul.f32 %v333, 1.442695
  %v335 = vpow.pop %v334
  %v336 = vadd.f32 %v335, 1.0
  %v337 = vrcp.pop %v336
  %v338 = vmul.f32 1.0, %v337
  %v339 = vtanh.pop %v332
  %v340 = vmul.f32 %v338, 0.0
  %342 = vrot.lane.b32.xlu0 %v339, 64
  %v343 = vpop.permute.xlu0 %342
  %v345 = vmul.f32 %v338, %v343
  %347 = vrot.lane.b32.xlu0 %v345, 32
  %v348 = vpop.permute.xlu0 %347
  %v350 = vadd.f32 %v340, %v348
  %v351 = vtanh.pop %v350
  %353 = vrot.lane.b32.xlu0 %v351, 64
  %v354 = vpop.permute.xlu0 %353
  %v356 = vmul.f32 %v338, %v354
  %358 = vrot.lane.b32.xlu0 %v356, 32
  %v359 = vpop.permute.xlu0 %358
  %361 = vst.msk [vmem:[#allocation4] sm:$0xff] %vm86, %v359
  %s362 = scalar_lea.vmem [#allocation3], 56
  %v363 = vld [vmem:[%s362] sm:$0xff]
  %v368 = vunpack.c.l.b16 %v272
  %v369 = vunpack.c.l.b16 %v273
  %v370 = vunpack.c.l.b16 %v274
  %v371 = vunpack.c.l.b16 %v275
  %v372 = vpack.c.b16 %v369, %v368
  %v373 = vpack.c.b16 %v371, %v370
  %376 = vmatprep.subr.bf16.mxu0 0
  %377 = vmatpush1.bf16.msra.mxu0 %v372
  %378 = vmatprep.subr.bf16.mxu0 0
  %379 = vmatpush1.bf16.msra.mxu0 %v373
  %380 = vmatprep.subr.bf16.mxu0 0
  %381 = vmatpush1.bf16.msra.mxu0 0
  %382 = vmatprep.subr.bf16.mxu0 0
  %383 = vmatpush1.bf16.msra.mxu0 0
  %384 = vmatprep.subr.bf16.mxu0 0
  %385 = vmatpush1.bf16.msra.mxu0 0
  %386 = vmatprep.subr.bf16.mxu0 0
  %387 = vmatpush1.bf16.msra.mxu0 0
  %388 = vmatprep.subr.bf16.mxu0 0
  %389 = vmatpush1.bf16.msra.mxu0 0
  %390 = vmatprep.subr.bf16.mxu0 0
  %391 = vmatpush1.bf16.msra.mxu0 0
  %392 = vmatprep.subr.bf16.mxu0 0
  %393 = vmatpush1.bf16.msra.mxu0 0
  %394 = vmatprep.subr.bf16.mxu0 0
  %395 = vmatpush1.bf16.msra.mxu0 0
  %396 = vmatprep.subr.bf16.mxu0 0
  %397 = vmatpush1.bf16.msra.mxu0 0
  %398 = vmatprep.subr.bf16.mxu0 0
  %399 = vmatpush1.bf16.msra.mxu0 0
  %400 = vmatprep.subr.bf16.mxu0 0
  %401 = vmatpush1.bf16.msra.mxu0 0
  %402 = vmatprep.subr.bf16.mxu0 0
  %403 = vmatpush1.bf16.msra.mxu0 0
  %404 = vmatprep.subr.bf16.mxu0 0
  %405 = vmatpush1.bf16.msra.mxu0 0
  %406 = vmatprep.subr.bf16.mxu0 0
  %407 = vmatpush1.bf16.msra.mxu0 0
  %408 = vmatprep.mubr.bf16.mxu0 0
  %409 = vmatmul.mubr.bf16.gmra.mrb[0].mxu0 %v290
  %v410 = vpop.f32.mrb[0].mxu0
  %v411 = vadd.f32 0.0, %v410
  %v412 = vpop.f32.mrb[0].mxu0
  %v413 = vpop.f32.mrb[0].mxu0
  %v414 = vpop.f32.mrb[0].mxu0
  %415 = vdwg.mxu0
  %v416 = vadd.f32 %v363, %v411
  %v417 = vxor.u32 %v416, 2147483648
  %v418 = vmul.f32 %v417, 1.442695
  %v419 = vpow.pop %v418
  %v420 = vadd.f32 %v419, 1.0
  %v421 = vrcp.pop %v420
  %v422 = vmul.f32 1.0, %v421
  %v423 = vtanh.pop %v416
  %v424 = vmul.f32 %v422, 0.0
  %426 = vrot.lane.b32.xlu0 %v423, 64
  %v427 = vpop.permute.xlu0 %426
  %v429 = vmul.f32 %v422, %v427
  %431 = vrot.lane.b32.xlu0 %v429, 32
  %v432 = vpop.permute.xlu0 %431
  %v434 = vadd.f32 %v424, %v432
  %v435 = vtanh.pop %v434
  %437 = vrot.lane.b32.xlu0 %v435, 64
  %v438 = vpop.permute.xlu0 %437
  %v440 = vmul.f32 %v422, %v438
  %442 = vrot.lane.b32.xlu0 %v440, 32
  %v443 = vpop.permute.xlu0 %442
  %s445 = scalar_lea.vmem [#allocation5], 56
  %446 = vst.msk [vmem:[%s445] sm:$0xff] %vm86, %v443
  %s447 = scalar_lea.vmem [#allocation2], 8
  %v448 = vld [vmem:[%s447] sm:$0xff]
  %v449 = vpack.c.bf16 %v356, %v356
  %451 = vrot.lane.b32.xlu0 %v449, 32
  %v452 = vpop.permute.xlu0 %451
  %v454 = vsel %vm86, %v452, 0
  %456 = vmatprep.subr.bf16.mxu0 0
  %457 = vmatpush1.bf16.msra.mxu0 %v285
  %458 = vmatprep.subr.bf16.mxu0 0
  %459 = vmatpush1.bf16.msra.mxu0 %v286
  %460 = vmatprep.subr.bf16.mxu0 0
  %461 = vmatpush1.bf16.msra.mxu0 0
  %462 = vmatprep.subr.bf16.mxu0 0
  %463 = vmatpush1.bf16.msra.mxu0 0
  %464 = vmatprep.subr.bf16.mxu0 0
  %465 = vmatpush1.bf16.msra.mxu0 0
  %466 = vmatprep.subr.bf16.mxu0 0
  %467 = vmatpush1.bf16.msra.mxu0 0
  %468 = vmatprep.subr.bf16.mxu0 0
  %469 = vmatpush1.bf16.msra.mxu0 0
  %470 = vmatprep.subr.bf16.mxu0 0
  %471 = vmatpush1.bf16.msra.mxu0 0
  %472 = vmatprep.subr.bf16.mxu0 0
  %473 = vmatpush1.bf16.msra.mxu0 0
  %474 = vmatprep.subr.bf16.mxu0 0
  %475 = vmatpush1.bf16.msra.mxu0 0
  %476 = vmatprep.subr.bf16.mxu0 0
  %477 = vmatpush1.bf16.msra.mxu0 0
  %478 = vmatprep.subr.bf16.mxu0 0
  %479 = vmatpush1.bf16.msra.mxu0 0
  %480 = vmatprep.subr.bf16.mxu0 0
  %481 = vmatpush1.bf16.msra.mxu0 0
  %482 = vmatprep.subr.bf16.mxu0 0
  %483 = vmatpush1.bf16.msra.mxu0 0
  %484 = vmatprep.subr.bf16.mxu0 0
  %485 = vmatpush1.bf16.msra.mxu0 0
  %486 = vmatprep.subr.bf16.mxu0 0
  %487 = vmatpush1.bf16.msra.mxu0 0
  %488 = vmatprep.mubr.bf16.mxu0 0
  %489 = vmatmul.mubr.bf16.gmra.mrb[0].mxu0 %v454
  %v490 = vpop.f32.mrb[0].mxu0
  %v491 = vadd.f32 0.0, %v490
  %v492 = vpop.f32.mrb[0].mxu0
  %v493 = vpop.f32.mrb[0].mxu0
  %v494 = vpop.f32.mrb[0].mxu0
  %495 = vdwg.mxu0
  %v496 = vadd.f32 %v448, %v491
  %v497 = vxor.u32 %v496, 2147483648
  %v498 = vmul.f32 %v497, 1.442695
  %v499 = vpow.pop %v498
  %v500 = vadd.f32 %v499, 1.0
  %v501 = vrcp.pop %v500
  %v502 = vmul.f32 1.0, %v501
  %v503 = vtanh.pop %v496
  %v504 = vmul.f32 %v502, %v350
  %506 = vrot.lane.b32.xlu0 %v503, 64
  %v507 = vpop.permute.xlu0 %506
  %v509 = vmul.f32 %v502, %v507
  %511 = vrot.lane.b32.xlu0 %v509, 32
  %v512 = vpop.permute.xlu0 %511
  %v514 = vadd.f32 %v504, %v512
  %v515 = vtanh.pop %v514
  %517 = vrot.lane.b32.xlu0 %v515, 64
  %v518 = vpop.permute.xlu0 %517
  %v520 = vmul.f32 %v502, %v518
  %522 = vrot.lane.b32.xlu0 %v520, 32
  %v523 = vpop.permute.xlu0 %522
  %s525 = scalar_lea.vmem [#allocation4], 8
  %526 = vst.msk [vmem:[%s525] sm:$0xff] %vm86, %v523
  %s527 = scalar_lea.vmem [#allocation3], 48
  %v528 = vld [vmem:[%s527] sm:$0xff]
  %v529 = vpack.c.bf16 %v440, %v440
  %531 = vrot.lane.b32.xlu0 %v529, 32
  %v532 = vpop.permute.xlu0 %531
  %v534 = vsel %vm86, %v532, 0
  %536 = vmatprep.subr.bf16.mxu0 0
  %537 = vmatpush1.bf16.msra.mxu0 %v372
  %538 = vmatprep.subr.bf16.mxu0 0
  %539 = vmatpush1.bf16.msra.mxu0 %v373
  %540 = vmatprep.subr.bf16.mxu0 0
  %541 = vmatpush1.bf16.msra.mxu0 0
  %542 = vmatprep.subr.bf16.mxu0 0
  %543 = vmatpush1.bf16.msra.mxu0 0
  %544 = vmatprep.subr.bf16.mxu0 0
  %545 = vmatpush1.bf16.msra.mxu0 0
  %546 = vmatprep.subr.bf16.mxu0 0
  %547 = vmatpush1.bf16.msra.mxu0 0
  %548 = vmatprep.subr.bf16.mxu0 0
  %549 = vmatpush1.bf16.msra.mxu0 0
  %550 = vmatprep.subr.bf16.mxu0 0
  %551 = vmatpush1.bf16.msra.mxu0 0
  %552 = vmatprep.subr.bf16.mxu0 0
  %553 = vmatpush1.bf16.msra.mxu0 0
  %554 = vmatprep.subr.bf16.mxu0 0
  %555 = vmatpush1.bf16.msra.mxu0 0
  %556 = vmatprep.subr.bf16.mxu0 0
  %557 = vmatpush1.bf16.msra.mxu0 0
  %558 = vmatprep.subr.bf16.mxu0 0
  %559 = vmatpush1.bf16.msra.mxu0 0
  %560 = vmatprep.subr.bf16.mxu0 0
  %561 = vmatpush1.bf16.msra.mxu0 0
  %562 = vmatprep.subr.bf16.mxu0 0
  %563 = vmatpush1.bf16.msra.mxu0 0
  %564 = vmatprep.subr.bf16.mxu0 0
  %565 = vmatpush1.bf16.msra.mxu0 0
  %566 = vmatprep.subr.bf16.mxu0 0
  %567 = vmatpush1.bf16.msra.mxu0 0
  %568 = vmatprep.mubr.bf16.mxu0 0
  %569 = vmatmul.mubr.bf16.gmra.mrb[0].mxu0 %v534
  %v570 = vpop.f32.mrb[0].mxu0
  %v571 = vadd.f32 0.0, %v570
  %v572 = vpop.f32.mrb[0].mxu0
  %v573 = vpop.f32.mrb[0].mxu0
  %v574 = vpop.f32.mrb[0].mxu0
  %575 = vdwg.mxu0
  %v576 = vadd.f32 %v528, %v571
  %v577 = vxor.u32 %v576, 2147483648
  %v578 = vmul.f32 %v577, 1.442695
  %v579 = vpow.pop %v578
  %v580 = vadd.f32 %v579, 1.0
  %v581 = vrcp.pop %v580
  %v582 = vmul.f32 1.0, %v581
  %v583 = vtanh.pop %v576
  %v584 = vmul.f32 %v582, %v434
  %586 = vrot.lane.b32.xlu0 %v583, 64
  %v587 = vpop.permute.xlu0 %586
  %v589 = vmul.f32 %v582, %v587
  %591 = vrot.lane.b32.xlu0 %v589, 32
  %v592 = vpop.permute.xlu0 %591
  %v594 = vadd.f32 %v584, %v592
  %v595 = vtanh.pop %v594
  %597 = vrot.lane.b32.xlu0 %v595, 64
  %v598 = vpop.permute.xlu0 %597
  %v600 = vmul.f32 %v582, %v598
  %602 = vrot.lane.b32.xlu0 %v600, 32
  %v603 = vpop.permute.xlu0 %602
  %s605 = scalar_lea.vmem [#allocation5], 48
  %606 = vst.msk [vmem:[%s605] sm:$0xff] %vm86, %v603
  %s607 = scalar_lea.vmem [#allocation2], 16
  %v608 = vld [vmem:[%s607] sm:$0xff]
  %v609 = vpack.c.bf16 %v520, %v520
  %611 = vrot.lane.b32.xlu0 %v609, 32
  %v612 = vpop.permute.xlu0 %611
  %v614 = vsel %vm86, %v612, 0
  %616 = vmatprep.subr.bf16.mxu0 0
  %617 = vmatpush1.bf16.msra.mxu0 %v285
  %618 = vmatprep.subr.bf16.mxu0 0
  %619 = vmatpush1.bf16.msra.mxu0 %v286
  %620 = vmatprep.subr.bf16.mxu0 0
  %621 = vmatpush1.bf16.msra.mxu0 0
  %622 = vmatprep.subr.bf16.mxu0 0
  %623 = vmatpush1.bf16.msra.mxu0 0
  %624 = vmatprep.subr.bf16.mxu0 0
  %625 = vmatpush1.bf16.msra.mxu0 0
  %626 = vmatprep.subr.bf16.mxu0 0
  %627 = vmatpush1.bf16.msra.mxu0 0
  %628 = vmatprep.subr.bf16.mxu0 0
  %629 = vmatpush1.bf16.msra.mxu0 0
  %630 = vmatprep.subr.bf16.mxu0 0
  %631 = vmatpush1.bf16.msra.mxu0 0
  %632 = vmatprep.subr.bf16.mxu0 0
  %633 = vmatpush1.bf16.msra.mxu0 0
  %634 = vmatprep.subr.bf16.mxu0 0
  %635 = vmatpush1.bf16.msra.mxu0 0
  %636 = vmatprep.subr.bf16.mxu0 0
  %637 = vmatpush1.bf16.msra.mxu0 0
  %638 = vmatprep.subr.bf16.mxu0 0
  %639 = vmatpush1.bf16.msra.mxu0 0
  %640 = vmatprep.subr.bf16.mxu0 0
  %641 = vmatpush1.bf16.msra.mxu0 0
  %642 = vmatprep.subr.bf16.mxu0 0
  %643 = vmatpush1.bf16.msra.mxu0 0
  %644 = vmatprep.subr.bf16.mxu0 0
  %645 = vmatpush1.bf16.msra.mxu0 0
  %646 = vmatprep.subr.bf16.mxu0 0
  %647 = vmatpush1.bf16.msra.mxu0 0
  %648 = vmatprep.mubr.bf16.mxu0 0
  %649 = vmatmul.mubr.bf16.gmra.mrb[0].mxu0 %v614
  %v650 = vpop.f32.mrb[0].mxu0
  %v651 = vadd.f32 0.0, %v650
  %v652 = vpop.f32.mrb[0].mxu0
  %v653 = vpop.f32.mrb[0].mxu0
  %v654 = vpop.f32.mrb[0].mxu0
  %655 = vdwg.mxu0
  %v656 = vadd.f32 %v608, %v651
  %v657 = vxor.u32 %v656, 2147483648
  %v658 = vmul.f32 %v657, 1.442695
  %v659 = vpow.pop %v658
  %v660 = vadd.f32 %v659, 1.0
  %v661 = vrcp.pop %v660
  %v662 = vmul.f32 1.0, %v661
  %v663 = vtanh.pop %v656
  %v664 = vmul.f32 %v662, %v514
  %666 = vrot.lane.b32.xlu0 %v663, 64
  %v667 = vpop.permute.xlu0 %666
  %v669 = vmul.f32 %v662, %v667
  %671 = vrot.lane.b32.xlu0 %v669, 32
  %v672 = vpop.permute.xlu0 %671
  %v674 = vadd.f32 %v664, %v672
  %v675 = vtanh.pop %v674
  %677 = vrot.lane.b32.xlu0 %v675, 64
  %v678 = vpop.permute.xlu0 %677
  %v680 = vmul.f32 %v662, %v678
  %682 = vrot.lane.b32.xlu0 %v680, 32
  %v683 = vpop.permute.xlu0 %682
  %s685 = scalar_lea.vmem [#allocation4], 16
  %686 = vst.msk [vmem:[%s685] sm:$0xff] %vm86, %v683
  %s687 = scalar_lea.vmem [#allocation3], 40
  %v688 = vld [vmem:[%s687] sm:$0xff]
  %v689 = vpack.c.bf16 %v600, %v600
  %691 = vrot.lane.b32.xlu0 %v689, 32
  %v692 = vpop.permute.xlu0 %691
  %v694 = vsel %vm86, %v692, 0
  %696 = vmatprep.subr.bf16.mxu0 0
  %697 = vmatpush1.bf16.msra.mxu0 %v372
  %698 = vmatprep.subr.bf16.mxu0 0
  %699 = vmatpush1.bf16.msra.mxu0 %v373
  %700 = vmatprep.subr.bf16.mxu0 0
  %701 = vmatpush1.bf16.msra.mxu0 0
  %702 = vmatprep.subr.bf16.mxu0 0
  %703 = vmatpush1.bf16.msra.mxu0 0
  %704 = vmatprep.subr.bf16.mxu0 0
  %705 = vmatpush1.bf16.msra.mxu0 0
  %706 = vmatprep.subr.bf16.mxu0 0
  %707 = vmatpush1.bf16.msra.mxu0 0
  %708 = vmatprep.subr.bf16.mxu0 0
  %709 = vmatpush1.bf16.msra.mxu0 0
  %710 = vmatprep.subr.bf16.mxu0 0
  %711 = vmatpush1.bf16.msra.mxu0 0
  %712 = vmatprep.subr.bf16.mxu0 0
  %713 = vmatpush1.bf16.msra.mxu0 0
  %714 = vmatprep.subr.bf16.mxu0 0
  %715 = vmatpush1.bf16.msra.mxu0 0
  %716 = vmatprep.subr.bf16.mxu0 0
  %717 = vmatpush1.bf16.msra.mxu0 0
  %718 = vmatprep.subr.bf16.mxu0 0
  %719 = vmatpush1.bf16.msra.mxu0 0
  %720 = vmatprep.subr.bf16.mxu0 0
  %721 = vmatpush1.bf16.msra.mxu0 0
  %722 = vmatprep.subr.bf16.mxu0 0
  %723 = vmatpush1.bf16.msra.mxu0 0
  %724 = vmatprep.subr.bf16.mxu0 0
  %725 = vmatpush1.bf16.msra.mxu0 0
  %726 = vmatprep.subr.bf16.mxu0 0
  %727 = vmatpush1.bf16.msra.mxu0 0
  %728 = vmatprep.mubr.bf16.mxu0 0
  %729 = vmatmul.mubr.bf16.gmra.mrb[0].mxu0 %v694
  %v730 = vpop.f32.mrb[0].mxu0
  %v731 = vadd.f32 0.0, %v730
  %v732 = vpop.f32.mrb[0].mxu0
  %v733 = vpop.f32.mrb[0].mxu0
  %v734 = vpop.f32.mrb[0].mxu0
  %735 = vdwg.mxu0
  %v736 = vadd.f32 %v688, %v731
  %v737 = vxor.u32 %v736, 2147483648
  %v738 = vmul.f32 %v737, 1.442695
  %v739 = vpow.pop %v738
  %v740 = vadd.f32 %v739, 1.0
  %v741 = vrcp.pop %v740
  %v742 = vmul.f32 1.0, %v741
  %v743 = vtanh.pop %v736
  %v744 = vmul.f32 %v742, %v594
  %746 = vrot.lane.b32.xlu0 %v743, 64
  %v747 = vpop.permute.xlu0 %746
  %v749 = vmul.f32 %v742, %v747
  %751 = vrot.lane.b32.xlu0 %v749, 32
  %v752 = vpop.permute.xlu0 %751
  %v754 = vadd.f32 %v744, %v752
  %v755 = vtanh.pop %v754
  %757 = vrot.lane.b32.xlu0 %v755, 64
  %v758 = vpop.permute.xlu0 %757
  %v760 = vmul.f32 %v742, %v758
  %762 = vrot.lane.b32.xlu0 %v760, 32
  %v763 = vpop.permute.xlu0 %762
  %s765 = scalar_lea.vmem [#allocation5], 40
  %766 = vst.msk [vmem:[%s765] sm:$0xff] %vm86, %v763
  %s767 = scalar_lea.vmem [#allocation2], 24
  %v768 = vld [vmem:[%s767] sm:$0xff]
  %v769 = vpack.c.bf16 %v680, %v680
  %771 = vrot.lane.b32.xlu0 %v769, 32
  %v772 = vpop.permute.xlu0 %771
  %v774 = vsel %vm86, %v772, 0
  %776 = vmatprep.subr.bf16.mxu0 0
  %777 = vmatpush1.bf16.msra.mxu0 %v285
  %778 = vmatprep.subr.bf16.mxu0 0
  %779 = vmatpush1.bf16.msra.mxu0 %v286
  %780 = vmatprep.subr.bf16.mxu0 0
  %781 = vmatpush1.bf16.msra.mxu0 0
  %782 = vmatprep.subr.bf16.mxu0 0
  %783 = vmatpush1.bf16.msra.mxu0 0
  %784 = vmatprep.subr.bf16.mxu0 0
  %785 = vmatpush1.bf16.msra.mxu0 0
  %786 = vmatprep.subr.bf16.mxu0 0
  %787 = vmatpush1.bf16.msra.mxu0 0
  %788 = vmatprep.subr.bf16.mxu0 0
  %789 = vmatpush1.bf16.msra.mxu0 0
  %790 = vmatprep.subr.bf16.mxu0 0
  %791 = vmatpush1.bf16.msra.mxu0 0
  %792 = vmatprep.subr.bf16.mxu0 0
  %793 = vmatpush1.bf16.msra.mxu0 0
  %794 = vmatprep.subr.bf16.mxu0 0
  %795 = vmatpush1.bf16.msra.mxu0 0
  %796 = vmatprep.subr.bf16.mxu0 0
  %797 = vmatpush1.bf16.msra.mxu0 0
  %798 = vmatprep.subr.bf16.mxu0 0
  %799 = vmatpush1.bf16.msra.mxu0 0
  %800 = vmatprep.subr.bf16.mxu0 0
  %801 = vmatpush1.bf16.msra.mxu0 0
  %802 = vmatprep.subr.bf16.mxu0 0
  %803 = vmatpush1.bf16.msra.mxu0 0
  %804 = vmatprep.subr.bf16.mxu0 0
  %805 = vmatpush1.bf16.msra.mxu0 0
  %806 = vmatprep.subr.bf16.mxu0 0
  %807 = vmatpush1.bf16.msra.mxu0 0
  %808 = vmatprep.mubr.bf16.mxu0 0
  %809 = vmatmul.mubr.bf16.gmra.mrb[0].mxu0 %v774
  %v810 = vpop.f32.mrb[0].mxu0
  %v811 = vadd.f32 0.0, %v810
  %v812 = vpop.f32.mrb[0].mxu0
  %v813 = vpop.f32.mrb[0].mxu0
  %v814 = vpop.f32.mrb[0].mxu0
  %815 = vdwg.mxu0
  %v816 = vadd.f32 %v768, %v811
  %v817 = vxor.u32 %v816, 2147483648
  %v818 = vmul.f32 %v817, 1.442695
  %v819 = vpow.pop %v818
  %v820 = vadd.f32 %v819, 1.0
  %v821 = vrcp.pop %v820
  %v822 = vmul.f32 1.0, %v821
  %v823 = vtanh.pop %v816
  %v824 = vmul.f32 %v822, %v674
  %826 = vrot.lane.b32.xlu0 %v823, 64
  %v827 = vpop.permute.xlu0 %826
  %v829 = vmul.f32 %v822, %v827
  %831 = vrot.lane.b32.xlu0 %v829, 32
  %v832 = vpop.permute.xlu0 %831
  %v834 = vadd.f32 %v824, %v832
  %v835 = vtanh.pop %v834
  %837 = vrot.lane.b32.xlu0 %v835, 64
  %v838 = vpop.permute.xlu0 %837
  %v840 = vmul.f32 %v822, %v838
  %842 = vrot.lane.b32.xlu0 %v840, 32
  %v843 = vpop.permute.xlu0 %842
  %s845 = scalar_lea.vmem [#allocation4], 24
  %846 = vst.msk [vmem:[%s845] sm:$0xff] %vm86, %v843
  %s847 = scalar_lea.vmem [#allocation3], 32
  %v848 = vld [vmem:[%s847] sm:$0xff]
  %v849 = vpack.c.bf16 %v760, %v760
  %851 = vrot.lane.b32.xlu0 %v849, 32
  %v852 = vpop.permute.xlu0 %851
  %v854 = vsel %vm86, %v852, 0
  %856 = vmatprep.subr.bf16.mxu0 0
  %857 = vmatpush1.bf16.msra.mxu0 %v372
  %858 = vmatprep.subr.bf16.mxu0 0
  %859 = vmatpush1.bf16.msra.mxu0 %v373
  %860 = vmatprep.subr.bf16.mxu0 0
  %861 = vmatpush1.bf16.msra.mxu0 0
  %862 = vmatprep.subr.bf16.mxu0 0
  %863 = vmatpush1.bf16.msra.mxu0 0
  %864 = vmatprep.subr.bf16.mxu0 0
  %865 = vmatpush1.bf16.msra.mxu0 0
  %866 = vmatprep.subr.bf16.mxu0 0
  %867 = vmatpush1.bf16.msra.mxu0 0
  %868 = vmatprep.subr.bf16.mxu0 0
  %869 = vmatpush1.bf16.msra.mxu0 0
  %870 = vmatprep.subr.bf16.mxu0 0
  %871 = vmatpush1.bf16.msra.mxu0 0
  %872 = vmatprep.subr.bf16.mxu0 0
  %873 = vmatpush1.bf16.msra.mxu0 0
  %874 = vmatprep.subr.bf16.mxu0 0
  %875 = vmatpush1.bf16.msra.mxu0 0
  %876 = vmatprep.subr.bf16.mxu0 0
  %877 = vmatpush1.bf16.msra.mxu0 0
  %878 = vmatprep.subr.bf16.mxu0 0
  %879 = vmatpush1.bf16.msra.mxu0 0
  %880 = vmatprep.subr.bf16.mxu0 0
  %881 = vmatpush1.bf16.msra.mxu0 0
  %882 = vmatprep.subr.bf16.mxu0 0
  %883 = vmatpush1.bf16.msra.mxu0 0
  %884 = vmatprep.subr.bf16.mxu0 0
  %885 = vmatpush1.bf16.msra.mxu0 0
  %886 = vmatprep.subr.bf16.mxu0 0
  %887 = vmatpush1.bf16.msra.mxu0 0
  %888 = vmatprep.mubr.bf16.mxu0 0
  %889 = vmatmul.mubr.bf16.gmra.mrb[0].mxu0 %v854
  %v890 = vpop.f32.mrb[0].mxu0
  %v891 = vadd.f32 0.0, %v890
  %v892 = vpop.f32.mrb[0].mxu0
  %v893 = vpop.f32.mrb[0].mxu0
  %v894 = vpop.f32.mrb[0].mxu0
  %895 = vdwg.mxu0
  %v896 = vadd.f32 %v848, %v891
  %v897 = vxor.u32 %v896, 2147483648
  %v898 = vmul.f32 %v897, 1.442695
  %v899 = vpow.pop %v898
  %v900 = vadd.f32 %v899, 1.0
  %v901 = vrcp.pop %v900
  %v902 = vmul.f32 1.0, %v901
  %v903 = vtanh.pop %v896
  %v904 = vmul.f32 %v902, %v754
  %906 = vrot.lane.b32.xlu0 %v903, 64
  %v907 = vpop.permute.xlu0 %906
  %v909 = vmul.f32 %v902, %v907
  %911 = vrot.lane.b32.xlu0 %v909, 32
  %v912 = vpop.permute.xlu0 %911
  %v914 = vadd.f32 %v904, %v912
  %v915 = vtanh.pop %v914
  %917 = vrot.lane.b32.xlu0 %v915, 64
  %v918 = vpop.permute.xlu0 %917
  %v920 = vmul.f32 %v902, %v918
  %922 = vrot.lane.b32.xlu0 %v920, 32
  %v923 = vpop.permute.xlu0 %922
  %s925 = scalar_lea.vmem [#allocation5], 32
  %926 = vst.msk [vmem:[%s925] sm:$0xff] %vm86, %v923
  %s927 = scalar_lea.vmem [#allocation2], 32
  %v928 = vld [vmem:[%s927] sm:$0xff]
  %v929 = vpack.c.bf16 %v840, %v840
  %931 = vrot.lane.b32.xlu0 %v929, 32
  %v932 = vpop.permute.xlu0 %931
  %v934 = vsel %vm86, %v932, 0
  %936 = vmatprep.subr.bf16.mxu0 0
  %937 = vmatpush1.bf16.msra.mxu0 %v285
  %938 = vmatprep.subr.bf16.mxu0 0
  %939 = vmatpush1.bf16.msra.mxu0 %v286
  %940 = vmatprep.subr.bf16.mxu0 0
  %941 = vmatpush1.bf16.msra.mxu0 0
  %942 = vmatprep.subr.bf16.mxu0 0
  %943 = vmatpush1.bf16.msra.mxu0 0
  %944 = vmatprep.subr.bf16.mxu0 0
  %945 = vmatpush1.bf16.msra.mxu0 0
  %946 = vmatprep.subr.bf16.mxu0 0
  %947 = vmatpush1.bf16.msra.mxu0 0
  %948 = vmatprep.subr.bf16.mxu0 0
  %949 = vmatpush1.bf16.msra.mxu0 0
  %950 = vmatprep.subr.bf16.mxu0 0
  %951 = vmatpush1.bf16.msra.mxu0 0
  %952 = vmatprep.subr.bf16.mxu0 0
  %953 = vmatpush1.bf16.msra.mxu0 0
  %954 = vmatprep.subr.bf16.mxu0 0
  %955 = vmatpush1.bf16.msra.mxu0 0
  %956 = vmatprep.subr.bf16.mxu0 0
  %957 = vmatpush1.bf16.msra.mxu0 0
  %958 = vmatprep.subr.bf16.mxu0 0
  %959 = vmatpush1.bf16.msra.mxu0 0
  %960 = vmatprep.subr.bf16.mxu0 0
  %961 = vmatpush1.bf16.msra.mxu0 0
  %962 = vmatprep.subr.bf16.mxu0 0
  %963 = vmatpush1.bf16.msra.mxu0 0
  %964 = vmatprep.subr.bf16.mxu0 0
  %965 = vmatpush1.bf16.msra.mxu0 0
  %966 = vmatprep.subr.bf16.mxu0 0
  %967 = vmatpush1.bf16.msra.mxu0 0
  %968 = vmatprep.mubr.bf16.mxu0 0
  %969 = vmatmul.mubr.bf16.gmra.mrb[0].mxu0 %v934
  %v970 = vpop.f32.mrb[0].mxu0
  %v971 = vadd.f32 0.0, %v970
  %v972 = vpop.f32.mrb[0].mxu0
  %v973 = vpop.f32.mrb[0].mxu0
  %v974 = vpop.f32.mrb[0].mxu0
  %975 = vdwg.mxu0
  %v976 = vadd.f32 %v928, %v971
  %v977 = vxor.u32 %v976, 2147483648
  %v978 = vmul.f32 %v977, 1.442695
  %v979 = vpow.pop %v978
  %v980 = vadd.f32 %v979, 1.0
  %v981 = vrcp.pop %v980
  %v982 = vmul.f32 1.0, %v981
  %v983 = vtanh.pop %v976
  %v984 = vmul.f32 %v982, %v834
  %986 = vrot.lane.b32.xlu0 %v983, 64
  %v987 = vpop.permute.xlu0 %986
  %v989 = vmul.f32 %v982, %v987
  %991 = vrot.lane.b32.xlu0 %v989, 32
  %v992 = vpop.permute.xlu0 %991
  %v994 = vadd.f32 %v984, %v992
  %v995 = vtanh.pop %v994
  %997 = vrot.lane.b32.xlu0 %v995, 64
  %v998 = vpop.permute.xlu0 %997
  %v1000 = vmul.f32 %v982, %v998
  %1002 = vrot.lane.b32.xlu0 %v1000, 32
  %v1003 = vpop.permute.xlu0 %1002
  %s1005 = scalar_lea.vmem [#allocation4], 32
  %1006 = vst.msk [vmem:[%s1005] sm:$0xff] %vm86, %v1003
  %s1007 = scalar_lea.vmem [#allocation3], 24
  %v1008 = vld [vmem:[%s1007] sm:$0xff]
  %v1009 = vpack.c.bf16 %v920, %v920
  %1011 = vrot.lane.b32.xlu0 %v1009, 32
  %v1012 = vpop.permute.xlu0 %1011
  %v1014 = vsel %vm86, %v1012, 0
  %1016 = vmatprep.subr.bf16.mxu0 0
  %1017 = vmatpush1.bf16.msra.mxu0 %v372
  %1018 = vmatprep.subr.bf16.mxu0 0
  %1019 = vmatpush1.bf16.msra.mxu0 %v373
  %1020 = vmatprep.subr.bf16.mxu0 0
  %1021 = vmatpush1.bf16.msra.mxu0 0
  %1022 = vmatprep.subr.bf16.mxu0 0
  %1023 = vmatpush1.bf16.msra.mxu0 0
  %1024 = vmatprep.subr.bf16.mxu0 0
  %1025 = vmatpush1.bf16.msra.mxu0 0
  %1026 = vmatprep.subr.bf16.mxu0 0
  %1027 = vmatpush1.bf16.msra.mxu0 0
  %1028 = vmatprep.subr.bf16.mxu0 0
  %1029 = vmatpush1.bf16.msra.mxu0 0
  %1030 = vmatprep.subr.bf16.mxu0 0
  %1031 = vmatpush1.bf16.msra.mxu0 0
  %1032 = vmatprep.subr.bf16.mxu0 0
  %1033 = vmatpush1.bf16.msra.mxu0 0
  %1034 = vmatprep.subr.bf16.mxu0 0
  %1035 = vmatpush1.bf16.msra.mxu0 0
  %1036 = vmatprep.subr.bf16.mxu0 0
  %1037 = vmatpush1.bf16.msra.mxu0 0
  %1038 = vmatprep.subr.bf16.mxu0 0
  %1039 = vmatpush1.bf16.msra.mxu0 0
  %1040 = vmatprep.subr.bf16.mxu0 0
  %1041 = vmatpush1.bf16.msra.mxu0 0
  %1042 = vmatprep.subr.bf16.mxu0 0
  %1043 = vmatpush1.bf16.msra.mxu0 0
  %1044 = vmatprep.subr.bf16.mxu0 0
  %1045 = vmatpush1.bf16.msra.mxu0 0
  %1046 = vmatprep.subr.bf16.mxu0 0
  %1047 = vmatpush1.bf16.msra.mxu0 0
  %1048 = vmatprep.mubr.bf16.mxu0 0
  %1049 = vmatmul.mubr.bf16.gmra.mrb[0].mxu0 %v1014
  %v1050 = vpop.f32.mrb[0].mxu0
  %v1051 = vadd.f32 0.0, %v1050
  %v1052 = vpop.f32.mrb[0].mxu0
  %v1053 = vpop.f32.mrb[0].mxu0
  %v1054 = vpop.f32.mrb[0].mxu0
  %1055 = vdwg.mxu0
  %v1056 = vadd.f32 %v1008, %v1051
  %v1057 = vxor.u32 %v1056, 2147483648
  %v1058 = vmul.f32 %v1057, 1.442695
  %v1059 = vpow.pop %v1058
  %v1060 = vadd.f32 %v1059, 1.0
  %v1061 = vrcp.pop %v1060
  %v1062 = vmul.f32 1.0, %v1061
  %v1063 = vtanh.pop %v1056
  %v1064 = vmul.f32 %v1062, %v914
  %1066 = vrot.lane.b32.xlu0 %v1063, 64
  %v1067 = vpop.permute.xlu0 %1066
  %v1069 = vmul.f32 %v1062, %v1067
  %1071 = vrot.lane.b32.xlu0 %v1069, 32
  %v1072 = vpop.permute.xlu0 %1071
  %v1074 = vadd.f32 %v1064, %v1072
  %v1075 = vtanh.pop %v1074
  %1077 = vrot.lane.b32.xlu0 %v1075, 64
  %v1078 = vpop.permute.xlu0 %1077
  %v1080 = vmul.f32 %v1062, %v1078
  %1082 = vrot.lane.b32.xlu0 %v1080, 32
  %v1083 = vpop.permute.xlu0 %1082
  %s1085 = scalar_lea.vmem [#allocation5], 24
  %1086 = vst.msk [vmem:[%s1085] sm:$0xff] %vm86, %v1083
  %s1087 = scalar_lea.vmem [#allocation2], 40
  %v1088 = vld [vmem:[%s1087] sm:$0xff]
  %v1089 = vpack.c.bf16 %v1000, %v1000
  %1091 = vrot.lane.b32.xlu0 %v1089, 32
  %v1092 = vpop.permute.xlu0 %1091
  %v1094 = vsel %vm86, %v1092, 0
  %1096 = vmatprep.subr.bf16.mxu0 0
  %1097 = vmatpush1.bf16.msra.mxu0 %v285
  %1098 = vmatprep.subr.bf16.mxu0 0
  %1099 = vmatpush1.bf16.msra.mxu0 %v286
  %1100 = vmatprep.subr.bf16.mxu0 0
  %1101 = vmatpush1.bf16.msra.mxu0 0
  %1102 = vmatprep.subr.bf16.mxu0 0
  %1103 = vmatpush1.bf16.msra.mxu0 0
  %1104 = vmatprep.subr.bf16.mxu0 0
  %1105 = vmatpush1.bf16.msra.mxu0 0
  %1106 = vmatprep.subr.bf16.mxu0 0
  %1107 = vmatpush1.bf16.msra.mxu0 0
  %1108 = vmatprep.subr.bf16.mxu0 0
  %1109 = vmatpush1.bf16.msra.mxu0 0
  %1110 = vmatprep.subr.bf16.mxu0 0
  %1111 = vmatpush1.bf16.msra.mxu0 0
  %1112 = vmatprep.subr.bf16.mxu0 0
  %1113 = vmatpush1.bf16.msra.mxu0 0
  %1114 = vmatprep.subr.bf16.mxu0 0
  %1115 = vmatpush1.bf16.msra.mxu0 0
  %1116 = vmatprep.subr.bf16.mxu0 0
  %1117 = vmatpush1.bf16.msra.mxu0 0
  %1118 = vmatprep.subr.bf16.mxu0 0
  %1119 = vmatpush1.bf16.msra.mxu0 0
  %1120 = vmatprep.subr.bf16.mxu0 0
  %1121 = vmatpush1.bf16.msra.mxu0 0
  %1122 = vmatprep.subr.bf16.mxu0 0
  %1123 = vmatpush1.bf16.msra.mxu0 0
  %1124 = vmatprep.subr.bf16.mxu0 0
  %1125 = vmatpush1.bf16.msra.mxu0 0
  %1126 = vmatprep.subr.bf16.mxu0 0
  %1127 = vmatpush1.bf16.msra.mxu0 0
  %1128 = vmatprep.mubr.bf16.mxu0 0
  %1129 = vmatmul.mubr.bf16.gmra.mrb[0].mxu0 %v1094
  %v1130 = vpop.f32.mrb[0].mxu0
  %v1131 = vadd.f32 0.0, %v1130
  %v1132 = vpop.f32.mrb[0].mxu0
  %v1133 = vpop.f32.mrb[0].mxu0
  %v1134 = vpop.f32.mrb[0].mxu0
  %1135 = vdwg.mxu0
  %v1136 = vadd.f32 %v1088, %v1131
  %v1137 = vxor.u32 %v1136, 2147483648
  %v1138 = vmul.f32 %v1137, 1.442695
  %v1139 = vpow.pop %v1138
  %v1140 = vadd.f32 %v1139, 1.0
  %v1141 = vrcp.pop %v1140
  %v1142 = vmul.f32 1.0, %v1141
  %v1143 = vtanh.pop %v1136
  %v1144 = vmul.f32 %v1142, %v994
  %1146 = vrot.lane.b32.xlu0 %v1143, 64
  %v1147 = vpop.permute.xlu0 %1146
  %v1149 = vmul.f32 %v1142, %v1147
  %1151 = vrot.lane.b32.xlu0 %v1149, 32
  %v1152 = vpop.permute.xlu0 %1151
  %v1154 = vadd.f32 %v1144, %v1152
  %v1155 = vtanh.pop %v1154
  %1157 = vrot.lane.b32.xlu0 %v1155, 64
  %v1158 = vpop.permute.xlu0 %1157
  %v1160 = vmul.f32 %v1142, %v1158
  %1162 = vrot.lane.b32.xlu0 %v1160, 32
  %v1163 = vpop.permute.xlu0 %1162
  %s1165 = scalar_lea.vmem [#allocation4], 40
  %1166 = vst.msk [vmem:[%s1165] sm:$0xff] %vm86, %v1163
  %s1167 = scalar_lea.vmem [#allocation3], 16
  %v1168 = vld [vmem:[%s1167] sm:$0xff]
  %v1169 = vpack.c.bf16 %v1080, %v1080
  %1171 = vrot.lane.b32.xlu0 %v1169, 32
  %v1172 = vpop.permute.xlu0 %1171
  %v1174 = vsel %vm86, %v1172, 0
  %1176 = vmatprep.subr.bf16.mxu0 0
  %1177 = vmatpush1.bf16.msra.mxu0 %v372
  %1178 = vmatprep.subr.bf16.mxu0 0
  %1179 = vmatpush1.bf16.msra.mxu0 %v373
  %1180 = vmatprep.subr.bf16.mxu0 0
  %1181 = vmatpush1.bf16.msra.mxu0 0
  %1182 = vmatprep.subr.bf16.mxu0 0
  %1183 = vmatpush1.bf16.msra.mxu0 0
  %1184 = vmatprep.subr.bf16.mxu0 0
  %1185 = vmatpush1.bf16.msra.mxu0 0
  %1186 = vmatprep.subr.bf16.mxu0 0
  %1187 = vmatpush1.bf16.msra.mxu0 0
  %1188 = vmatprep.subr.bf16.mxu0 0
  %1189 = vmatpush1.bf16.msra.mxu0 0
  %1190 = vmatprep.subr.bf16.mxu0 0
  %1191 = vmatpush1.bf16.msra.mxu0 0
  %1192 = vmatprep.subr.bf16.mxu0 0
  %1193 = vmatpush1.bf16.msra.mxu0 0
  %1194 = vmatprep.subr.bf16.mxu0 0
  %1195 = vmatpush1.bf16.msra.mxu0 0
  %1196 = vmatprep.subr.bf16.mxu0 0
  %1197 = vmatpush1.bf16.msra.mxu0 0
  %1198 = vmatprep.subr.bf16.mxu0 0
  %1199 = vmatpush1.bf16.msra.mxu0 0
  %1200 = vmatprep.subr.bf16.mxu0 0
  %1201 = vmatpush1.bf16.msra.mxu0 0
  %1202 = vmatprep.subr.bf16.mxu0 0
  %1203 = vmatpush1.bf16.msra.mxu0 0
  %1204 = vmatprep.subr.bf16.mxu0 0
  %1205 = vmatpush1.bf16.msra.mxu0 0
  %1206 = vmatprep.subr.bf16.mxu0 0
  %1207 = vmatpush1.bf16.msra.mxu0 0
  %1208 = vmatprep.mubr.bf16.mxu0 0
  %1209 = vmatmul.mubr.bf16.gmra.mrb[0].mxu0 %v1174
  %v1210 = vpop.f32.mrb[0].mxu0
  %v1211 = vadd.f32 0.0, %v1210
  %v1212 = vpop.f32.mrb[0].mxu0
  %v1213 = vpop.f32.mrb[0].mxu0
  %v1214 = vpop.f32.mrb[0].mxu0
  %1215 = vdwg.mxu0
  %v1216 = vadd.f32 %v1168, %v1211
  %v1217 = vxor.u32 %v1216, 2147483648
  %v1218 = vmul.f32 %v1217, 1.442695
  %v1219 = vpow.pop %v1218
  %v1220 = vadd.f32 %v1219, 1.0
  %v1221 = vrcp.pop %v1220
  %v1222 = vmul.f32 1.0, %v1221
  %v1223 = vtanh.pop %v1216
  %v1224 = vmul.f32 %v1222, %v1074
  %1226 = vrot.lane.b32.xlu0 %v1223, 64
  %v1227 = vpop.permute.xlu0 %1226
  %v1229 = vmul.f32 %v1222, %v1227
  %1231 = vrot.lane.b32.xlu0 %v1229, 32
  %v1232 = vpop.permute.xlu0 %1231
  %v1234 = vadd.f32 %v1224, %v1232
  %v1235 = vtanh.pop %v1234
  %1237 = vrot.lane.b32.xlu0 %v1235, 64
  %v1238 = vpop.permute.xlu0 %1237
  %v1240 = vmul.f32 %v1222, %v1238
  %1242 = vrot.lane.b32.xlu0 %v1240, 32
  %v1243 = vpop.permute.xlu0 %1242
  %s1245 = scalar_lea.vmem [#allocation5], 16
  %1246 = vst.msk [vmem:[%s1245] sm:$0xff] %vm86, %v1243
  %s1247 = scalar_lea.vmem [#allocation2], 48
  %v1248 = vld [vmem:[%s1247] sm:$0xff]
  %v1249 = vpack.c.bf16 %v1160, %v1160
  %1251 = vrot.lane.b32.xlu0 %v1249, 32
  %v1252 = vpop.permute.xlu0 %1251
  %v1254 = vsel %vm86, %v1252, 0
  %1256 = vmatprep.subr.bf16.mxu0 0
  %1257 = vmatpush1.bf16.msra.mxu0 %v285
  %1258 = vmatprep.subr.bf16.mxu0 0
  %1259 = vmatpush1.bf16.msra.mxu0 %v286
  %1260 = vmatprep.subr.bf16.mxu0 0
  %1261 = vmatpush1.bf16.msra.mxu0 0
  %1262 = vmatprep.subr.bf16.mxu0 0
  %1263 = vmatpush1.bf16.msra.mxu0 0
  %1264 = vmatprep.subr.bf16.mxu0 0
  %1265 = vmatpush1.bf16.msra.mxu0 0
  %1266 = vmatprep.subr.bf16.mxu0 0
  %1267 = vmatpush1.bf16.msra.mxu0 0
  %1268 = vmatprep.subr.bf16.mxu0 0
  %1269 = vmatpush1.bf16.msra.mxu0 0
  %1270 = vmatprep.subr.bf16.mxu0 0
  %1271 = vmatpush1.bf16.msra.mxu0 0
  %1272 = vmatprep.subr.bf16.mxu0 0
  %1273 = vmatpush1.bf16.msra.mxu0 0
  %1274 = vmatprep.subr.bf16.mxu0 0
  %1275 = vmatpush1.bf16.msra.mxu0 0
  %1276 = vmatprep.subr.bf16.mxu0 0
  %1277 = vmatpush1.bf16.msra.mxu0 0
  %1278 = vmatprep.subr.bf16.mxu0 0
  %1279 = vmatpush1.bf16.msra.mxu0 0
  %1280 = vmatprep.subr.bf16.mxu0 0
  %1281 = vmatpush1.bf16.msra.mxu0 0
  %1282 = vmatprep.subr.bf16.mxu0 0
  %1283 = vmatpush1.bf16.msra.mxu0 0
  %1284 = vmatprep.subr.bf16.mxu0 0
  %1285 = vmatpush1.bf16.msra.mxu0 0
  %1286 = vmatprep.subr.bf16.mxu0 0
  %1287 = vmatpush1.bf16.msra.mxu0 0
  %1288 = vmatprep.mubr.bf16.mxu0 0
  %1289 = vmatmul.mubr.bf16.gmra.mrb[0].mxu0 %v1254
  %v1290 = vpop.f32.mrb[0].mxu0
  %v1291 = vadd.f32 0.0, %v1290
  %v1292 = vpop.f32.mrb[0].mxu0
  %v1293 = vpop.f32.mrb[0].mxu0
  %v1294 = vpop.f32.mrb[0].mxu0
  %1295 = vdwg.mxu0
  %v1296 = vadd.f32 %v1248, %v1291
  %v1297 = vxor.u32 %v1296, 2147483648
  %v1298 = vmul.f32 %v1297, 1.442695
  %v1299 = vpow.pop %v1298
  %v1300 = vadd.f32 %v1299, 1.0
  %v1301 = vrcp.pop %v1300
  %v1302 = vmul.f32 1.0, %v1301
  %v1303 = vtanh.pop %v1296
  %v1304 = vmul.f32 %v1302, %v1154
  %1306 = vrot.lane.b32.xlu0 %v1303, 64
  %v1307 = vpop.permute.xlu0 %1306
  %v1309 = vmul.f32 %v1302, %v1307
  %1311 = vrot.lane.b32.xlu0 %v1309, 32
  %v1312 = vpop.permute.xlu0 %1311
  %v1314 = vadd.f32 %v1304, %v1312
  %v1315 = vtanh.pop %v1314
  %1317 = vrot.lane.b32.xlu0 %v1315, 64
  %v1318 = vpop.permute.xlu0 %1317
  %v1320 = vmul.f32 %v1302, %v1318
  %1322 = vrot.lane.b32.xlu0 %v1320, 32
  %v1323 = vpop.permute.xlu0 %1322
  %s1325 = scalar_lea.vmem [#allocation4], 48
  %1326 = vst.msk [vmem:[%s1325] sm:$0xff] %vm86, %v1323
  %s1327 = scalar_lea.vmem [#allocation3], 8
  %v1328 = vld [vmem:[%s1327] sm:$0xff]
  %v1329 = vpack.c.bf16 %v1240, %v1240
  %1331 = vrot.lane.b32.xlu0 %v1329, 32
  %v1332 = vpop.permute.xlu0 %1331
  %v1334 = vsel %vm86, %v1332, 0
  %1336 = vmatprep.subr.bf16.mxu0 0
  %1337 = vmatpush1.bf16.msra.mxu0 %v372
  %1338 = vmatprep.subr.bf16.mxu0 0
  %1339 = vmatpush1.bf16.msra.mxu0 %v373
  %1340 = vmatprep.subr.bf16.mxu0 0
  %1341 = vmatpush1.bf16.msra.mxu0 0
  %1342 = vmatprep.subr.bf16.mxu0 0
  %1343 = vmatpush1.bf16.msra.mxu0 0
  %1344 = vmatprep.subr.bf16.mxu0 0
  %1345 = vmatpush1.bf16.msra.mxu0 0
  %1346 = vmatprep.subr.bf16.mxu0 0
  %1347 = vmatpush1.bf16.msra.mxu0 0
  %1348 = vmatprep.subr.bf16.mxu0 0
  %1349 = vmatpush1.bf16.msra.mxu0 0
  %1350 = vmatprep.subr.bf16.mxu0 0
  %1351 = vmatpush1.bf16.msra.mxu0 0
  %1352 = vmatprep.subr.bf16.mxu0 0
  %1353 = vmatpush1.bf16.msra.mxu0 0
  %1354 = vmatprep.subr.bf16.mxu0 0
  %1355 = vmatpush1.bf16.msra.mxu0 0
  %1356 = vmatprep.subr.bf16.mxu0 0
  %1357 = vmatpush1.bf16.msra.mxu0 0
  %1358 = vmatprep.subr.bf16.mxu0 0
  %1359 = vmatpush1.bf16.msra.mxu0 0
  %1360 = vmatprep.subr.bf16.mxu0 0
  %1361 = vmatpush1.bf16.msra.mxu0 0
  %1362 = vmatprep.subr.bf16.mxu0 0
  %1363 = vmatpush1.bf16.msra.mxu0 0
  %1364 = vmatprep.subr.bf16.mxu0 0
  %1365 = vmatpush1.bf16.msra.mxu0 0
  %1366 = vmatprep.subr.bf16.mxu0 0
  %1367 = vmatpush1.bf16.msra.mxu0 0
  %1368 = vmatprep.mubr.bf16.mxu0 0
  %1369 = vmatmul.mubr.bf16.gmra.mrb[0].mxu0 %v1334
  %v1370 = vpop.f32.mrb[0].mxu0
  %v1371 = vadd.f32 0.0, %v1370
  %v1372 = vpop.f32.mrb[0].mxu0
  %v1373 = vpop.f32.mrb[0].mxu0
  %v1374 = vpop.f32.mrb[0].mxu0
  %1375 = vdwg.mxu0
  %v1376 = vadd.f32 %v1328, %v1371
  %v1377 = vxor.u32 %v1376, 2147483648
  %v1378 = vmul.f32 %v1377, 1.442695
  %v1379 = vpow.pop %v1378
  %v1380 = vadd.f32 %v1379, 1.0
  %v1381 = vrcp.pop %v1380
  %v1382 = vmul.f32 1.0, %v1381
  %v1383 = vtanh.pop %v1376
  %v1384 = vmul.f32 %v1382, %v1234
  %1386 = vrot.lane.b32.xlu0 %v1383, 64
  %v1387 = vpop.permute.xlu0 %1386
  %v1389 = vmul.f32 %v1382, %v1387
  %1391 = vrot.lane.b32.xlu0 %v1389, 32
  %v1392 = vpop.permute.xlu0 %1391
  %v1394 = vadd.f32 %v1384, %v1392
  %v1395 = vtanh.pop %v1394
  %1397 = vrot.lane.b32.xlu0 %v1395, 64
  %v1398 = vpop.permute.xlu0 %1397
  %v1400 = vmul.f32 %v1382, %v1398
  %1402 = vrot.lane.b32.xlu0 %v1400, 32
  %v1403 = vpop.permute.xlu0 %1402
  %s1405 = scalar_lea.vmem [#allocation5], 8
  %1406 = vst.msk [vmem:[%s1405] sm:$0xff] %vm86, %v1403
  %s1407 = scalar_lea.vmem [#allocation2], 56
  %v1408 = vld [vmem:[%s1407] sm:$0xff]
  %v1409 = vpack.c.bf16 %v1320, %v1320
  %1411 = vrot.lane.b32.xlu0 %v1409, 32
  %v1412 = vpop.permute.xlu0 %1411
  %v1414 = vsel %vm86, %v1412, 0
  %1416 = vmatprep.subr.bf16.mxu0 0
  %1417 = vmatpush1.bf16.msra.mxu0 %v285
  %1418 = vmatprep.subr.bf16.mxu0 0
  %1419 = vmatpush1.bf16.msra.mxu0 %v286
  %1420 = vmatprep.subr.bf16.mxu0 0
  %1421 = vmatpush1.bf16.msra.mxu0 0
  %1422 = vmatprep.subr.bf16.mxu0 0
  %1423 = vmatpush1.bf16.msra.mxu0 0
  %1424 = vmatprep.subr.bf16.mxu0 0
  %1425 = vmatpush1.bf16.msra.mxu0 0
  %1426 = vmatprep.subr.bf16.mxu0 0
  %1427 = vmatpush1.bf16.msra.mxu0 0
  %1428 = vmatprep.subr.bf16.mxu0 0
  %1429 = vmatpush1.bf16.msra.mxu0 0
  %1430 = vmatprep.subr.bf16.mxu0 0
  %1431 = vmatpush1.bf16.msra.mxu0 0
  %1432 = vmatprep.subr.bf16.mxu0 0
  %1433 = vmatpush1.bf16.msra.mxu0 0
  %1434 = vmatprep.subr.bf16.mxu0 0
  %1435 = vmatpush1.bf16.msra.mxu0 0
  %1436 = vmatprep.subr.bf16.mxu0 0
  %1437 = vmatpush1.bf16.msra.mxu0 0
  %1438 = vmatprep.subr.bf16.mxu0 0
  %1439 = vmatpush1.bf16.msra.mxu0 0
  %1440 = vmatprep.subr.bf16.mxu0 0
  %1441 = vmatpush1.bf16.msra.mxu0 0
  %1442 = vmatprep.subr.bf16.mxu0 0
  %1443 = vmatpush1.bf16.msra.mxu0 0
  %1444 = vmatprep.subr.bf16.mxu0 0
  %1445 = vmatpush1.bf16.msra.mxu0 0
  %1446 = vmatprep.subr.bf16.mxu0 0
  %1447 = vmatpush1.bf16.msra.mxu0 0
  %1448 = vmatprep.mubr.bf16.mxu0 0
  %1449 = vmatmul.mubr.bf16.gmra.mrb[0].mxu0 %v1414
  %v1450 = vpop.f32.mrb[0].mxu0
  %v1451 = vadd.f32 0.0, %v1450
  %v1452 = vpop.f32.mrb[0].mxu0
  %v1453 = vpop.f32.mrb[0].mxu0
  %v1454 = vpop.f32.mrb[0].mxu0
  %1455 = vdwg.mxu0
  %v1456 = vadd.f32 %v1408, %v1451
  %v1457 = vxor.u32 %v1456, 2147483648
  %v1458 = vmul.f32 %v1457, 1.442695
  %v1459 = vpow.pop %v1458
  %v1460 = vadd.f32 %v1459, 1.0
  %v1461 = vrcp.pop %v1460
  %v1462 = vmul.f32 1.0, %v1461
  %v1463 = vtanh.pop %v1456
  %v1464 = vmul.f32 %v1462, %v1314
  %1466 = vrot.lane.b32.xlu0 %v1463, 64
  %v1467 = vpop.permute.xlu0 %1466
  %v1469 = vmul.f32 %v1462, %v1467
  %1471 = vrot.lane.b32.xlu0 %v1469, 32
  %v1472 = vpop.permute.xlu0 %1471
  %v1474 = vadd.f32 %v1464, %v1472
  %v1475 = vtanh.pop %v1474
  %1477 = vrot.lane.b32.xlu0 %v1475, 64
  %v1478 = vpop.permute.xlu0 %1477
  %v1480 = vmul.f32 %v1462, %v1478
  %1482 = vrot.lane.b32.xlu0 %v1480, 32
  %v1483 = vpop.permute.xlu0 %1482
  %s1485 = scalar_lea.vmem [#allocation4], 56
  %1486 = vst.msk [vmem:[%s1485] sm:$0xff] %vm86, %v1483
  %v1487 = vld [vmem:[#allocation3] sm:$0xff]
  %v1488 = vpack.c.bf16 %v1400, %v1400
  %1490 = vrot.lane.b32.xlu0 %v1488, 32
  %v1491 = vpop.permute.xlu0 %1490
  %v1493 = vsel %vm86, %v1491, 0
  %1495 = vmatprep.subr.bf16.mxu0 0
  %1496 = vmatpush1.bf16.msra.mxu0 %v372
  %1497 = vmatprep.subr.bf16.mxu0 0
  %1498 = vmatpush1.bf16.msra.mxu0 %v373
  %1499 = vmatprep.subr.bf16.mxu0 0
  %1500 = vmatpush1.bf16.msra.mxu0 0
  %1501 = vmatprep.subr.bf16.mxu0 0
  %1502 = vmatpush1.bf16.msra.mxu0 0
  %1503 = vmatprep.subr.bf16.mxu0 0
  %1504 = vmatpush1.bf16.msra.mxu0 0
  %1505 = vmatprep.subr.bf16.mxu0 0
  %1506 = vmatpush1.bf16.msra.mxu0 0
  %1507 = vmatprep.subr.bf16.mxu0 0
  %1508 = vmatpush1.bf16.msra.mxu0 0
  %1509 = vmatprep.subr.bf16.mxu0 0
  %1510 = vmatpush1.bf16.msra.mxu0 0
  %1511 = vmatprep.subr.bf16.mxu0 0
  %1512 = vmatpush1.bf16.msra.mxu0 0
  %1513 = vmatprep.subr.bf16.mxu0 0
  %1514 = vmatpush1.bf16.msra.mxu0 0
  %1515 = vmatprep.subr.bf16.mxu0 0
  %1516 = vmatpush1.bf16.msra.mxu0 0
  %1517 = vmatprep.subr.bf16.mxu0 0
  %1518 = vmatpush1.bf16.msra.mxu0 0
  %1519 = vmatprep.subr.bf16.mxu0 0
  %1520 = vmatpush1.bf16.msra.mxu0 0
  %1521 = vmatprep.subr.bf16.mxu0 0
  %1522 = vmatpush1.bf16.msra.mxu0 0
  %1523 = vmatprep.subr.bf16.mxu0 0
  %1524 = vmatpush1.bf16.msra.mxu0 0
  %1525 = vmatprep.subr.bf16.mxu0 0
  %1526 = vmatpush1.bf16.msra.mxu0 0
  %1527 = vmatprep.mubr.bf16.mxu0 0
  %1528 = vmatmul.mubr.bf16.gmra.mrb[0].mxu0 %v1493
  %v1529 = vpop.f32.mrb[0].mxu0
  %v1530 = vadd.f32 0.0, %v1529
  %v1531 = vpop.f32.mrb[0].mxu0
  %v1532 = vpop.f32.mrb[0].mxu0
  %v1533 = vpop.f32.mrb[0].mxu0
  %1534 = vdwg.mxu0
  %v1535 = vadd.f32 %v1487, %v1530
  %v1536 = vxor.u32 %v1535, 2147483648
  %v1537 = vmul.f32 %v1536, 1.442695
  %v1538 = vpow.pop %v1537
  %v1539 = vadd.f32 %v1538, 1.0
  %v1540 = vrcp.pop %v1539
  %v1541 = vmul.f32 1.0, %v1540
  %v1542 = vtanh.pop %v1535
  %v1543 = vmul.f32 %v1541, %v1394
  %1545 = vrot.lane.b32.xlu0 %v1542, 64
  %v1546 = vpop.permute.xlu0 %1545
  %v1548 = vmul.f32 %v1541, %v1546
  %1550 = vrot.lane.b32.xlu0 %v1548, 32
  %v1551 = vpop.permute.xlu0 %1550
  %v1553 = vadd.f32 %v1543, %v1551
  %v1554 = vtanh.pop %v1553
  %1556 = vrot.lane.b32.xlu0 %v1554, 64
  %v1557 = vpop.permute.xlu0 %1556
  %v1559 = vmul.f32 %v1541, %v1557
  %1561 = vrot.lane.b32.xlu0 %v1559, 32
  %v1562 = vpop.permute.xlu0 %1561
  %1564 = vst.msk [vmem:[#allocation5] sm:$0xff] %vm86, %v1562
  %v1565 = vld [vmem:[#allocation4] sm:$0xff]
  %v1566 = vld [vmem:[#allocation4 + $0x8] sm:$0xff]
  %v1567 = vld [vmem:[#allocation4 + $0x10] sm:$0xff]
  %v1568 = vld [vmem:[#allocation4 + $0x18] sm:$0xff]
  %v1569 = vld [vmem:[#allocation4 + $0x20] sm:$0xff]
  %v1570 = vld [vmem:[#allocation4 + $0x28] sm:$0xff]
  %v1571 = vld [vmem:[#allocation4 + $0x30] sm:$0xff]
  %v1572 = vld [vmem:[#allocation4 + $0x38] sm:$0xff]
  %v1573 = vld [vmem:[#allocation5] sm:$0xff]
  %v1574 = vld [vmem:[#allocation5 + $0x8] sm:$0xff]
  %v1575 = vld [vmem:[#allocation5 + $0x10] sm:$0xff]
  %v1576 = vld [vmem:[#allocation5 + $0x18] sm:$0xff]
  %v1577 = vld [vmem:[#allocation5 + $0x20] sm:$0xff]
  %v1578 = vld [vmem:[#allocation5 + $0x28] sm:$0xff]
  %v1579 = vld [vmem:[#allocation5 + $0x30] sm:$0xff]
  %v1580 = vld [vmem:[#allocation5 + $0x38] sm:$0xff]
  %1589 = vrot.lane.b32.xlu0 %v1573, 32
  %v1590 = vpop.permute.xlu0 %1589
  %1591 = vrot.lane.b32.xlu0 %v1574, 32
  %v1592 = vpop.permute.xlu0 %1591
  %1593 = vrot.lane.b32.xlu0 %v1575, 32
  %v1594 = vpop.permute.xlu0 %1593
  %1595 = vrot.lane.b32.xlu0 %v1576, 32
  %v1596 = vpop.permute.xlu0 %1595
  %1597 = vrot.lane.b32.xlu0 %v1577, 32
  %v1598 = vpop.permute.xlu0 %1597
  %1599 = vrot.lane.b32.xlu0 %v1578, 32
  %v1600 = vpop.permute.xlu0 %1599
  %1601 = vrot.lane.b32.xlu0 %v1579, 32
  %v1602 = vpop.permute.xlu0 %1601
  %1603 = vrot.lane.b32.xlu0 %v1580, 32
  %v1604 = vpop.permute.xlu0 %1603
  %v1613 = vsel %vm86, %v1565, %v1590
  %v1614 = vsel %vm86, %v1566, %v1592
  %v1615 = vsel %vm86, %v1567, %v1594
  %v1616 = vsel %vm86, %v1568, %v1596
  %v1617 = vsel %vm86, %v1569, %v1598
  %v1618 = vsel %vm86, %v1570, %v1600
  %v1619 = vsel %vm86, %v1571, %v1602
  %v1620 = vsel %vm86, %v1572, %v1604
  %v1621 = vpack.c.bf16 %v1613, %v1613
  %v1622 = vpack.c.bf16 %v1614, %v1614
  %v1623 = vpack.c.bf16 %v1615, %v1615
  %v1624 = vpack.c.bf16 %v1616, %v1616
  %v1625 = vpack.c.bf16 %v1617, %v1617
  %v1626 = vpack.c.bf16 %v1618, %v1618
  %v1627 = vpack.c.bf16 %v1619, %v1619
  %v1628 = vpack.c.bf16 %v1620, %v1620
  %vm1629 = vcmask 519168
  %1630 = vst.msk [vmem:[%s7] sm:$0xf] %vm1629, %v1621
  %1631 = vst.msk [vmem:[%s7 + $0x4] sm:$0xf] %vm1629, %v1622
  %1632 = vst.msk [vmem:[%s7 + $0x8] sm:$0xf] %vm1629, %v1623
  %1633 = vst.msk [vmem:[%s7 + $0xc] sm:$0xf] %vm1629, %v1624
  %1634 = vst.msk [vmem:[%s7 + $0x10] sm:$0xf] %vm1629, %v1625
  %1635 = vst.msk [vmem:[%s7 + $0x14] sm:$0xf] %vm1629, %v1626
  %1636 = vst.msk [vmem:[%s7 + $0x18] sm:$0xf] %vm1629, %v1627
  %1637 = vst.msk [vmem:[%s7 + $0x1c] sm:$0xf] %vm1629, %v1628
  // Predicated region
  $region30: #{sentence_classifier_forward.2} parent=0 // pred_check
    _
  $region31: #{sentence_classifier_forward.2} parent=0 // pred_check_branch
    %1639 = sbr.rel (0) target = $region33
  $region32: #{sentence_classifier_forward.2} parent=0 // pred_region
    _
  $region33: #{sentence_classifier_forward.2} parent=0 // pred_fallthru
    _
  // Predicated region
  $region34: #{sentence_classifier_forward.2} parent=0 // pred_check
    _
  $region35: #{sentence_classifier_forward.2} parent=0 // pred_check_branch
    %1641 = sbr.rel (0) target = $region37
  $region36: #{sentence_classifier_forward.2} parent=0 // pred_region
    _
  $region37: #{sentence_classifier_forward.2} parent=0 // pred_fallthru
    _

</llo_original>
